<compile_context>
chip_gen: v7x
topology: tpu7x:2x2x1
jax: 0.10.0
libtpu: 0.0.40
codegen_flags: <defaults>
</compile_context>

<pallas_src>
import jax
import jax.numpy as jnp
from jax.experimental import pallas as pl
from jax.experimental.pallas import tpu as pltpu

# ---- scaled-down stand-ins for the real channel sizes (kept small, lane aligned) ----
C_FEAT = 512      # backbone output channels        (real: 2048)
PLANES = 128      # Bottleneck mid channels         (real: 512), out = 4*PLANES = C_FEAT
SE_GLOBAL = 256   # SE branch global_reduction out  (real: 1024)
SE_PART = 256     # SE branch part_reduction out    (real: 1024)
RN_PART = 256     # ResNet branch cfg.MODEL.PART_FEATS stand-in
IBN_GLOBAL = 512  # IBN branch global_reduction out (real: 2048)
IBN_PART = 512    # IBN branch part_reduction out   (real: 2048)
EPS = 1e-5


# ----------------------------- parameter construction -----------------------------
def init_bn(key, n):
    k1, k2, k3, k4 = jax.random.split(key, 4)
    gamma = 1.0 + 0.1 * jax.random.normal(k1, (n,), jnp.float32)
    beta = 0.1 * jax.random.normal(k2, (n,), jnp.float32)
    mean = 0.1 * jax.random.normal(k3, (n,), jnp.float32)
    var = jax.random.uniform(k4, (n,), jnp.float32, minval=0.5, maxval=1.5)
    return gamma, beta, mean, var


def fold_bn(gamma, beta, mean, var):
    scale = gamma / jnp.sqrt(var + EPS)
    shift = beta - mean * scale
    return scale, shift


def init_bottleneck(key, C, P):
    # conv weights stored pre-transposed: 1x1 -> (in, out), 3x3 -> (kh, kw, in, out)
    ks = jax.random.split(key, 6)
    w1 = 0.05 * jax.random.normal(ks[0], (C, P), jnp.float32)
    w2 = 0.05 * jax.random.normal(ks[1], (3, 3, P, P), jnp.float32)
    w3 = 0.05 * jax.random.normal(ks[2], (P, C), jnp.float32)
    s1, b1 = fold_bn(*init_bn(ks[3], P))
    s2, b2 = fold_bn(*init_bn(ks[4], P))
    s3, b3 = fold_bn(*init_bn(ks[5], C))
    return dict(w1=w1, w2=w2, w3=w3,
                s1=s1.reshape(1, P), b1=b1.reshape(1, P),
                s2=s2.reshape(1, P), b2=b2.reshape(1, P),
                s3=s3.reshape(1, C), b3=b3.reshape(1, C))


def init_head(key, C, Dg, Dp):
    # global_reduction: Conv2d(C,Dg,1,bias=True)+BN2d+ReLU ; part_reduction: Linear+BN1d+ReLU
    out = {}
    kg, kp = jax.random.split(key)
    if Dg is not None:
        k1, k2, k3 = jax.random.split(kg, 3)
        w = 0.05 * jax.random.normal(k1, (C, Dg), jnp.float32)
        b = 0.05 * jax.random.normal(k2, (Dg,), jnp.float32)
        scale, shift = fold_bn(*init_bn(k3, Dg))
        out["wg"] = w * scale[None, :]
        out["bg"] = (b * scale + shift).reshape(1, Dg)
    k1, k2, k3 = jax.random.split(kp, 3)
    w = 0.05 * jax.random.normal(k1, (C, Dp), jnp.float32)
    b = 0.05 * jax.random.normal(k2, (Dp,), jnp.float32)
    scale, shift = fold_bn(*init_bn(k3, Dp))
    out["wp"] = w * scale[None, :]
    out["bp"] = (b * scale + shift).reshape(1, Dp)
    return out


def init_branch(key, Dg, Dp, has_gred):
    ks = jax.random.split(key, 3)
    stem = 0.2 * jax.random.normal(ks[0], (3, C_FEAT), jnp.float32)
    return dict(stem=stem,
                bottleneck=init_bottleneck(ks[1], C_FEAT, PLANES),
                head=init_head(ks[2], C_FEAT, Dg if has_gred else None, Dp),
                has_gred=has_gred)


# --------------------------------- Pallas kernel -----------------------------------
def fused_branch_kernel(x_ref, w1_ref, s1_ref, b1_ref, w2_ref, s2_ref, b2_ref,
                        w3_ref, s3_ref, b3_ref, glob_ref, pmax_ref):
    """Per grid step (one branch x one batch element): Bottleneck(2048,512) eval-mode
    fused with the head pooling.  Emits global-avg(feat) and global-max(bottleneck(feat)).

    x_ref:  (1, 1, H, W, C) bf16 backbone feature (bf16 halves the activation DMA).
    w*_ref: bf16 conv weights (w2 pre-reshaped to (9*P, P) in (dy, dx, cin) row order).
    s*/b*:  folded BN scale/bias, f32.
    glob_ref/pmax_ref: (1, 1, 1, C) f32 pooled outputs.
    """
    _, _, H, W, C = x_ref.shape
    P = w1_ref.shape[2]
    M = H * W

    x_bf = x_ref[0, 0]                                  # (H, W, C) bf16
    x2_bf = x_bf.reshape(M, C)
    x2_f32 = x2_bf.astype(jnp.float32)                  # f32 only for pool + residual

    # ---- fused head: global average pool of the backbone feature (f32 accumulation) --
    glob_ref[0, 0] = jnp.mean(x2_f32, axis=0, keepdims=True)

    # ---- 1x1 conv + BN + ReLU (bf16 MXU inputs, f32 accumulation) --------------------
    y1 = jnp.dot(x2_bf, w1_ref[0], preferred_element_type=jnp.float32)     # (M, P)
    y1 = jnp.maximum(y1 * s1_ref[0] + b1_ref[0], 0.0)
    # cast ONCE to bf16: all nine shifted taps are built/moved in bf16 (half the vregs)
    y1b = y1.astype(jnp.bfloat16).reshape(H, W, P)

    # ---- 3x3 conv: nine shifted bf16 taps, nine accumulated (M,P)x(P,P) MXU GEMMs -----
    # hoisted zero boundary planes (JAX does not CSE broadcast_in_dim)
    zero_w = jnp.zeros((H, 1, P), jnp.bfloat16)         # W-axis (sublane) boundary
    zero_h = jnp.zeros((1, W, P), jnp.bfloat16)         # H-axis (major)   boundary

    def shift_w(v, o):                      # shift along W (sublane axis), zero border
        if o == 0:
            return v
        return (jnp.concatenate([v[:, 1:, :], zero_w], axis=1) if o > 0
                else jnp.concatenate([zero_w, v[:, :-1, :]], axis=1))

    def shift_h(v, o):                      # shift along H (major axis), zero border
        if o == 0:
            return v
        return (jnp.concatenate([v[1:, :, :], zero_h], axis=0) if o > 0
                else jnp.concatenate([zero_h, v[:-1, :, :]], axis=0))

    acc = None
    for dx in range(3):                     # only 2 sublane shifts total
        vw = shift_w(y1b, dx - 1)
        for dy in range(3):
            tap = shift_h(vw, dy - 1).reshape(M, P)
            k = dy * 3 + dx                 # matches w2.reshape(9*P, P) row order
            contrib = jnp.dot(tap, w2_ref[0, k * P:(k + 1) * P, :],
                              preferred_element_type=jnp.float32)          # (M, P)
            acc = contrib if acc is None else acc + contrib
    y2 = jnp.maximum(acc * s2_ref[0] + b2_ref[0], 0.0)

    # ---- 1x1 conv + BN, residual add in f32, ReLU -------------------------------------
    y3 = jnp.dot(y2.astype(jnp.bfloat16), w3_ref[0],
                 preferred_element_type=jnp.float32)                       # (M, C)
    y3 = y3 * s3_ref[0] + b3_ref[0]
    part = jnp.maximum(y3 + x2_f32, 0.0)

    # ---- fused head: global max pool of part (BatchDrop is identity in eval) ----------
    pmax_ref[0, 0] = jnp.max(part, axis=0, keepdims=True)


def fused_bottleneck_pool(feat_all, kp):
    """feat_all: (NB, B, H, W, C) bf16 stacked branch features.  kp: stacked params.
    Returns (glob, pmax), each (NB, B, C) f32."""
    NB, B, H, W, C = feat_all.shape
    P = kp["w1"].shape[2]
    glob4, pmax4 = pl.pallas_call(
        fused_branch_kernel,
        out_shape=(jax.ShapeDtypeStruct((NB, B, 1, C), jnp.float32),
                   jax.ShapeDtypeStruct((NB, B, 1, C), jnp.float32)),
        grid=(NB, B),                                   # 3*B steps -> balances v7x's 2 TCs
        in_specs=[
            pl.BlockSpec((1, 1, H, W, C), lambda nb, b: (nb, b, 0, 0, 0)),
            pl.BlockSpec((1, C, P), lambda nb, b: (nb, 0, 0)),
            pl.BlockSpec((1, 1, P), lambda nb, b: (nb, 0, 0)),
            pl.BlockSpec((1, 1, P), lambda nb, b: (nb, 0, 0)),
            pl.BlockSpec((1, 9 * P, P), lambda nb, b: (nb, 0, 0)),
            pl.BlockSpec((1, 1, P), lambda nb, b: (nb, 0, 0)),
            pl.BlockSpec((1, 1, P), lambda nb, b: (nb, 0, 0)),
            pl.BlockSpec((1, P, C), lambda nb, b: (nb, 0, 0)),
            pl.BlockSpec((1, 1, C), lambda nb, b: (nb, 0, 0)),
            pl.BlockSpec((1, 1, C), lambda nb, b: (nb, 0, 0)),
        ],
        out_specs=(pl.BlockSpec((1, 1, 1, C), lambda nb, b: (nb, b, 0, 0)),
                   pl.BlockSpec((1, 1, 1, C), lambda nb, b: (nb, b, 0, 0))),
        compiler_params=pltpu.CompilerParams(
            dimension_semantics=("parallel", "parallel")),
    )(feat_all, kp["w1"], kp["s1"], kp["b1"], kp["w2"], kp["s2"], kp["b2"],
      kp["w3"], kp["s3"], kp["b3"])
    return glob4[:, :, 0, :], pmax4[:, :, 0, :]


def prep_kernel_params(branch_params):
    """Stack the three branches' bottleneck params on a leading axis; conv weights in
    bf16, w2 pre-reshaped to (9*P, P); BN scale/bias stay f32."""
    bn = [p["bottleneck"] for p in branch_params]
    P = bn[0]["w1"].shape[1]
    return dict(
        w1=jnp.stack([q["w1"] for q in bn]).astype(jnp.bfloat16),               # (3, C, P)
        w2=jnp.stack([q["w2"].reshape(9 * P, P) for q in bn]).astype(jnp.bfloat16),
        w3=jnp.stack([q["w3"] for q in bn]).astype(jnp.bfloat16),               # (3, P, C)
        s1=jnp.stack([q["s1"] for q in bn]), b1=jnp.stack([q["b1"] for q in bn]),
        s2=jnp.stack([q["s2"] for q in bn]), b2=jnp.stack([q["b2"] for q in bn]),
        s3=jnp.stack([q["s3"] for q in bn]), b3=jnp.stack([q["b3"] for q in bn]),
    )


# ----------------------------------- glue (JAX) ------------------------------------
def standin_backbone(x_nchw, stem_w):
    # TODO(synk): real backbone definitions not provided; pointwise conv + ReLU + 2x2 avg pool.
    x = jnp.transpose(x_nchw, (0, 2, 3, 1))                              # NHWC
    y = jnp.maximum(jnp.einsum('bhwc,cd->bhwd', x, stem_w,
                               precision='highest'), 0.0)
    B, H, W, C = y.shape
    return y.reshape(B, H // 2, 2, W // 2, 2, C).mean(axis=(2, 4))       # (B,H/2,W/2,C)


def head_apply(glob, pmax, hp, has_gred):
    # Tiny GEMMs on pooled (B, C) features (full part tensor never leaves VMEM).
    if has_gred:
        g = jnp.maximum(jnp.dot(glob, hp["wg"], precision='highest') + hp["bg"][0], 0.0)
    else:
        g = glob
    p = jnp.maximum(jnp.dot(pmax, hp["wp"], precision='highest') + hp["bp"][0], 0.0)
    return jnp.concatenate([g, p], axis=1)


def bagreid_forward(x_img, all_params):
    names = ("part1", "part2", "part3")
    feat_all = jnp.stack([standin_backbone(x_img, all_params[n]["stem"]) for n in names])
    feat_all = feat_all.astype(jnp.bfloat16)   # halve activation HBM traffic / DMA VMEM
    kp = prep_kernel_params([all_params[n] for n in names])
    glob_all, pmax_all = fused_bottleneck_pool(feat_all, kp)   # single Pallas call
    outs = [head_apply(glob_all[i], pmax_all[i],
                       all_params[n]["head"], all_params[n]["has_gred"])
            for i, n in enumerate(names)]
    return jnp.concatenate(outs, axis=1)


# ------------------------------ pure-JAX reference ---------------------------------
def ref_bottleneck(x, p):
    B, H, W, C = x.shape
    P = p["w1"].shape[1]
    y = jnp.einsum('bhwc,cp->bhwp', x, p["w1"], precision='highest')
    y = jnp.maximum(y * p["s1"][0] + p["b1"][0], 0.0)
    yp = jnp.pad(y, ((0, 0), (1, 1), (1, 1), (0, 0)))
    acc = jnp.zeros((B, H, W, P), jnp.float32)
    for dy in range(3):
        for dx in range(3):
            acc = acc + jnp.einsum('bhwp,pq->bhwq',
                                   yp[:, dy:dy + H, dx:dx + W, :], p["w2"][dy, dx],
                                   precision='highest')
    y2 = jnp.maximum(acc * p["s2"][0] + p["b2"][0], 0.0)
    y3 = jnp.einsum('bhwp,pc->bhwc', y2, p["w3"], precision='highest')
    y3 = y3 * p["s3"][0] + p["b3"][0]
    return jnp.maximum(y3 + x, 0.0)


def ref_branch(x_img, params):
    feat = standin_backbone(x_img, params["stem"])
    part = ref_bottleneck(feat, params["bottleneck"])
    glob = feat.mean(axis=(1, 2))
    pmax = part.max(axis=(1, 2))
    hp = params["head"]
    if params["has_gred"]:
        g = jnp.maximum(jnp.dot(glob, hp["wg"], precision='highest') + hp["bg"][0], 0.0)
    else:
        g = glob
    pr = jnp.maximum(jnp.dot(pmax, hp["wp"], precision='highest') + hp["bp"][0], 0.0)
    return jnp.concatenate([g, pr], axis=1)


def ref_bagreid(x_img, all_params):
    return jnp.concatenate(
        [ref_branch(x_img, all_params[k]) for k in ("part1", "part2", "part3")], axis=1)


# --------------------------------------- main ---------------------------------------
if __name__ == "__main__":
    key = jax.random.PRNGKey(0)
    kimg, kp1, kp2, kp3 = jax.random.split(key, 4)
    x = jax.random.normal(kimg, (2, 3, 16, 16), jnp.float32)   # NCHW, like PyTorch

    params = {
        "part1": init_branch(kp1, Dg=SE_GLOBAL, Dp=SE_PART, has_gred=True),    # SE-ResNeXt
        "part2": init_branch(kp2, Dg=None, Dp=RN_PART, has_gred=False),        # ResNet50
        "part3": init_branch(kp3, Dg=IBN_GLOBAL, Dp=IBN_PART, has_gred=True),  # ResNet50-IBN
    }

    out = bagreid_forward(x, params)
    out = jax.block_until_ready(out)

    expected_dim = (SE_GLOBAL + SE_PART) + (C_FEAT + RN_PART) + (IBN_GLOBAL + IBN_PART)
    assert out.shape == (2, expected_dim), out.shape

    ref = ref_bagreid(x, params)
    assert bool(jnp.allclose(out, ref, rtol=2e-2, atol=2e-2)), \
        float(jnp.max(jnp.abs(out - ref)))

    print("KERNEL_OK")
</pallas_src>

<mosaic_0001>
module attributes {stable_mosaic.version = 11 : i64} {
  func.func @fused_branch_kernel(%arg0: i32, %arg1: i32, %arg2: memref<1x1x8x8x512xbf16, #tpu.memory_space<vmem>>, %arg3: memref<1x512x128xbf16, #tpu.memory_space<vmem>>, %arg4: memref<1x1x128xf32, #tpu.memory_space<vmem>>, %arg5: memref<1x1x128xf32, #tpu.memory_space<vmem>>, %arg6: memref<1x1152x128xbf16, #tpu.memory_space<vmem>>, %arg7: memref<1x1x128xf32, #tpu.memory_space<vmem>>, %arg8: memref<1x1x128xf32, #tpu.memory_space<vmem>>, %arg9: memref<1x128x512xbf16, #tpu.memory_space<vmem>>, %arg10: memref<1x1x512xf32, #tpu.memory_space<vmem>>, %arg11: memref<1x1x512xf32, #tpu.memory_space<vmem>>, %arg12: memref<1x1x1x512xf32, #tpu.memory_space<vmem>>, %arg13: memref<1x1x1x512xf32, #tpu.memory_space<vmem>>) attributes {dimension_semantics = [#tpu.dimension_semantics<parallel>, #tpu.dimension_semantics<parallel>], iteration_bounds = array<i64: 3, 2>, scalar_prefetch = 0 : i64, scratch_operands = 0 : i64, tpu.core_type = #tpu.core_type<tc>, window_params = [{transform_indices = @transform_0, window_bounds = array<i64: 1, 1, 8, 8, 512>}, {transform_indices = @transform_1, window_bounds = array<i64: 1, 512, 128>}, {transform_indices = @transform_2, window_bounds = array<i64: 1, 1, 128>}, {transform_indices = @transform_3, window_bounds = array<i64: 1, 1, 128>}, {transform_indices = @transform_4, window_bounds = array<i64: 1, 1152, 128>}, {transform_indices = @transform_5, window_bounds = array<i64: 1, 1, 128>}, {transform_indices = @transform_6, window_bounds = array<i64: 1, 1, 128>}, {transform_indices = @transform_7, window_bounds = array<i64: 1, 128, 512>}, {transform_indices = @transform_8, window_bounds = array<i64: 1, 1, 512>}, {transform_indices = @transform_9, window_bounds = array<i64: 1, 1, 512>}, {transform_indices = @transform_10, window_bounds = array<i64: 1, 1, 1, 512>}, {transform_indices = @transform_11, window_bounds = array<i64: 1, 1, 1, 512>}]} {
    %c0 = arith.constant 0 : index
    %c0_0 = arith.constant 0 : index
    %c0_1 = arith.constant 0 : index
    %c0_2 = arith.constant 0 : index
    %c0_3 = arith.constant 0 : index
    %0 = vector.load %arg2[%c0, %c0_0, %c0_1, %c0_2, %c0_3] : memref<1x1x8x8x512xbf16, #tpu.memory_space<vmem>>, vector<1x1x8x8x512xbf16>
    %1 = vector.shape_cast %0 : vector<1x1x8x8x512xbf16> to vector<8x8x512xbf16>
    %2 = vector.shape_cast %1 : vector<8x8x512xbf16> to vector<64x512xbf16>
    %3 = arith.extf %2 : vector<64x512xbf16> to vector<64x512xf32>
    %cst = arith.constant dense<0.000000e+00> : vector<512xf32>
    %4 = vector.multi_reduction <add>, %3, %cst [0] : vector<64x512xf32> to vector<512xf32>
    %5 = vector.shape_cast %4 : vector<512xf32> to vector<1x512xf32>
    %cst_4 = arith.constant 6.400000e+01 : f32
    %6 = vector.broadcast %cst_4 : f32 to vector<1x512xf32>
    %7 = arith.divf %5, %6 : vector<1x512xf32>
    %c0_5 = arith.constant 0 : index
    %c0_6 = arith.constant 0 : index
    %c0_7 = arith.constant 0 : index
    %c0_8 = arith.constant 0 : index
    %8 = vector.load %arg12[%c0_5, %c0_6, %c0_7, %c0_8] : memref<1x1x1x512xf32, #tpu.memory_space<vmem>>, vector<1x1x1x512xf32>
    %9 = vector.shape_cast %8 : vector<1x1x1x512xf32> to vector<1x512xf32>
    %10 = vector.shape_cast %7 : vector<1x512xf32> to vector<1x1x1x512xf32>
    tpu.vector_store %arg12[%c0_5, %c0_6, %c0_7, %c0_8], %10 {strides = array<i32>} : memref<1x1x1x512xf32, #tpu.memory_space<vmem>>, vector<1x1x1x512xf32>,
    %c0_9 = arith.constant 0 : index
    %c0_10 = arith.constant 0 : index
    %c0_11 = arith.constant 0 : index
    %11 = vector.load %arg3[%c0_9, %c0_10, %c0_11] : memref<1x512x128xbf16, #tpu.memory_space<vmem>>, vector<1x512x128xbf16>
    %12 = vector.shape_cast %11 : vector<1x512x128xbf16> to vector<512x128xbf16>
    %cst_12 = arith.constant dense<0.000000e+00> : vector<64x128xf32>
    %13 = tpu.matmul %2, %12, %cst_12 {dimension_numbers = #tpu.dot_dimension_numbers<[1], [0], [0], [1], [0, 0, 1, 1], [], []>} : vector<64x512xbf16>, vector<512x128xbf16>, vector<64x128xf32> -> vector<64x128xf32>
    %c0_13 = arith.constant 0 : index
    %c0_14 = arith.constant 0 : index
    %c0_15 = arith.constant 0 : index
    %14 = vector.load %arg4[%c0_13, %c0_14, %c0_15] : memref<1x1x128xf32, #tpu.memory_space<vmem>>, vector<1x1x128xf32>
    %15 = vector.shape_cast %14 : vector<1x1x128xf32> to vector<1x128xf32>
    %16 = vector.broadcast %15 : vector<1x128xf32> to vector<64x128xf32>
    %17 = arith.mulf %13, %16 : vector<64x128xf32>
    %c0_16 = arith.constant 0 : index
    %c0_17 = arith.constant 0 : index
    %c0_18 = arith.constant 0 : index
    %18 = vector.load %arg5[%c0_16, %c0_17, %c0_18] : memref<1x1x128xf32, #tpu.memory_space<vmem>>, vector<1x1x128xf32>
    %19 = vector.shape_cast %18 : vector<1x1x128xf32> to vector<1x128xf32>
    %20 = vector.broadcast %19 : vector<1x128xf32> to vector<64x128xf32>
    %21 = arith.addf %17, %20 : vector<64x128xf32>
    %cst_19 = arith.constant 0.000000e+00 : f32
    %22 = vector.broadcast %cst_19 : f32 to vector<64x128xf32>
    %23 = arith.maximumf %21, %22 : vector<64x128xf32>
    %24 = arith.truncf %23 : vector<64x128xf32> to vector<64x128xbf16>
    %25 = vector.shape_cast %24 : vector<64x128xbf16> to vector<8x8x128xbf16>
    %cst_20 = arith.constant 0.000000e+00 : bf16
    %26 = vector.broadcast %cst_20 : bf16 to vector<8x1x128xbf16>
    %cst_21 = arith.constant 0.000000e+00 : bf16
    %27 = vector.broadcast %cst_21 : bf16 to vector<1x8x128xbf16>
    %28 = vector.extract_strided_slice %25 {offsets = [0, 0, 0], sizes = [8, 7, 128], strides = [1, 1, 1]} : vector<8x8x128xbf16> to vector<8x7x128xbf16>
    %29 = tpu.concatenate %26, %28 in 1 : vector<8x1x128xbf16>, vector<8x7x128xbf16> -> vector<8x8x128xbf16>
    %30 = vector.extract_strided_slice %29 {offsets = [0, 0, 0], sizes = [7, 8, 128], strides = [1, 1, 1]} : vector<8x8x128xbf16> to vector<7x8x128xbf16>
    %31 = tpu.concatenate %27, %30 in 0 : vector<1x8x128xbf16>, vector<7x8x128xbf16> -> vector<8x8x128xbf16>
    %32 = vector.shape_cast %31 : vector<8x8x128xbf16> to vector<64x128xbf16>
    %c0_22 = arith.constant 0 : index
    %c0_23 = arith.constant 0 : index
    %c0_24 = arith.constant 0 : index
    %33 = vector.load %arg6[%c0_22, %c0_23, %c0_24] : memref<1x1152x128xbf16, #tpu.memory_space<vmem>>, vector<1x128x128xbf16>
    %34 = vector.shape_cast %33 : vector<1x128x128xbf16> to vector<128x128xbf16>
    %cst_25 = arith.constant dense<0.000000e+00> : vector<64x128xf32>
    %35 = tpu.matmul %32, %34, %cst_25 {dimension_numbers = #tpu.dot_dimension_numbers<[1], [0], [0], [1], [0, 0, 1, 1], [], []>} : vector<64x128xbf16>, vector<128x128xbf16>, vector<64x128xf32> -> vector<64x128xf32>
    %36 = vector.shape_cast %29 : vector<8x8x128xbf16> to vector<64x128xbf16>
    %c0_26 = arith.constant 0 : index
    %c384 = arith.constant 384 : index
    %c0_27 = arith.constant 0 : index
    %37 = vector.load %arg6[%c0_26, %c384, %c0_27] : memref<1x1152x128xbf16, #tpu.memory_space<vmem>>, vector<1x128x128xbf16>
    %38 = vector.shape_cast %37 : vector<1x128x128xbf16> to vector<128x128xbf16>
    %cst_28 = arith.constant dense<0.000000e+00> : vector<64x128xf32>
    %39 = tpu.matmul %36, %38, %cst_28 {dimension_numbers = #tpu.dot_dimension_numbers<[1], [0], [0], [1], [0, 0, 1, 1], [], []>} : vector<64x128xbf16>, vector<128x128xbf16>, vector<64x128xf32> -> vector<64x128xf32>
    %40 = arith.addf %35, %39 : vector<64x128xf32>
    %41 = vector.extract_strided_slice %29 {offsets = [1, 0, 0], sizes = [7, 8, 128], strides = [1, 1, 1]} : vector<8x8x128xbf16> to vector<7x8x128xbf16>
    %42 = tpu.concatenate %41, %27 in 0 : vector<7x8x128xbf16>, vector<1x8x128xbf16> -> vector<8x8x128xbf16>
    %43 = vector.shape_cast %42 : vector<8x8x128xbf16> to vector<64x128xbf16>
    %c0_29 = arith.constant 0 : index
    %c768 = arith.constant 768 : index
    %c0_30 = arith.constant 0 : index
    %44 = vector.load %arg6[%c0_29, %c768, %c0_30] : memref<1x1152x128xbf16, #tpu.memory_space<vmem>>, vector<1x128x128xbf16>
    %45 = vector.shape_cast %44 : vector<1x128x128xbf16> to vector<128x128xbf16>
    %cst_31 = arith.constant dense<0.000000e+00> : vector<64x128xf32>
    %46 = tpu.matmul %43, %45, %cst_31 {dimension_numbers = #tpu.dot_dimension_numbers<[1], [0], [0], [1], [0, 0, 1, 1], [], []>} : vector<64x128xbf16>, vector<128x128xbf16>, vector<64x128xf32> -> vector<64x128xf32>
    %47 = arith.addf %40, %46 : vector<64x128xf32>
    %48 = vector.extract_strided_slice %25 {offsets = [0, 0, 0], sizes = [7, 8, 128], strides = [1, 1, 1]} : vector<8x8x128xbf16> to vector<7x8x128xbf16>
    %49 = tpu.concatenate %27, %48 in 0 : vector<1x8x128xbf16>, vector<7x8x128xbf16> -> vector<8x8x128xbf16>
    %50 = vector.shape_cast %49 : vector<8x8x128xbf16> to vector<64x128xbf16>
    %c0_32 = arith.constant 0 : index
    %c128 = arith.constant 128 : index
    %c0_33 = arith.constant 0 : index
    %51 = vector.load %arg6[%c0_32, %c128, %c0_33] : memref<1x1152x128xbf16, #tpu.memory_space<vmem>>, vector<1x128x128xbf16>
    %52 = vector.shape_cast %51 : vector<1x128x128xbf16> to vector<128x128xbf16>
    %cst_34 = arith.constant dense<0.000000e+00> : vector<64x128xf32>
    %53 = tpu.matmul %50, %52, %cst_34 {dimension_numbers = #tpu.dot_dimension_numbers<[1], [0], [0], [1], [0, 0, 1, 1], [], []>} : vector<64x128xbf16>, vector<128x128xbf16>, vector<64x128xf32> -> vector<64x128xf32>
    %54 = arith.addf %47, %53 : vector<64x128xf32>
    %55 = vector.shape_cast %25 : vector<8x8x128xbf16> to vector<64x128xbf16>
    %c0_35 = arith.constant 0 : index
    %c512 = arith.constant 512 : index
    %c0_36 = arith.constant 0 : index
    %56 = vector.load %arg6[%c0_35, %c512, %c0_36] : memref<1x1152x128xbf16, #tpu.memory_space<vmem>>, vector<1x128x128xbf16>
    %57 = vector.shape_cast %56 : vector<1x128x128xbf16> to vector<128x128xbf16>
    %cst_37 = arith.constant dense<0.000000e+00> : vector<64x128xf32>
    %58 = tpu.matmul %55, %57, %cst_37 {dimension_numbers = #tpu.dot_dimension_numbers<[1], [0], [0], [1], [0, 0, 1, 1], [], []>} : vector<64x128xbf16>, vector<128x128xbf16>, vector<64x128xf32> -> vector<64x128xf32>
    %59 = arith.addf %54, %58 : vector<64x128xf32>
    %60 = vector.extract_strided_slice %25 {offsets = [1, 0, 0], sizes = [7, 8, 128], strides = [1, 1, 1]} : vector<8x8x128xbf16> to vector<7x8x128xbf16>
    %61 = tpu.concatenate %60, %27 in 0 : vector<7x8x128xbf16>, vector<1x8x128xbf16> -> vector<8x8x128xbf16>
    %62 = vector.shape_cast %61 : vector<8x8x128xbf16> to vector<64x128xbf16>
    %c0_38 = arith.constant 0 : index
    %c896 = arith.constant 896 : index
    %c0_39 = arith.constant 0 : index
    %63 = vector.load %arg6[%c0_38, %c896, %c0_39] : memref<1x1152x128xbf16, #tpu.memory_space<vmem>>, vector<1x128x128xbf16>
    %64 = vector.shape_cast %63 : vector<1x128x128xbf16> to vector<128x128xbf16>
    %cst_40 = arith.constant dense<0.000000e+00> : vector<64x128xf32>
    %65 = tpu.matmul %62, %64, %cst_40 {dimension_numbers = #tpu.dot_dimension_numbers<[1], [0], [0], [1], [0, 0, 1, 1], [], []>} : vector<64x128xbf16>, vector<128x128xbf16>, vector<64x128xf32> -> vector<64x128xf32>
    %66 = arith.addf %59, %65 : vector<64x128xf32>
    %67 = vector.extract_strided_slice %25 {offsets = [0, 1, 0], sizes = [8, 7, 128], strides = [1, 1, 1]} : vector<8x8x128xbf16> to vector<8x7x128xbf16>
    %68 = tpu.concatenate %67, %26 in 1 : vector<8x7x128xbf16>, vector<8x1x128xbf16> -> vector<8x8x128xbf16>
    %69 = vector.extract_strided_slice %68 {offsets = [0, 0, 0], sizes = [7, 8, 128], strides = [1, 1, 1]} : vector<8x8x128xbf16> to vector<7x8x128xbf16>
    %70 = tpu.concatenate %27, %69 in 0 : vector<1x8x128xbf16>, vector<7x8x128xbf16> -> vector<8x8x128xbf16>
    %71 = vector.shape_cast %70 : vector<8x8x128xbf16> to vector<64x128xbf16>
    %c0_41 = arith.constant 0 : index
    %c256 = arith.constant 256 : index
    %c0_42 = arith.constant 0 : index
    %72 = vector.load %arg6[%c0_41, %c256, %c0_42] : memref<1x1152x128xbf16, #tpu.memory_space<vmem>>, vector<1x128x128xbf16>
    %73 = vector.shape_cast %72 : vector<1x128x128xbf16> to vector<128x128xbf16>
    %cst_43 = arith.constant dense<0.000000e+00> : vector<64x128xf32>
    %74 = tpu.matmul %71, %73, %cst_43 {dimension_numbers = #tpu.dot_dimension_numbers<[1], [0], [0], [1], [0, 0, 1, 1], [], []>} : vector<64x128xbf16>, vector<128x128xbf16>, vector<64x128xf32> -> vector<64x128xf32>
    %75 = arith.addf %66, %74 : vector<64x128xf32>
    %76 = vector.shape_cast %68 : vector<8x8x128xbf16> to vector<64x128xbf16>
    %c0_44 = arith.constant 0 : index
    %c640 = arith.constant 640 : index
    %c0_45 = arith.constant 0 : index
    %77 = vector.load %arg6[%c0_44, %c640, %c0_45] : memref<1x1152x128xbf16, #tpu.memory_space<vmem>>, vector<1x128x128xbf16>
    %78 = vector.shape_cast %77 : vector<1x128x128xbf16> to vector<128x128xbf16>
    %cst_46 = arith.constant dense<0.000000e+00> : vector<64x128xf32>
    %79 = tpu.matmul %76, %78, %cst_46 {dimension_numbers = #tpu.dot_dimension_numbers<[1], [0], [0], [1], [0, 0, 1, 1], [], []>} : vector<64x128xbf16>, vector<128x128xbf16>, vector<64x128xf32> -> vector<64x128xf32>
    %80 = arith.addf %75, %79 : vector<64x128xf32>
    %81 = vector.extract_strided_slice %68 {offsets = [1, 0, 0], sizes = [7, 8, 128], strides = [1, 1, 1]} : vector<8x8x128xbf16> to vector<7x8x128xbf16>
    %82 = tpu.concatenate %81, %27 in 0 : vector<7x8x128xbf16>, vector<1x8x128xbf16> -> vector<8x8x128xbf16>
    %83 = vector.shape_cast %82 : vector<8x8x128xbf16> to vector<64x128xbf16>
    %c0_47 = arith.constant 0 : index
    %c1024 = arith.constant 1024 : index
    %c0_48 = arith.constant 0 : index
    %84 = vector.load %arg6[%c0_47, %c1024, %c0_48] : memref<1x1152x128xbf16, #tpu.memory_space<vmem>>, vector<1x128x128xbf16>
    %85 = vector.shape_cast %84 : vector<1x128x128xbf16> to vector<128x128xbf16>
    %cst_49 = arith.constant dense<0.000000e+00> : vector<64x128xf32>
    %86 = tpu.matmul %83, %85, %cst_49 {dimension_numbers = #tpu.dot_dimension_numbers<[1], [0], [0], [1], [0, 0, 1, 1], [], []>} : vector<64x128xbf16>, vector<128x128xbf16>, vector<64x128xf32> -> vector<64x128xf32>
    %87 = arith.addf %80, %86 : vector<64x128xf32>
    %c0_50 = arith.constant 0 : index
    %c0_51 = arith.constant 0 : index
    %c0_52 = arith.constant 0 : index
    %88 = vector.load %arg7[%c0_50, %c0_51, %c0_52] : memref<1x1x128xf32, #tpu.memory_space<vmem>>, vector<1x1x128xf32>
    %89 = vector.shape_cast %88 : vector<1x1x128xf32> to vector<1x128xf32>
    %90 = vector.broadcast %89 : vector<1x128xf32> to vector<64x128xf32>
    %91 = arith.mulf %87, %90 : vector<64x128xf32>
    %c0_53 = arith.constant 0 : index
    %c0_54 = arith.constant 0 : index
    %c0_55 = arith.constant 0 : index
    %92 = vector.load %arg8[%c0_53, %c0_54, %c0_55] : memref<1x1x128xf32, #tpu.memory_space<vmem>>, vector<1x1x128xf32>
    %93 = vector.shape_cast %92 : vector<1x1x128xf32> to vector<1x128xf32>
    %94 = vector.broadcast %93 : vector<1x128xf32> to vector<64x128xf32>
    %95 = arith.addf %91, %94 : vector<64x128xf32>
    %cst_56 = arith.constant 0.000000e+00 : f32
    %96 = vector.broadcast %cst_56 : f32 to vector<64x128xf32>
    %97 = arith.maximumf %95, %96 : vector<64x128xf32>
    %98 = arith.truncf %97 : vector<64x128xf32> to vector<64x128xbf16>
    %c0_57 = arith.constant 0 : index
    %c0_58 = arith.constant 0 : index
    %c0_59 = arith.constant 0 : index
    %99 = vector.load %arg9[%c0_57, %c0_58, %c0_59] : memref<1x128x512xbf16, #tpu.memory_space<vmem>>, vector<1x128x512xbf16>
    %100 = vector.shape_cast %99 : vector<1x128x512xbf16> to vector<128x512xbf16>
    %cst_60 = arith.constant dense<0.000000e+00> : vector<64x512xf32>
    %101 = tpu.matmul %98, %100, %cst_60 {dimension_numbers = #tpu.dot_dimension_numbers<[1], [0], [0], [1], [0, 0, 1, 1], [], []>} : vector<64x128xbf16>, vector<128x512xbf16>, vector<64x512xf32> -> vector<64x512xf32>
    %c0_61 = arith.constant 0 : index
    %c0_62 = arith.constant 0 : index
    %c0_63 = arith.constant 0 : index
    %102 = vector.load %arg10[%c0_61, %c0_62, %c0_63] : memref<1x1x512xf32, #tpu.memory_space<vmem>>, vector<1x1x512xf32>
    %103 = vector.shape_cast %102 : vector<1x1x512xf32> to vector<1x512xf32>
    %104 = vector.broadcast %103 : vector<1x512xf32> to vector<64x512xf32>
    %105 = arith.mulf %101, %104 : vector<64x512xf32>
    %c0_64 = arith.constant 0 : index
    %c0_65 = arith.constant 0 : index
    %c0_66 = arith.constant 0 : index
    %106 = vector.load %arg11[%c0_64, %c0_65, %c0_66] : memref<1x1x512xf32, #tpu.memory_space<vmem>>, vector<1x1x512xf32>
    %107 = vector.shape_cast %106 : vector<1x1x512xf32> to vector<1x512xf32>
    %108 = vector.broadcast %107 : vector<1x512xf32> to vector<64x512xf32>
    %109 = arith.addf %105, %108 : vector<64x512xf32>
    %110 = arith.addf %109, %3 : vector<64x512xf32>
    %cst_67 = arith.constant 0.000000e+00 : f32
    %111 = vector.broadcast %cst_67 : f32 to vector<64x512xf32>
    %112 = arith.maximumf %110, %111 : vector<64x512xf32>
    %cst_68 = arith.constant dense<0xFF800000> : vector<512xf32>
    %113 = vector.multi_reduction <maximumf>, %112, %cst_68 [0] : vector<64x512xf32> to vector<512xf32>
    %114 = vector.shape_cast %113 : vector<512xf32> to vector<1x512xf32>
    %c0_69 = arith.constant 0 : index
    %c0_70 = arith.constant 0 : index
    %c0_71 = arith.constant 0 : index
    %c0_72 = arith.constant 0 : index
    %115 = vector.load %arg13[%c0_69, %c0_70, %c0_71, %c0_72] : memref<1x1x1x512xf32, #tpu.memory_space<vmem>>, vector<1x1x1x512xf32>
    %116 = vector.shape_cast %115 : vector<1x1x1x512xf32> to vector<1x512xf32>
    %117 = vector.shape_cast %114 : vector<1x512xf32> to vector<1x1x1x512xf32>
    tpu.vector_store %arg13[%c0_69, %c0_70, %c0_71, %c0_72], %117 {strides = array<i32>} : memref<1x1x1x512xf32, #tpu.memory_space<vmem>>, vector<1x1x1x512xf32>,
    return
  }
  func.func @transform_0(%arg0: i32, %arg1: i32) -> (i32, i32, i32, i32, i32) {
    %c0_i32 = arith.constant 0 : i32
    %c0_i32_0 = arith.constant 0 : i32
    %c0_i32_1 = arith.constant 0 : i32
    %c0_i32_2 = arith.constant 0 : i32
    return %arg0, %arg1, %c0_i32, %c0_i32_0, %c0_i32_1 : i32, i32, i32, i32, i32
  }
  func.func @transform_1(%arg0: i32, %arg1: i32) -> (i32, i32, i32) {
    %c0_i32 = arith.constant 0 : i32
    %c0_i32_0 = arith.constant 0 : i32
    %c0_i32_1 = arith.constant 0 : i32
    return %arg0, %c0_i32, %c0_i32_0 : i32, i32, i32
  }
  func.func @transform_2(%arg0: i32, %arg1: i32) -> (i32, i32, i32) {
    %c0_i32 = arith.constant 0 : i32
    %c0_i32_0 = arith.constant 0 : i32
    %c0_i32_1 = arith.constant 0 : i32
    return %arg0, %c0_i32, %c0_i32_0 : i32, i32, i32
  }
  func.func @transform_3(%arg0: i32, %arg1: i32) -> (i32, i32, i32) {
    %c0_i32 = arith.constant 0 : i32
    %c0_i32_0 = arith.constant 0 : i32
    %c0_i32_1 = arith.constant 0 : i32
    return %arg0, %c0_i32, %c0_i32_0 : i32, i32, i32
  }
  func.func @transform_4(%arg0: i32, %arg1: i32) -> (i32, i32, i32) {
    %c0_i32 = arith.constant 0 : i32
    %c0_i32_0 = arith.constant 0 : i32
    %c0_i32_1 = arith.constant 0 : i32
    return %arg0, %c0_i32, %c0_i32_0 : i32, i32, i32
  }
  func.func @transform_5(%arg0: i32, %arg1: i32) -> (i32, i32, i32) {
    %c0_i32 = arith.constant 0 : i32
    %c0_i32_0 = arith.constant 0 : i32
    %c0_i32_1 = arith.constant 0 : i32
    return %arg0, %c0_i32, %c0_i32_0 : i32, i32, i32
  }
  func.func @transform_6(%arg0: i32, %arg1: i32) -> (i32, i32, i32) {
    %c0_i32 = arith.constant 0 : i32
    %c0_i32_0 = arith.constant 0 : i32
    %c0_i32_1 = arith.constant 0 : i32
    return %arg0, %c0_i32, %c0_i32_0 : i32, i32, i32
  }
  func.func @transform_7(%arg0: i32, %arg1: i32) -> (i32, i32, i32) {
    %c0_i32 = arith.constant 0 : i32
    %c0_i32_0 = arith.constant 0 : i32
    %c0_i32_1 = arith.constant 0 : i32
    return %arg0, %c0_i32, %c0_i32_0 : i32, i32, i32
  }
  func.func @transform_8(%arg0: i32, %arg1: i32) -> (i32, i32, i32) {
    %c0_i32 = arith.constant 0 : i32
    %c0_i32_0 = arith.constant 0 : i32
    %c0_i32_1 = arith.constant 0 : i32
    return %arg0, %c0_i32, %c0_i32_0 : i32, i32, i32
  }
  func.func @transform_9(%arg0: i32, %arg1: i32) -> (i32, i32, i32) {
    %c0_i32 = arith.constant 0 : i32
    %c0_i32_0 = arith.constant 0 : i32
    %c0_i32_1 = arith.constant 0 : i32
    return %arg0, %c0_i32, %c0_i32_0 : i32, i32, i32
  }
  func.func @transform_10(%arg0: i32, %arg1: i32) -> (i32, i32, i32, i32) {
    %c0_i32 = arith.constant 0 : i32
    %c0_i32_0 = arith.constant 0 : i32
    %c0_i32_1 = arith.constant 0 : i32
    return %arg0, %arg1, %c0_i32, %c0_i32_0 : i32, i32, i32, i32
  }
  func.func @transform_11(%arg0: i32, %arg1: i32) -> (i32, i32, i32, i32) {
    %c0_i32 = arith.constant 0 : i32
    %c0_i32_0 = arith.constant 0 : i32
    %c0_i32_1 = arith.constant 0 : i32
    return %arg0, %arg1, %c0_i32, %c0_i32_0 : i32, i32, i32, i32
  }
}

</mosaic_0001>

<llo_original>
// kernel: tpu_custom_call.1
$region0: #{tpu_custom_call.1}
  #allocation0 [shape = 'u32[]', space=smem, size = 0x4, offset = 0x4, fixed_abs, tag = 'smem constant byte address 0x4 - core index']
  #allocation1 [shape = 'u32[144,128]{1,0:T(1,128)}', space=vmem, size = 0x12000, scoped, tag = 'internal scratch']
  %s0 = inlined_call_operand.hbm [shape: bf16[3,2,8,8,512], index: 0, kind: input, shape index: {}]
  %s1 = inlined_call_operand.hbm [shape: bf16[3,512,128], index: 1, kind: input, shape index: {}]
  %s2 = inlined_call_operand.hbm [shape: f32[3,1,128], index: 2, kind: input, shape index: {}]
  %s3 = inlined_call_operand.hbm [shape: f32[3,1,128], index: 3, kind: input, shape index: {}]
  %s4 = inlined_call_operand.hbm [shape: bf16[3,1152,128], index: 4, kind: input, shape index: {}]
  %s5 = inlined_call_operand.hbm [shape: f32[3,1,128], index: 5, kind: input, shape index: {}]
  %s6 = inlined_call_operand.hbm [shape: f32[3,1,128], index: 6, kind: input, shape index: {}]
  %s7 = inlined_call_operand.hbm [shape: bf16[3,128,512], index: 7, kind: input, shape index: {}]
  %s8 = inlined_call_operand.vmem [shape: f32[3,1,512], index: 8, kind: input, shape index: {}]
  %s9 = inlined_call_operand.vmem [shape: f32[3,1,512], index: 9, kind: input, shape index: {}]
  %s10 = inlined_call_operand.hbm [shape: f32[3,2,1,512], index: 10, kind: output, shape index: {0}]
  %s11 = inlined_call_operand.hbm [shape: f32[3,2,1,512], index: 11, kind: output, shape index: {1}]
  %12 = xla_tuple %s10, %s11
  %s13 = sld [smem:[#allocation0]]
  $region113: #{tpu_custom_call.1} parent=0
    _
  %s15 = ssub.s32 1, %s13
  %s16 = scalar_select 0, %s15, %s13
  $region1: #{tpu_custom_call.1} parent=0
    #allocation2 [shape = 'u8[131072]{0}', space=vmem, size = 0x20000, scoped, tag = 'input window, operand 0']
    #allocation3 [shape = 's32[2]{0}', space=sflag, size = 0x8, scoped, tag = 'scoped memory for tpu_custom_call.1']
    #allocation4 [shape = 's32[2]{0}', space=sflag, size = 0x8, scoped, tag = 'scoped memory for tpu_custom_call.1']
    #allocation5 [shape = 'u8[262144]{0}', space=vmem, size = 0x40000, scoped, tag = 'input window, operand 1']
    #allocation6 [shape = 's32[2]{0}', space=sflag, size = 0x8, scoped, tag = 'scoped memory for tpu_custom_call.1']
    #allocation7 [shape = 'u8[1024]{0}', space=vmem, size = 0x400, scoped, tag = 'input window, operand 2']
    #allocation8 [shape = 'u8[1024]{0}', space=vmem, size = 0x400, scoped, tag = 'input window, operand 3']
    #allocation9 [shape = 's32[2]{0}', space=sflag, size = 0x8, scoped, tag = 'scoped memory for tpu_custom_call.1']
    #allocation10 [shape = 'u8[589824]{0}', space=vmem, size = 0x90000, scoped, tag = 'input window, operand 4']
    #allocation11 [shape = 'u8[1024]{0}', space=vmem, size = 0x400, scoped, tag = 'input window, operand 5']
    #allocation12 [shape = 's32[2]{0}', space=sflag, size = 0x8, scoped, tag = 'scoped memory for tpu_custom_call.1']
    #allocation13 [shape = 'u8[1024]{0}', space=vmem, size = 0x400, scoped, tag = 'input window, operand 6']
    #allocation14 [shape = 'u8[262144]{0}', space=vmem, size = 0x40000, scoped, tag = 'input window, operand 7']
    #allocation15 [shape = 's32[2]{0}', space=sflag, size = 0x8, scoped, tag = 'scoped memory for tpu_custom_call.1']
    #allocation16 [shape = 'u8[4096]{0}', space=vmem, size = 0x1000, scoped, tag = 'output window, operand 0']
    #allocation17 [shape = 'u8[4096]{0}', space=vmem, size = 0x1000, scoped, tag = 'output window, operand 1']
    #allocation18 [shape = 's32[2]{0}', space=sflag, size = 0x8, scoped, tag = 'scoped memory for tpu_custom_call.1']
    %17 = vsyncpa [#allocation3], 0
    %s18 = scalar_lea.sflag [#allocation3], 1
    %19 = vsyncpa %s18, 0
    %20 = vsyncpa [#allocation6], 0
    %s21 = scalar_lea.sflag [#allocation6], 1
    %22 = vsyncpa %s21, 0
    %23 = vsyncpa [#allocation9], 0
    %s24 = scalar_lea.sflag [#allocation9], 1
    %25 = vsyncpa %s24, 0
    %26 = vsyncpa [#allocation12], 0
    %s27 = scalar_lea.sflag [#allocation12], 1
    %28 = vsyncpa %s27, 0
    %29 = vsyncpa [#allocation15], 0
    %s30 = scalar_lea.sflag [#allocation15], 1
    %31 = vsyncpa %s30, 0
    %32 = vsyncpa [#allocation4], 0
    %s33 = scalar_lea.sflag [#allocation4], 1
    %34 = vsyncpa %s33, 0
    %35 = vsyncpa [#allocation18], 0
    %s36 = scalar_lea.sflag [#allocation18], 1
    %37 = vsyncpa %s36, 0
    loop: start=0, step=1, limit=8
    $region2: #{tpu_custom_call.1} parent=1 // loop_pre_header
      _
    $region3: #{tpu_custom_call.1} parent=1 // loop_header
      %s39 = sphi 0, %s43
      %p40 = scmp.ge.s32.totalorder %s39, 8
      %s46 = sphi 0, %s58
      %s47 = sphi 0, %s54
      %s48 = sphi 0, %s46
      %s49 = sphi 0, %s47
      %s50 = sphi 0, %s48
      %s51 = sphi 0, %s49
      %s63 = sphi 0, %s65
      %s66 = sphi 0, %s63
      %s67 = sphi 0, %s66
      %s83 = sphi 0, %s67
      %s89 = sphi 0, %s91
      %s92 = sphi 0, %s89
      %s93 = sphi 0, %s92
      %s109 = sphi 0, %s93
      %s115 = sphi 0, %s117
      %s118 = sphi 0, %s115
      %s119 = sphi 0, %s118
      %s135 = sphi 0, %s119
      %s141 = sphi 0, %s143
      %s144 = sphi 0, %s141
      %s145 = sphi 0, %s144
      %s161 = sphi 0, %s145
      %s167 = sphi 0, %s169
      %s170 = sphi 0, %s167
      %s171 = sphi 0, %s170
      %s187 = sphi 0, %s171
      %s193 = sphi 0, %s195
      %s196 = sphi 0, %s193
      %s197 = sphi 0, %s196
      %s213 = sphi 0, %s197
      %s219 = sphi 0, %s221
      %s222 = sphi 0, %s219
      %s223 = sphi 0, %s222
      %s239 = sphi 0, %s223
      %s245 = sphi 0, %s247
      %s248 = sphi 0, %s245
      %s249 = sphi 0, %s248
      %s265 = sphi 0, %s249
      %s271 = sphi 0, %s273
      %s274 = sphi 0, %s271
      %s275 = sphi 0, %s274
      %s291 = sphi 0, %s275
      %s297 = sphi 0, %s299
      %s300 = sphi 0, %s297
      %s301 = sphi 0, %s300
      %s317 = sphi 0, %s301
      %s325 = sphi 0, %s327
      %s328 = sphi 0, %s325
      %s329 = sphi 0, %s328
      %s345 = sphi 0, %s329
      %s353 = sphi 0, %s355
      %s356 = sphi 0, %s353
      %s357 = sphi 0, %s356
      %s373 = sphi 0, %s357
    $region4: #{tpu_custom_call.1} parent=1 // loop_header_branch
      %42 = sbr.rel (%p40) target = $region8
    $region5: #{tpu_custom_call.1} parent=1 // loop_body
      %s44 = ssub.s32 %s39, 1
      %s45 = ssub.s32 %s39, 2
      %s52 = sadd.s32 1, %s47
      %p53 = scmp.ge.s32.totalorder %s52, 2
      %s54 = scalar_select %p53, 0, %s52
      %s55 = sadd.s32 1, %s46
      %s56 = scalar_select %p53, %s55, %s46
      %p57 = scmp.ge.s32.totalorder %s56, 3
      %s58 = scalar_select %p57, 0, %s56
      %s59 = ssub.s32 %s46, %s58
      %s60 = ssub.s32 %s47, %s54
      %s61 = sor.u32 %s59, %s60
      %p62 = scmp.eq.s32.totalorder %s61, 0
      %s64 = sadd.s32 %s63, 1
      %s65 = scalar_select %p62, %s63, %s64
      %p68 = pneg %p62
      %p69 = scmp.eq.s32.totalorder %s39, 5
      %p70 = por %p68, %p69
      %p71 = scmp.ne.s32.totalorder %s63, %s66
      %p72 = scmp.eq.s32.totalorder %s39, 0
      %p73 = por %p71, %p72
      %p74 = scmp.ne.s32.totalorder %s63, %s66
      %p75 = scmp.eq.s32.totalorder %s44, 5
      %p76 = por %p74, %p75
      %p77 = scmp.ne.s32.totalorder %s66, %s67
      %p78 = scmp.eq.s32.totalorder %s44, 0
      %p79 = por %p77, %p78
      %p80 = scmp.ne.s32.totalorder %s66, %s67
      %p81 = scmp.eq.s32.totalorder %s45, 5
      %p82 = por %p80, %p81
      %p84 = scmp.ne.s32.totalorder %s67, %s83
      %p85 = scmp.eq.s32.totalorder %s45, 0
      %p86 = por %p84, %p85
      %s87 = ssub.s32 %s46, %s58
      %p88 = scmp.eq.s32.totalorder %s87, 0
      %s90 = sadd.s32 %s89, 1
      %s91 = scalar_select %p88, %s89, %s90
      %p94 = pneg %p88
      %p95 = scmp.eq.s32.totalorder %s39, 5
      %p96 = por %p94, %p95
      %p97 = scmp.ne.s32.totalorder %s89, %s92
      %p98 = scmp.eq.s32.totalorder %s39, 0
      %p99 = por %p97, %p98
      %p100 = scmp.ne.s32.totalorder %s89, %s92
      %p101 = scmp.eq.s32.totalorder %s44, 5
      %p102 = por %p100, %p101
      %p103 = scmp.ne.s32.totalorder %s92, %s93
      %p104 = scmp.eq.s32.totalorder %s44, 0
      %p105 = por %p103, %p104
      %p106 = scmp.ne.s32.totalorder %s92, %s93
      %p107 = scmp.eq.s32.totalorder %s45, 5
      %p108 = por %p106, %p107
      %p110 = scmp.ne.s32.totalorder %s93, %s109
      %p111 = scmp.eq.s32.totalorder %s45, 0
      %p112 = por %p110, %p111
      %s113 = ssub.s32 %s46, %s58
      %p114 = scmp.eq.s32.totalorder %s113, 0
      %s116 = sadd.s32 %s115, 1
      %s117 = scalar_select %p114, %s115, %s116
      %p120 = pneg %p114
      %p121 = scmp.eq.s32.totalorder %s39, 5
      %p122 = por %p120, %p121
      %p123 = scmp.ne.s32.totalorder %s115, %s118
      %p124 = scmp.eq.s32.totalorder %s39, 0
      %p125 = por %p123, %p124
      %p126 = scmp.ne.s32.totalorder %s115, %s118
      %p127 = scmp.eq.s32.totalorder %s44, 5
      %p128 = por %p126, %p127
      %p129 = scmp.ne.s32.totalorder %s118, %s119
      %p130 = scmp.eq.s32.totalorder %s44, 0
      %p131 = por %p129, %p130
      %p132 = scmp.ne.s32.totalorder %s118, %s119
      %p133 = scmp.eq.s32.totalorder %s45, 5
      %p134 = por %p132, %p133
      %p136 = scmp.ne.s32.totalorder %s119, %s135
      %p137 = scmp.eq.s32.totalorder %s45, 0
      %p138 = por %p136, %p137
      %s139 = ssub.s32 %s46, %s58
      %p140 = scmp.eq.s32.totalorder %s139, 0
      %s142 = sadd.s32 %s141, 1
      %s143 = scalar_select %p140, %s141, %s142
      %p146 = pneg %p140
      %p147 = scmp.eq.s32.totalorder %s39, 5
      %p148 = por %p146, %p147
      %p149 = scmp.ne.s32.totalorder %s141, %s144
      %p150 = scmp.eq.s32.totalorder %s39, 0
      %p151 = por %p149, %p150
      %p152 = scmp.ne.s32.totalorder %s141, %s144
      %p153 = scmp.eq.s32.totalorder %s44, 5
      %p154 = por %p152, %p153
      %p155 = scmp.ne.s32.totalorder %s144, %s145
      %p156 = scmp.eq.s32.totalorder %s44, 0
      %p157 = por %p155, %p156
      %p158 = scmp.ne.s32.totalorder %s144, %s145
      %p159 = scmp.eq.s32.totalorder %s45, 5
      %p160 = por %p158, %p159
      %p162 = scmp.ne.s32.totalorder %s145, %s161
      %p163 = scmp.eq.s32.totalorder %s45, 0
      %p164 = por %p162, %p163
      %s165 = ssub.s32 %s46, %s58
      %p166 = scmp.eq.s32.totalorder %s165, 0
      %s168 = sadd.s32 %s167, 1
      %s169 = scalar_select %p166, %s167, %s168
      %p172 = pneg %p166
      %p173 = scmp.eq.s32.totalorder %s39, 5
      %p174 = por %p172, %p173
      %p175 = scmp.ne.s32.totalorder %s167, %s170
      %p176 = scmp.eq.s32.totalorder %s39, 0
      %p177 = por %p175, %p176
      %p178 = scmp.ne.s32.totalorder %s167, %s170
      %p179 = scmp.eq.s32.totalorder %s44, 5
      %p180 = por %p178, %p179
      %p181 = scmp.ne.s32.totalorder %s170, %s171
      %p182 = scmp.eq.s32.totalorder %s44, 0
      %p183 = por %p181, %p182
      %p184 = scmp.ne.s32.totalorder %s170, %s171
      %p185 = scmp.eq.s32.totalorder %s45, 5
      %p186 = por %p184, %p185
      %p188 = scmp.ne.s32.totalorder %s171, %s187
      %p189 = scmp.eq.s32.totalorder %s45, 0
      %p190 = por %p188, %p189
      %s191 = ssub.s32 %s46, %s58
      %p192 = scmp.eq.s32.totalorder %s191, 0
      %s194 = sadd.s32 %s193, 1
      %s195 = scalar_select %p192, %s193, %s194
      %p198 = pneg %p192
      %p199 = scmp.eq.s32.totalorder %s39, 5
      %p200 = por %p198, %p199
      %p201 = scmp.ne.s32.totalorder %s193, %s196
      %p202 = scmp.eq.s32.totalorder %s39, 0
      %p203 = por %p201, %p202
      %p204 = scmp.ne.s32.totalorder %s193, %s196
      %p205 = scmp.eq.s32.totalorder %s44, 5
      %p206 = por %p204, %p205
      %p207 = scmp.ne.s32.totalorder %s196, %s197
      %p208 = scmp.eq.s32.totalorder %s44, 0
      %p209 = por %p207, %p208
      %p210 = scmp.ne.s32.totalorder %s196, %s197
      %p211 = scmp.eq.s32.totalorder %s45, 5
      %p212 = por %p210, %p211
      %p214 = scmp.ne.s32.totalorder %s197, %s213
      %p215 = scmp.eq.s32.totalorder %s45, 0
      %p216 = por %p214, %p215
      %s217 = ssub.s32 %s46, %s58
      %p218 = scmp.eq.s32.totalorder %s217, 0
      %s220 = sadd.s32 %s219, 1
      %s221 = scalar_select %p218, %s219, %s220
      %p224 = pneg %p218
      %p225 = scmp.eq.s32.totalorder %s39, 5
      %p226 = por %p224, %p225
      %p227 = scmp.ne.s32.totalorder %s219, %s222
      %p228 = scmp.eq.s32.totalorder %s39, 0
      %p229 = por %p227, %p228
      %p230 = scmp.ne.s32.totalorder %s219, %s222
      %p231 = scmp.eq.s32.totalorder %s44, 5
      %p232 = por %p230, %p231
      %p233 = scmp.ne.s32.totalorder %s222, %s223
      %p234 = scmp.eq.s32.totalorder %s44, 0
      %p235 = por %p233, %p234
      %p236 = scmp.ne.s32.totalorder %s222, %s223
      %p237 = scmp.eq.s32.totalorder %s45, 5
      %p238 = por %p236, %p237
      %p240 = scmp.ne.s32.totalorder %s223, %s239
      %p241 = scmp.eq.s32.totalorder %s45, 0
      %p242 = por %p240, %p241
      %s243 = ssub.s32 %s46, %s58
      %p244 = scmp.eq.s32.totalorder %s243, 0
      %s246 = sadd.s32 %s245, 1
      %s247 = scalar_select %p244, %s245, %s246
      %p250 = pneg %p244
      %p251 = scmp.eq.s32.totalorder %s39, 5
      %p252 = por %p250, %p251
      %p253 = scmp.ne.s32.totalorder %s245, %s248
      %p254 = scmp.eq.s32.totalorder %s39, 0
      %p255 = por %p253, %p254
      %p256 = scmp.ne.s32.totalorder %s245, %s248
      %p257 = scmp.eq.s32.totalorder %s44, 5
      %p258 = por %p256, %p257
      %p259 = scmp.ne.s32.totalorder %s248, %s249
      %p260 = scmp.eq.s32.totalorder %s44, 0
      %p261 = por %p259, %p260
      %p262 = scmp.ne.s32.totalorder %s248, %s249
      %p263 = scmp.eq.s32.totalorder %s45, 5
      %p264 = por %p262, %p263
      %p266 = scmp.ne.s32.totalorder %s249, %s265
      %p267 = scmp.eq.s32.totalorder %s45, 0
      %p268 = por %p266, %p267
      %s269 = ssub.s32 %s46, %s58
      %p270 = scmp.eq.s32.totalorder %s269, 0
      %s272 = sadd.s32 %s271, 1
      %s273 = scalar_select %p270, %s271, %s272
      %p276 = pneg %p270
      %p277 = scmp.eq.s32.totalorder %s39, 5
      %p278 = por %p276, %p277
      %p279 = scmp.ne.s32.totalorder %s271, %s274
      %p280 = scmp.eq.s32.totalorder %s39, 0
      %p281 = por %p279, %p280
      %p282 = scmp.ne.s32.totalorder %s271, %s274
      %p283 = scmp.eq.s32.totalorder %s44, 5
      %p284 = por %p282, %p283
      %p285 = scmp.ne.s32.totalorder %s274, %s275
      %p286 = scmp.eq.s32.totalorder %s44, 0
      %p287 = por %p285, %p286
      %p288 = scmp.ne.s32.totalorder %s274, %s275
      %p289 = scmp.eq.s32.totalorder %s45, 5
      %p290 = por %p288, %p289
      %p292 = scmp.ne.s32.totalorder %s275, %s291
      %p293 = scmp.eq.s32.totalorder %s45, 0
      %p294 = por %p292, %p293
      %s295 = ssub.s32 %s46, %s58
      %p296 = scmp.eq.s32.totalorder %s295, 0
      %s298 = sadd.s32 %s297, 1
      %s299 = scalar_select %p296, %s297, %s298
      %p302 = pneg %p296
      %p303 = scmp.eq.s32.totalorder %s39, 5
      %p304 = por %p302, %p303
      %p305 = scmp.ne.s32.totalorder %s297, %s300
      %p306 = scmp.eq.s32.totalorder %s39, 0
      %p307 = por %p305, %p306
      %p308 = scmp.ne.s32.totalorder %s297, %s300
      %p309 = scmp.eq.s32.totalorder %s44, 5
      %p310 = por %p308, %p309
      %p311 = scmp.ne.s32.totalorder %s300, %s301
      %p312 = scmp.eq.s32.totalorder %s44, 0
      %p313 = por %p311, %p312
      %p314 = scmp.ne.s32.totalorder %s300, %s301
      %p315 = scmp.eq.s32.totalorder %s45, 5
      %p316 = por %p314, %p315
      %p318 = scmp.ne.s32.totalorder %s301, %s317
      %p319 = scmp.eq.s32.totalorder %s45, 0
      %p320 = por %p318, %p319
      %s321 = ssub.s32 %s46, %s58
      %s322 = ssub.s32 %s47, %s54
      %s323 = sor.u32 %s321, %s322
      %p324 = scmp.eq.s32.totalorder %s323, 0
      %s326 = sadd.s32 %s325, 1
      %s327 = scalar_select %p324, %s325, %s326
      %p330 = pneg %p324
      %p331 = scmp.eq.s32.totalorder %s39, 5
      %p332 = por %p330, %p331
      %p333 = scmp.ne.s32.totalorder %s325, %s328
      %p334 = scmp.eq.s32.totalorder %s39, 0
      %p335 = por %p333, %p334
      %p336 = scmp.ne.s32.totalorder %s325, %s328
      %p337 = scmp.eq.s32.totalorder %s44, 5
      %p338 = por %p336, %p337
      %p339 = scmp.ne.s32.totalorder %s328, %s329
      %p340 = scmp.eq.s32.totalorder %s44, 0
      %p341 = por %p339, %p340
      %p342 = scmp.ne.s32.totalorder %s328, %s329
      %p343 = scmp.eq.s32.totalorder %s45, 5
      %p344 = por %p342, %p343
      %p346 = scmp.ne.s32.totalorder %s329, %s345
      %p347 = scmp.eq.s32.totalorder %s45, 0
      %p348 = por %p346, %p347
      %s349 = ssub.s32 %s46, %s58
      %s350 = ssub.s32 %s47, %s54
      %s351 = sor.u32 %s349, %s350
      %p352 = scmp.eq.s32.totalorder %s351, 0
      %s354 = sadd.s32 %s353, 1
      %s355 = scalar_select %p352, %s353, %s354
      %p358 = pneg %p352
      %p359 = scmp.eq.s32.totalorder %s39, 5
      %p360 = por %p358, %p359
      %p361 = scmp.ne.s32.totalorder %s353, %s356
      %p362 = scmp.eq.s32.totalorder %s39, 0
      %p363 = por %p361, %p362
      %p364 = scmp.ne.s32.totalorder %s353, %s356
      %p365 = scmp.eq.s32.totalorder %s44, 5
      %p366 = por %p364, %p365
      %p367 = scmp.ne.s32.totalorder %s356, %s357
      %p368 = scmp.eq.s32.totalorder %s44, 0
      %p369 = por %p367, %p368
      %p370 = scmp.ne.s32.totalorder %s356, %s357
      %p371 = scmp.eq.s32.totalorder %s45, 5
      %p372 = por %p370, %p371
      %p374 = scmp.ne.s32.totalorder %s357, %s373
      %p375 = scmp.eq.s32.totalorder %s45, 0
      %p376 = por %p374, %p375
      %p377 = scmp.le.s32.totalorder 1, %s39
      %p378 = scmp.lt.s32.totalorder %s39, 7
      %p379 = pnand %p377, %p378
      %p380 = pneg %p379
      // Predicated region
      $region9: #{tpu_custom_call.1} parent=5 // pred_check
        _
      $region10: #{tpu_custom_call.1} parent=5 // pred_check_branch
        %382 = sbr.rel (%p379) target = $region12
      $region11: #{tpu_custom_call.1} parent=5 // pred_region
        %s383 = ssub.s32 %s39, 1
      $region12: #{tpu_custom_call.1} parent=5 // pred_fallthru
        _
      %p384 = scmp.lt.s32.totalorder %s39, 6
      // Predicated region
      $region13: #{tpu_custom_call.1} parent=5 // pred_check
        %p385 = pneg %p384
      $region14: #{tpu_custom_call.1} parent=5 // pred_check_branch
        %387 = sbr.rel (%p385) target = $region16
      $region15: #{tpu_custom_call.1} parent=5 // pred_region
        // Predicated region
        $region17: #{tpu_custom_call.1} parent=15 // pred_check
          %p388 = pneg %p73
        $region18: #{tpu_custom_call.1} parent=15 // pred_check_branch
          %390 = sbr.rel (%p388) target = $region20
        $region19: #{tpu_custom_call.1} parent=15 // pred_region
          %s391 = sand.u32 %s63, 1
          %s392 = scalar_lea.sflag [#allocation3], %s391
          %s393 = sand.u32 %s63, 1
          %s394 = smul.addr %s393, 128
          %s395 = scalar_lea.vmem [#allocation2], %s394
          %s397 = ssub.s32 2048, 2048
          %398 = vsyncadd %s392, %s397
          %s399 = smul.addr %s47, 32
          %s400 = smul.addr %s46, 64
          %s401 = sadd.s32 %s399, %s400
          %s402 = smul.addr %s401, 64
          %s403 = scalar_lea.hbm %s0, %s402
          %s404 = sshll.u32 %s395, 4
          %s405 = int_to_ptr.vmem [resolvable:$true] %s404
          %410 = dma.hbm_to_vmem [thread:$0]  %s403, 2048, %s405, %s392, 256, 256, 16
        $region20: #{tpu_custom_call.1} parent=15 // pred_fallthru
          _
        // Predicated region
        $region21: #{tpu_custom_call.1} parent=15 // pred_check
          %p411 = pneg %p99
        $region22: #{tpu_custom_call.1} parent=15 // pred_check_branch
          %413 = sbr.rel (%p411) target = $region24
        $region23: #{tpu_custom_call.1} parent=15 // pred_region
          %s414 = sand.u32 %s39, 1
          %s415 = scalar_lea.sflag [#allocation6], %s414
          %s416 = sand.u32 %s89, 1
          %s417 = smul.addr %s416, 256
          %s418 = scalar_lea.vmem [#allocation5], %s417
          %s420 = ssub.s32 4096, 4096
          %421 = vsyncadd %s415, %s420
          %s422 = smul.addr %s46, 64
          %s423 = smul.addr %s422, 64
          %s424 = scalar_lea.hbm %s1, %s423
          %s425 = sshll.u32 %s418, 4
          %s426 = int_to_ptr.vmem [resolvable:$true] %s425
          %431 = dma.hbm_to_vmem [thread:$0]  %s424, 4096, %s426, %s415, 64, 64, 4
        $region24: #{tpu_custom_call.1} parent=15 // pred_fallthru
          _
        // Predicated region
        $region25: #{tpu_custom_call.1} parent=15 // pred_check
          %p432 = pneg %p125
        $region26: #{tpu_custom_call.1} parent=15 // pred_check_branch
          %434 = sbr.rel (%p432) target = $region28
        $region27: #{tpu_custom_call.1} parent=15 // pred_region
          %s435 = sand.u32 %s39, 1
          %s436 = scalar_lea.sflag [#allocation6], %s435
          %s437 = sand.u32 %s115, 1
          %s438 = scalar_lea.vmem [#allocation7], %s437
          %s440 = ssub.s32 16, 16
          %441 = vsyncadd %s436, %s440
          %s442 = smul.addr %s46, 16
          %s443 = scalar_lea.hbm %s2, %s442
          %s445 = sshll.u32 %s438, 4
          %s446 = int_to_ptr.vmem [resolvable:$true] %s445
          %448 = dma.hbm_to_vmem [thread:$0]  %s443, 16, %s446, %s436
        $region28: #{tpu_custom_call.1} parent=15 // pred_fallthru
          _
        // Predicated region
        $region29: #{tpu_custom_call.1} parent=15 // pred_check
          %p449 = pneg %p151
        $region30: #{tpu_custom_call.1} parent=15 // pred_check_branch
          %451 = sbr.rel (%p449) target = $region32
        $region31: #{tpu_custom_call.1} parent=15 // pred_region
          %s452 = sand.u32 %s39, 1
          %s453 = scalar_lea.sflag [#allocation9], %s452
          %s454 = sand.u32 %s141, 1
          %s455 = scalar_lea.vmem [#allocation8], %s454
          %s457 = ssub.s32 16, 16
          %458 = vsyncadd %s453, %s457
          %s459 = smul.addr %s46, 16
          %s460 = scalar_lea.hbm %s3, %s459
          %s462 = sshll.u32 %s455, 4
          %s463 = int_to_ptr.vmem [resolvable:$true] %s462
          %465 = dma.hbm_to_vmem [thread:$0]  %s460, 16, %s463, %s453
        $region32: #{tpu_custom_call.1} parent=15 // pred_fallthru
          _
        // Predicated region
        $region33: #{tpu_custom_call.1} parent=15 // pred_check
          %p466 = pneg %p177
        $region34: #{tpu_custom_call.1} parent=15 // pred_check_branch
          %468 = sbr.rel (%p466) target = $region36
        $region35: #{tpu_custom_call.1} parent=15 // pred_region
          %s469 = sand.u32 %s39, 1
          %s470 = scalar_lea.sflag [#allocation9], %s469
          %s471 = sand.u32 %s167, 1
          %s472 = smul.addr %s471, 576
          %s473 = scalar_lea.vmem [#allocation10], %s472
          %s475 = ssub.s32 9216, 9216
          %476 = vsyncadd %s470, %s475
          %s477 = smul.addr %s46, 144
          %s478 = smul.addr %s477, 64
          %s479 = scalar_lea.hbm %s4, %s478
          %s480 = sshll.u32 %s473, 4
          %s481 = int_to_ptr.vmem [resolvable:$true] %s480
          %486 = dma.hbm_to_vmem [thread:$0]  %s479, 9216, %s481, %s470, 64, 64, 4
        $region36: #{tpu_custom_call.1} parent=15 // pred_fallthru
          _
        // Predicated region
        $region37: #{tpu_custom_call.1} parent=15 // pred_check
          %p487 = pneg %p203
        $region38: #{tpu_custom_call.1} parent=15 // pred_check_branch
          %489 = sbr.rel (%p487) target = $region40
        $region39: #{tpu_custom_call.1} parent=15 // pred_region
          %s490 = sand.u32 %s39, 1
          %s491 = scalar_lea.sflag [#allocation12], %s490
          %s492 = sand.u32 %s193, 1
          %s493 = scalar_lea.vmem [#allocation11], %s492
          %s495 = ssub.s32 16, 16
          %496 = vsyncadd %s491, %s495
          %s497 = smul.addr %s46, 16
          %s498 = scalar_lea.hbm %s5, %s497
          %s500 = sshll.u32 %s493, 4
          %s501 = int_to_ptr.vmem [resolvable:$true] %s500
          %503 = dma.hbm_to_vmem [thread:$0]  %s498, 16, %s501, %s491
        $region40: #{tpu_custom_call.1} parent=15 // pred_fallthru
          _
        // Predicated region
        $region41: #{tpu_custom_call.1} parent=15 // pred_check
          %p504 = pneg %p229
        $region42: #{tpu_custom_call.1} parent=15 // pred_check_branch
          %506 = sbr.rel (%p504) target = $region44
        $region43: #{tpu_custom_call.1} parent=15 // pred_region
          %s507 = sand.u32 %s39, 1
          %s508 = scalar_lea.sflag [#allocation12], %s507
          %s509 = sand.u32 %s219, 1
          %s510 = scalar_lea.vmem [#allocation13], %s509
          %s512 = ssub.s32 16, 16
          %513 = vsyncadd %s508, %s512
          %s514 = smul.addr %s46, 16
          %s515 = scalar_lea.hbm %s6, %s514
          %s517 = sshll.u32 %s510, 4
          %s518 = int_to_ptr.vmem [resolvable:$true] %s517
          %520 = dma.hbm_to_vmem [thread:$0]  %s515, 16, %s518, %s508
        $region44: #{tpu_custom_call.1} parent=15 // pred_fallthru
          _
        // Predicated region
        $region45: #{tpu_custom_call.1} parent=15 // pred_check
          %p521 = pneg %p255
        $region46: #{tpu_custom_call.1} parent=15 // pred_check_branch
          %523 = sbr.rel (%p521) target = $region48
        $region47: #{tpu_custom_call.1} parent=15 // pred_region
          %s524 = sand.u32 %s245, 1
          %s525 = scalar_lea.sflag [#allocation15], %s524
          %s526 = sand.u32 %s245, 1
          %s527 = smul.addr %s526, 256
          %s528 = scalar_lea.vmem [#allocation14], %s527
          %s530 = ssub.s32 4096, 4096
          %531 = vsyncadd %s525, %s530
          %s532 = smul.addr %s46, 64
          %s533 = smul.addr %s532, 64
          %s534 = scalar_lea.hbm %s7, %s533
          %s535 = sshll.u32 %s528, 4
          %s536 = int_to_ptr.vmem [resolvable:$true] %s535
          %541 = dma.hbm_to_vmem [thread:$0]  %s534, 4096, %s536, %s525, 256, 256, 16
        $region48: #{tpu_custom_call.1} parent=15 // pred_fallthru
          _
        // Predicated region
        $region49: #{tpu_custom_call.1} parent=15 // pred_check
          %p542 = pneg %p281
        $region50: #{tpu_custom_call.1} parent=15 // pred_check_branch
          %544 = sbr.rel (%p542) target = $region52
        $region51: #{tpu_custom_call.1} parent=15 // pred_region
          %p545 = scmp.lt.s32.totalorder %s46, 2
          %s546 = scalar_select %p545, %s46, 2
          %s547 = smul.addr %s546, 4
          %s548 = scalar_lea.vmem %s8, %s547
        $region52: #{tpu_custom_call.1} parent=15 // pred_fallthru
          _
        // Predicated region
        $region53: #{tpu_custom_call.1} parent=15 // pred_check
          %p549 = pneg %p307
        $region54: #{tpu_custom_call.1} parent=15 // pred_check_branch
          %551 = sbr.rel (%p549) target = $region56
        $region55: #{tpu_custom_call.1} parent=15 // pred_region
          %p552 = scmp.lt.s32.totalorder %s46, 2
          %s553 = scalar_select %p552, %s46, 2
          %s554 = smul.addr %s553, 4
          %s555 = scalar_lea.vmem %s9, %s554
        $region56: #{tpu_custom_call.1} parent=15 // pred_fallthru
          _
      $region16: #{tpu_custom_call.1} parent=5 // pred_fallthru
        _
      %p556 = scmp.le.s32.totalorder 1, %s39
      %p557 = scmp.lt.s32.totalorder %s39, 7
      %p558 = pnand %p556, %p557
      %p559 = pneg %p558
      // Predicated region
      $region57: #{tpu_custom_call.1} parent=5 // pred_check
        _
      $region58: #{tpu_custom_call.1} parent=5 // pred_check_branch
        %561 = sbr.rel (%p558) target = $region60
      $region59: #{tpu_custom_call.1} parent=5 // pred_region
        %s562 = ssub.s32 %s39, 1
        %s563 = sand.u32 %s66, 1
        %s564 = scalar_lea.sflag [#allocation3], %s563
        %s565 = sand.u32 %s66, 1
        %s566 = smul.addr %s565, 128
        %s567 = scalar_lea.vmem [#allocation2], %s566
        // Predicated region
        $region61: #{tpu_custom_call.1} parent=59 // pred_check
          %p568 = pneg %p79
        $region62: #{tpu_custom_call.1} parent=59 // pred_check_branch
          %570 = sbr.rel (%p568) target = $region64
        $region63: #{tpu_custom_call.1} parent=59 // pred_region
          %571 = dma.done %s564, 2048
        $region64: #{tpu_custom_call.1} parent=59 // pred_fallthru
          _
        %s572 = sand.u32 %s44, 1
        %s573 = scalar_lea.sflag [#allocation6], %s572
        %s574 = sand.u32 %s92, 1
        %s575 = smul.addr %s574, 256
        %s576 = scalar_lea.vmem [#allocation5], %s575
        // Predicated region
        $region65: #{tpu_custom_call.1} parent=59 // pred_check
          %p577 = pneg %p105
        $region66: #{tpu_custom_call.1} parent=59 // pred_check_branch
          %579 = sbr.rel (%p577) target = $region68
        $region67: #{tpu_custom_call.1} parent=59 // pred_region
          %580 = dma.done %s573, 4096
        $region68: #{tpu_custom_call.1} parent=59 // pred_fallthru
          _
        %s581 = sand.u32 %s44, 1
        %s582 = scalar_lea.sflag [#allocation6], %s581
        %s583 = sand.u32 %s118, 1
        %s584 = scalar_lea.vmem [#allocation7], %s583
        // Predicated region
        $region69: #{tpu_custom_call.1} parent=59 // pred_check
          %p585 = pneg %p131
        $region70: #{tpu_custom_call.1} parent=59 // pred_check_branch
          %587 = sbr.rel (%p585) target = $region72
        $region71: #{tpu_custom_call.1} parent=59 // pred_region
          %588 = dma.done %s582, 16
        $region72: #{tpu_custom_call.1} parent=59 // pred_fallthru
          _
        %s589 = sand.u32 %s44, 1
        %s590 = scalar_lea.sflag [#allocation9], %s589
        %s591 = sand.u32 %s144, 1
        %s592 = scalar_lea.vmem [#allocation8], %s591
        // Predicated region
        $region73: #{tpu_custom_call.1} parent=59 // pred_check
          %p593 = pneg %p157
        $region74: #{tpu_custom_call.1} parent=59 // pred_check_branch
          %595 = sbr.rel (%p593) target = $region76
        $region75: #{tpu_custom_call.1} parent=59 // pred_region
          %596 = dma.done %s590, 16
        $region76: #{tpu_custom_call.1} parent=59 // pred_fallthru
          _
        %s597 = sand.u32 %s44, 1
        %s598 = scalar_lea.sflag [#allocation9], %s597
        %s599 = sand.u32 %s170, 1
        %s600 = smul.addr %s599, 576
        %s601 = scalar_lea.vmem [#allocation10], %s600
        // Predicated region
        $region77: #{tpu_custom_call.1} parent=59 // pred_check
          %p602 = pneg %p183
        $region78: #{tpu_custom_call.1} parent=59 // pred_check_branch
          %604 = sbr.rel (%p602) target = $region80
        $region79: #{tpu_custom_call.1} parent=59 // pred_region
          %605 = dma.done %s598, 9216
        $region80: #{tpu_custom_call.1} parent=59 // pred_fallthru
          _
        %s606 = sand.u32 %s44, 1
        %s607 = scalar_lea.sflag [#allocation12], %s606
        %s608 = sand.u32 %s196, 1
        %s609 = scalar_lea.vmem [#allocation11], %s608
        // Predicated region
        $region81: #{tpu_custom_call.1} parent=59 // pred_check
          %p610 = pneg %p209
        $region82: #{tpu_custom_call.1} parent=59 // pred_check_branch
          %612 = sbr.rel (%p610) target = $region84
        $region83: #{tpu_custom_call.1} parent=59 // pred_region
          %613 = dma.done %s607, 16
        $region84: #{tpu_custom_call.1} parent=59 // pred_fallthru
          _
        %s614 = sand.u32 %s44, 1
        %s615 = scalar_lea.sflag [#allocation12], %s614
        %s616 = sand.u32 %s222, 1
        %s617 = scalar_lea.vmem [#allocation13], %s616
        // Predicated region
        $region85: #{tpu_custom_call.1} parent=59 // pred_check
          %p618 = pneg %p235
        $region86: #{tpu_custom_call.1} parent=59 // pred_check_branch
          %620 = sbr.rel (%p618) target = $region88
        $region87: #{tpu_custom_call.1} parent=59 // pred_region
          %621 = dma.done %s615, 16
        $region88: #{tpu_custom_call.1} parent=59 // pred_fallthru
          _
        %s622 = sand.u32 %s248, 1
        %s623 = scalar_lea.sflag [#allocation15], %s622
        %s624 = sand.u32 %s248, 1
        %s625 = smul.addr %s624, 256
        %s626 = scalar_lea.vmem [#allocation14], %s625
        // Predicated region
        $region89: #{tpu_custom_call.1} parent=59 // pred_check
          %p627 = pneg %p261
        $region90: #{tpu_custom_call.1} parent=59 // pred_check_branch
          %629 = sbr.rel (%p627) target = $region92
        $region91: #{tpu_custom_call.1} parent=59 // pred_region
          %630 = dma.done %s623, 4096
        $region92: #{tpu_custom_call.1} parent=59 // pred_fallthru
          _
        %s631 = sand.u32 %s66, 1
        %s632 = scalar_lea.sflag [#allocation3], %s631
        %s633 = sand.u32 %s66, 1
        %s634 = smul.addr %s633, 128
        %s635 = scalar_lea.vmem [#allocation2], %s634
        %p636 = pneg %p79
        %p637 = pneg %p76
        %s638 = sand.u32 %s44, 1
        %s639 = scalar_lea.sflag [#allocation6], %s638
        %s640 = sand.u32 %s92, 1
        %s641 = smul.addr %s640, 256
        %s642 = scalar_lea.vmem [#allocation5], %s641
        %p643 = pneg %p105
        %p644 = pneg %p102
        %s645 = sand.u32 %s44, 1
        %s646 = scalar_lea.sflag [#allocation6], %s645
        %s647 = sand.u32 %s118, 1
        %s648 = scalar_lea.vmem [#allocation7], %s647
        %p649 = pneg %p131
        %p650 = pneg %p128
        %s651 = sand.u32 %s44, 1
        %s652 = scalar_lea.sflag [#allocation9], %s651
        %s653 = sand.u32 %s144, 1
        %s654 = scalar_lea.vmem [#allocation8], %s653
        %p655 = pneg %p157
        %p656 = pneg %p154
        %s657 = sand.u32 %s44, 1
        %s658 = scalar_lea.sflag [#allocation9], %s657
        %s659 = sand.u32 %s170, 1
        %s660 = smul.addr %s659, 576
        %s661 = scalar_lea.vmem [#allocation10], %s660
        %p662 = pneg %p183
        %p663 = pneg %p180
        %s664 = sand.u32 %s44, 1
        %s665 = scalar_lea.sflag [#allocation12], %s664
        %s666 = sand.u32 %s196, 1
        %s667 = scalar_lea.vmem [#allocation11], %s666
        %p668 = pneg %p209
        %p669 = pneg %p206
        %s670 = sand.u32 %s44, 1
        %s671 = scalar_lea.sflag [#allocation12], %s670
        %s672 = sand.u32 %s222, 1
        %s673 = scalar_lea.vmem [#allocation13], %s672
        %p674 = pneg %p235
        %p675 = pneg %p232
        %s676 = sand.u32 %s248, 1
        %s677 = scalar_lea.sflag [#allocation15], %s676
        %s678 = sand.u32 %s248, 1
        %s679 = smul.addr %s678, 256
        %s680 = scalar_lea.vmem [#allocation14], %s679
        %p681 = pneg %p261
        %p682 = pneg %p258
        %p683 = scmp.lt.s32.totalorder %s48, 2
        %s684 = scalar_select %p683, %s48, 2
        %s685 = smul.addr %s684, 4
        %s686 = scalar_lea.vmem %s8, %s685
        %p687 = pneg %p287
        %p688 = pneg %p284
        %p689 = scmp.lt.s32.totalorder %s48, 2
        %s690 = scalar_select %p689, %s48, 2
        %s691 = smul.addr %s690, 4
        %s692 = scalar_lea.vmem %s9, %s691
        %p693 = pneg %p313
        %p694 = pneg %p310
        %p695 = pneg %p341
        %p696 = pneg %p338
        %s697 = sand.u32 %s328, 1
        %s698 = scalar_lea.sflag [#allocation4], %s697
        %s699 = sand.u32 %s328, 1
        %s700 = smul.addr %s699, 4
        %s701 = scalar_lea.vmem [#allocation16], %s700
        %p702 = pneg %p369
        %p703 = pneg %p366
        %s704 = sand.u32 %s356, 1
        %s705 = scalar_lea.sflag [#allocation18], %s704
        %s706 = sand.u32 %s356, 1
        %s707 = smul.addr %s706, 4
        %s708 = scalar_lea.vmem [#allocation17], %s707
        %p709 = scmp.lt.s32.totalorder %s48, 2
        %s710 = scalar_select %p709, %s48, 2
        %s711 = smul.addr %s710, 4
        %s712 = scalar_lea.vmem %s8, %s711
        %p713 = scmp.lt.s32.totalorder %s48, 2
        %s714 = scalar_select %p713, %s48, 2
        %s715 = smul.addr %s714, 4
        %s716 = scalar_lea.vmem %s9, %s715
        %v718 = vld [vmem:[%s567] sm:$0xff]
        %v719 = vld [vmem:[%s567 + $0x8] sm:$0xff]
        %v720 = vld [vmem:[%s567 + $0x10] sm:$0xff]
        %v721 = vld [vmem:[%s567 + $0x18] sm:$0xff]
        %v722 = vld [vmem:[%s567 + $0x20] sm:$0xff]
        %v723 = vld [vmem:[%s567 + $0x28] sm:$0xff]
        %v724 = vld [vmem:[%s567 + $0x30] sm:$0xff]
        %v725 = vld [vmem:[%s567 + $0x38] sm:$0xff]
        %v726 = vld [vmem:[%s567 + $0x40] sm:$0xff]
        %v727 = vld [vmem:[%s567 + $0x48] sm:$0xff]
        %v728 = vld [vmem:[%s567 + $0x50] sm:$0xff]
        %v729 = vld [vmem:[%s567 + $0x58] sm:$0xff]
        %v730 = vld [vmem:[%s567 + $0x60] sm:$0xff]
        %v731 = vld [vmem:[%s567 + $0x68] sm:$0xff]
        %v732 = vld [vmem:[%s567 + $0x70] sm:$0xff]
        %v733 = vld [vmem:[%s567 + $0x78] sm:$0xff]
        %v734 = vunpack.c.l.bf16 %v718
        %v735 = vunpack.c.h.bf16 %v718
        %v736 = vunpack.c.l.bf16 %v719
        %v737 = vunpack.c.h.bf16 %v719
        %v738 = vunpack.c.l.bf16 %v720
        %v739 = vunpack.c.h.bf16 %v720
        %v740 = vunpack.c.l.bf16 %v721
        %v741 = vunpack.c.h.bf16 %v721
        %v742 = vunpack.c.l.bf16 %v722
        %v743 = vunpack.c.h.bf16 %v722
        %v744 = vunpack.c.l.bf16 %v723
        %v745 = vunpack.c.h.bf16 %v723
        %v746 = vunpack.c.l.bf16 %v724
        %v747 = vunpack.c.h.bf16 %v724
        %v748 = vunpack.c.l.bf16 %v725
        %v749 = vunpack.c.h.bf16 %v725
        %v750 = vunpack.c.l.bf16 %v726
        %v751 = vunpack.c.h.bf16 %v726
        %v752 = vunpack.c.l.bf16 %v727
        %v753 = vunpack.c.h.bf16 %v727
        %v754 = vunpack.c.l.bf16 %v728
        %v755 = vunpack.c.h.bf16 %v728
        %v756 = vunpack.c.l.bf16 %v729
        %v757 = vunpack.c.h.bf16 %v729
        %v758 = vunpack.c.l.bf16 %v730
        %v759 = vunpack.c.h.bf16 %v730
        %v760 = vunpack.c.l.bf16 %v731
        %v761 = vunpack.c.h.bf16 %v731
        %v762 = vunpack.c.l.bf16 %v732
        %v763 = vunpack.c.h.bf16 %v732
        %v764 = vunpack.c.l.bf16 %v733
        %v765 = vunpack.c.h.bf16 %v733
        %v766 = vadd.f32 %v734, %v738
        %v767 = vadd.f32 %v766, %v742
        %v768 = vadd.f32 %v767, %v746
        %v769 = vadd.f32 %v768, %v750
        %v770 = vadd.f32 %v769, %v754
        %v771 = vadd.f32 %v770, %v758
        %v772 = vadd.f32 %v771, %v762
        %v773 = vrot.slane %v772, 4
        %v774 = vadd.f32 %v772, %v773
        %v775 = vrot.slane %v774, 2
        %v776 = vadd.f32 %v774, %v775
        %v777 = vrot.slane %v776, 1
        %v778 = vadd.f32 %v776, %v777
        %v779 = vadd.f32 %v735, %v739
        %v780 = vadd.f32 %v779, %v743
        %v781 = vadd.f32 %v780, %v747
        %v782 = vadd.f32 %v781, %v751
        %v783 = vadd.f32 %v782, %v755
        %v784 = vadd.f32 %v783, %v759
        %v785 = vadd.f32 %v784, %v763
        %v786 = vrot.slane %v785, 4
        %v787 = vadd.f32 %v785, %v786
        %v788 = vrot.slane %v787, 2
        %v789 = vadd.f32 %v787, %v788
        %v790 = vrot.slane %v789, 1
        %v791 = vadd.f32 %v789, %v790
        %v792 = vadd.f32 %v736, %v740
        %v793 = vadd.f32 %v792, %v744
        %v794 = vadd.f32 %v793, %v748
        %v795 = vadd.f32 %v794, %v752
        %v796 = vadd.f32 %v795, %v756
        %v797 = vadd.f32 %v796, %v760
        %v798 = vadd.f32 %v797, %v764
        %v799 = vrot.slane %v798, 4
        %v800 = vadd.f32 %v798, %v799
        %v801 = vrot.slane %v800, 2
        %v802 = vadd.f32 %v800, %v801
        %v803 = vrot.slane %v802, 1
        %v804 = vadd.f32 %v802, %v803
        %v805 = vadd.f32 %v737, %v741
        %v806 = vadd.f32 %v805, %v745
        %v807 = vadd.f32 %v806, %v749
        %v808 = vadd.f32 %v807, %v753
        %v809 = vadd.f32 %v808, %v757
        %v810 = vadd.f32 %v809, %v761
        %v811 = vadd.f32 %v810, %v765
        %v812 = vrot.slane %v811, 4
        %v813 = vadd.f32 %v811, %v812
        %v814 = vrot.slane %v813, 2
        %v815 = vadd.f32 %v813, %v814
        %v816 = vrot.slane %v815, 1
        %v817 = vadd.f32 %v815, %v816
        %v818 = vrcp.pop 64.0
        %v819 = vmul.f32 %v778, %v818
        %v820 = vmul.f32 %v791, %v818
        %v821 = vmul.f32 %v804, %v818
        %v822 = vmul.f32 %v817, %v818
        %v827 = vcombine.low %v819, %v820
        %v828 = vcombine.low %v821, %v822
        %v830 = vunpack.c.l.s4 1966171168
        %v831 = vunpack.c.0.s8 %v830
        %v832 = vlaneseq
        %v833 = vshrl.u32 %v832, 7
        %v834 = vsub.s32 %v831, %v833
        %v835 = vrot.slane %v827, %v834
        %v837 = vunpack.c.l.s4 1966171168
        %v838 = vunpack.c.0.s8 %v837
        %v839 = vlaneseq
        %v840 = vshrl.u32 %v839, 7
        %v841 = vsub.s32 %v838, %v840
        %v842 = vrot.slane %v828, %v841
        %v843 = vcombine.low %v835, %v842
        %v845 = vunpack.c.l.s4 1966171168
        %v846 = vunpack.c.0.s8 %v845
        %v847 = vlaneseq
        %v848 = vshrl.u32 %v847, 7
        %v849 = vsub.s32 %v846, %v848
        %v850 = vrot.slane %v843, %v849
        %v852 = vlaneseq
        %vm853 = vcmp.ge.s32.totalorder %v852, 0
        %vm854 = vcmp.lt.s32.totalorder %v852, 512
        %vm855 = vmand %vm853, %vm854
        %856 = vst.msk [vmem:[%s701] sm:$0xf] %vm855, %v850
        %v857 = vld [vmem:[%s576] sm:$0xf]
        %v858 = vld [vmem:[%s576 + $0x4] sm:$0xf]
        %v859 = vld [vmem:[%s576 + $0x8] sm:$0xf]
        %v860 = vld [vmem:[%s576 + $0xc] sm:$0xf]
        %v861 = vld [vmem:[%s576 + $0x10] sm:$0xf]
        %v862 = vld [vmem:[%s576 + $0x14] sm:$0xf]
        %v863 = vld [vmem:[%s576 + $0x18] sm:$0xf]
        %v864 = vld [vmem:[%s576 + $0x1c] sm:$0xf]
        %v865 = vld [vmem:[%s576 + $0x20] sm:$0xf]
        %v866 = vld [vmem:[%s576 + $0x24] sm:$0xf]
        %v867 = vld [vmem:[%s576 + $0x28] sm:$0xf]
        %v868 = vld [vmem:[%s576 + $0x2c] sm:$0xf]
        %v869 = vld [vmem:[%s576 + $0x30] sm:$0xf]
        %v870 = vld [vmem:[%s576 + $0x34] sm:$0xf]
        %v871 = vld [vmem:[%s576 + $0x38] sm:$0xf]
        %v872 = vld [vmem:[%s576 + $0x3c] sm:$0xf]
        %v873 = vld [vmem:[%s576 + $0x40] sm:$0xf]
        %v874 = vld [vmem:[%s576 + $0x44] sm:$0xf]
        %v875 = vld [vmem:[%s576 + $0x48] sm:$0xf]
        %v876 = vld [vmem:[%s576 + $0x4c] sm:$0xf]
        %v877 = vld [vmem:[%s576 + $0x50] sm:$0xf]
        %v878 = vld [vmem:[%s576 + $0x54] sm:$0xf]
        %v879 = vld [vmem:[%s576 + $0x58] sm:$0xf]
        %v880 = vld [vmem:[%s576 + $0x5c] sm:$0xf]
        %v881 = vld [vmem:[%s576 + $0x60] sm:$0xf]
        %v882 = vld [vmem:[%s576 + $0x64] sm:$0xf]
        %v883 = vld [vmem:[%s576 + $0x68] sm:$0xf]
        %v884 = vld [vmem:[%s576 + $0x6c] sm:$0xf]
        %v885 = vld [vmem:[%s576 + $0x70] sm:$0xf]
        %v886 = vld [vmem:[%s576 + $0x74] sm:$0xf]
        %v887 = vld [vmem:[%s576 + $0x78] sm:$0xf]
        %v888 = vld [vmem:[%s576 + $0x7c] sm:$0xf]
        %v889 = vld [vmem:[%s576 + $0x80] sm:$0xf]
        %v890 = vld [vmem:[%s576 + $0x84] sm:$0xf]
        %v891 = vld [vmem:[%s576 + $0x88] sm:$0xf]
        %v892 = vld [vmem:[%s576 + $0x8c] sm:$0xf]
        %v893 = vld [vmem:[%s576 + $0x90] sm:$0xf]
        %v894 = vld [vmem:[%s576 + $0x94] sm:$0xf]
        %v895 = vld [vmem:[%s576 + $0x98] sm:$0xf]
        %v896 = vld [vmem:[%s576 + $0x9c] sm:$0xf]
        %v897 = vld [vmem:[%s576 + $0xa0] sm:$0xf]
        %v898 = vld [vmem:[%s576 + $0xa4] sm:$0xf]
        %v899 = vld [vmem:[%s576 + $0xa8] sm:$0xf]
        %v900 = vld [vmem:[%s576 + $0xac] sm:$0xf]
        %v901 = vld [vmem:[%s576 + $0xb0] sm:$0xf]
        %v902 = vld [vmem:[%s576 + $0xb4] sm:$0xf]
        %v903 = vld [vmem:[%s576 + $0xb8] sm:$0xf]
        %v904 = vld [vmem:[%s576 + $0xbc] sm:$0xf]
        %v905 = vld [vmem:[%s576 + $0xc0] sm:$0xf]
        %v906 = vld [vmem:[%s576 + $0xc4] sm:$0xf]
        %v907 = vld [vmem:[%s576 + $0xc8] sm:$0xf]
        %v908 = vld [vmem:[%s576 + $0xcc] sm:$0xf]
        %v909 = vld [vmem:[%s576 + $0xd0] sm:$0xf]
        %v910 = vld [vmem:[%s576 + $0xd4] sm:$0xf]
        %v911 = vld [vmem:[%s576 + $0xd8] sm:$0xf]
        %v912 = vld [vmem:[%s576 + $0xdc] sm:$0xf]
        %v913 = vld [vmem:[%s576 + $0xe0] sm:$0xf]
        %v914 = vld [vmem:[%s576 + $0xe4] sm:$0xf]
        %v915 = vld [vmem:[%s576 + $0xe8] sm:$0xf]
        %v916 = vld [vmem:[%s576 + $0xec] sm:$0xf]
        %v917 = vld [vmem:[%s576 + $0xf0] sm:$0xf]
        %v918 = vld [vmem:[%s576 + $0xf4] sm:$0xf]
        %v919 = vld [vmem:[%s576 + $0xf8] sm:$0xf]
        %v920 = vld [vmem:[%s576 + $0xfc] sm:$0xf]
        %v937 = vunpack.c.l.b16 %v718
        %v938 = vunpack.c.h.b16 %v718
        %v939 = vunpack.c.l.b16 %v719
        %v940 = vunpack.c.h.b16 %v719
        %v941 = vunpack.c.l.b16 %v720
        %v942 = vunpack.c.h.b16 %v720
        %v943 = vunpack.c.l.b16 %v721
        %v944 = vunpack.c.h.b16 %v721
        %v945 = vunpack.c.l.b16 %v722
        %v946 = vunpack.c.h.b16 %v722
        %v947 = vunpack.c.l.b16 %v723
        %v948 = vunpack.c.h.b16 %v723
        %v949 = vunpack.c.l.b16 %v724
        %v950 = vunpack.c.h.b16 %v724
        %v951 = vunpack.c.l.b16 %v725
        %v952 = vunpack.c.h.b16 %v725
        %v953 = vunpack.c.l.b16 %v726
        %v954 = vunpack.c.h.b16 %v726
        %v955 = vunpack.c.l.b16 %v727
        %v956 = vunpack.c.h.b16 %v727
        %v957 = vunpack.c.l.b16 %v728
        %v958 = vunpack.c.h.b16 %v728
        %v959 = vunpack.c.l.b16 %v729
        %v960 = vunpack.c.h.b16 %v729
        %v961 = vunpack.c.l.b16 %v730
        %v962 = vunpack.c.h.b16 %v730
        %v963 = vunpack.c.l.b16 %v731
        %v964 = vunpack.c.h.b16 %v731
        %v965 = vunpack.c.l.b16 %v732
        %v966 = vunpack.c.h.b16 %v732
        %v967 = vunpack.c.l.b16 %v733
        %v968 = vunpack.c.h.b16 %v733
        %v969 = vpack.c.b16 %v941, %v937
        %v970 = vpack.c.b16 %v942, %v938
        %v971 = vpack.c.b16 %v943, %v939
        %v972 = vpack.c.b16 %v944, %v940
        %v973 = vpack.c.b16 %v949, %v945
        %v974 = vpack.c.b16 %v950, %v946
        %v975 = vpack.c.b16 %v951, %v947
        %v976 = vpack.c.b16 %v952, %v948
        %v977 = vpack.c.b16 %v957, %v953
        %v978 = vpack.c.b16 %v958, %v954
        %v979 = vpack.c.b16 %v959, %v955
        %v980 = vpack.c.b16 %v960, %v956
        %v981 = vpack.c.b16 %v965, %v961
        %v982 = vpack.c.b16 %v966, %v962
        %v983 = vpack.c.b16 %v967, %v963
        %v984 = vpack.c.b16 %v968, %v964
        %v1065 = vunpack.c.l.b16 %v857
        %v1066 = vunpack.c.l.b16 %v858
        %v1067 = vunpack.c.l.b16 %v859
        %v1068 = vunpack.c.l.b16 %v860
        %v1069 = vunpack.c.l.b16 %v861
        %v1070 = vunpack.c.l.b16 %v862
        %v1071 = vunpack.c.l.b16 %v863
        %v1072 = vunpack.c.l.b16 %v864
        %v1073 = vunpack.c.l.b16 %v865
        %v1074 = vunpack.c.l.b16 %v866
        %v1075 = vunpack.c.l.b16 %v867
        %v1076 = vunpack.c.l.b16 %v868
        %v1077 = vunpack.c.l.b16 %v869
        %v1078 = vunpack.c.l.b16 %v870
        %v1079 = vunpack.c.l.b16 %v871
        %v1080 = vunpack.c.l.b16 %v872
        %v1081 = vunpack.c.l.b16 %v873
        %v1082 = vunpack.c.l.b16 %v874
        %v1083 = vunpack.c.l.b16 %v875
        %v1084 = vunpack.c.l.b16 %v876
        %v1085 = vunpack.c.l.b16 %v877
        %v1086 = vunpack.c.l.b16 %v878
        %v1087 = vunpack.c.l.b16 %v879
        %v1088 = vunpack.c.l.b16 %v880
        %v1089 = vunpack.c.l.b16 %v881
        %v1090 = vunpack.c.l.b16 %v882
        %v1091 = vunpack.c.l.b16 %v883
        %v1092 = vunpack.c.l.b16 %v884
        %v1093 = vunpack.c.l.b16 %v885
        %v1094 = vunpack.c.l.b16 %v886
        %v1095 = vunpack.c.l.b16 %v887
        %v1096 = vunpack.c.l.b16 %v888
        %v1097 = vunpack.c.l.b16 %v889
        %v1098 = vunpack.c.l.b16 %v890
        %v1099 = vunpack.c.l.b16 %v891
        %v1100 = vunpack.c.l.b16 %v892
        %v1101 = vunpack.c.l.b16 %v893
        %v1102 = vunpack.c.l.b16 %v894
        %v1103 = vunpack.c.l.b16 %v895
        %v1104 = vunpack.c.l.b16 %v896
        %v1105 = vunpack.c.l.b16 %v897
        %v1106 = vunpack.c.l.b16 %v898
        %v1107 = vunpack.c.l.b16 %v899
        %v1108 = vunpack.c.l.b16 %v900
        %v1109 = vunpack.c.l.b16 %v901
        %v1110 = vunpack.c.l.b16 %v902
        %v1111 = vunpack.c.l.b16 %v903
        %v1112 = vunpack.c.l.b16 %v904
        %v1113 = vunpack.c.l.b16 %v905
        %v1114 = vunpack.c.l.b16 %v906
        %v1115 = vunpack.c.l.b16 %v907
        %v1116 = vunpack.c.l.b16 %v908
        %v1117 = vunpack.c.l.b16 %v909
        %v1118 = vunpack.c.l.b16 %v910
        %v1119 = vunpack.c.l.b16 %v911
        %v1120 = vunpack.c.l.b16 %v912
        %v1121 = vunpack.c.l.b16 %v913
        %v1122 = vunpack.c.l.b16 %v914
        %v1123 = vunpack.c.l.b16 %v915
        %v1124 = vunpack.c.l.b16 %v916
        %v1125 = vunpack.c.l.b16 %v917
        %v1126 = vunpack.c.l.b16 %v918
        %v1127 = vunpack.c.l.b16 %v919
        %v1128 = vunpack.c.l.b16 %v920
        %v1129 = vpack.c.b16 %v1066, %v1065
        %v1130 = vpack.c.b16 %v1068, %v1067
        %v1131 = vpack.c.b16 %v1070, %v1069
        %v1132 = vpack.c.b16 %v1072, %v1071
        %v1133 = vpack.c.b16 %v1074, %v1073
        %v1134 = vpack.c.b16 %v1076, %v1075
        %v1135 = vpack.c.b16 %v1078, %v1077
        %v1136 = vpack.c.b16 %v1080, %v1079
        %v1137 = vpack.c.b16 %v1082, %v1081
        %v1138 = vpack.c.b16 %v1084, %v1083
        %v1139 = vpack.c.b16 %v1086, %v1085
        %v1140 = vpack.c.b16 %v1088, %v1087
        %v1141 = vpack.c.b16 %v1090, %v1089
        %v1142 = vpack.c.b16 %v1092, %v1091
        %v1143 = vpack.c.b16 %v1094, %v1093
        %v1144 = vpack.c.b16 %v1096, %v1095
        %v1145 = vpack.c.b16 %v1098, %v1097
        %v1146 = vpack.c.b16 %v1100, %v1099
        %v1147 = vpack.c.b16 %v1102, %v1101
        %v1148 = vpack.c.b16 %v1104, %v1103
        %v1149 = vpack.c.b16 %v1106, %v1105
        %v1150 = vpack.c.b16 %v1108, %v1107
        %v1151 = vpack.c.b16 %v1110, %v1109
        %v1152 = vpack.c.b16 %v1112, %v1111
        %v1153 = vpack.c.b16 %v1114, %v1113
        %v1154 = vpack.c.b16 %v1116, %v1115
        %v1155 = vpack.c.b16 %v1118, %v1117
        %v1156 = vpack.c.b16 %v1120, %v1119
        %v1157 = vpack.c.b16 %v1122, %v1121
        %v1158 = vpack.c.b16 %v1124, %v1123
        %v1159 = vpack.c.b16 %v1126, %v1125
        %v1160 = vpack.c.b16 %v1128, %v1127
        %1193 = vmatprep.subr.bf16.mxu0 0
        %1194 = vmatpush1.bf16.msra.mxu0 %v1129
        %1195 = vmatprep.subr.bf16.mxu0 0
        %1196 = vmatpush1.bf16.msra.mxu0 %v1130
        %1197 = vmatprep.subr.bf16.mxu0 0
        %1198 = vmatpush1.bf16.msra.mxu0 %v1131
        %1199 = vmatprep.subr.bf16.mxu0 0
        %1200 = vmatpush1.bf16.msra.mxu0 %v1132
        %1201 = vmatprep.subr.bf16.mxu0 0
        %1202 = vmatpush1.bf16.msra.mxu0 %v1133
        %1203 = vmatprep.subr.bf16.mxu0 0
        %1204 = vmatpush1.bf16.msra.mxu0 %v1134
        %1205 = vmatprep.subr.bf16.mxu0 0
        %1206 = vmatpush1.bf16.msra.mxu0 %v1135
        %1207 = vmatprep.subr.bf16.mxu0 0
        %1208 = vmatpush1.bf16.msra.mxu0 %v1136
        %1209 = vmatprep.subr.bf16.mxu0 0
        %1210 = vmatpush1.bf16.msra.mxu0 %v1137
        %1211 = vmatprep.subr.bf16.mxu0 0
        %1212 = vmatpush1.bf16.msra.mxu0 %v1138
        %1213 = vmatprep.subr.bf16.mxu0 0
        %1214 = vmatpush1.bf16.msra.mxu0 %v1139
        %1215 = vmatprep.subr.bf16.mxu0 0
        %1216 = vmatpush1.bf16.msra.mxu0 %v1140
        %1217 = vmatprep.subr.bf16.mxu0 0
        %1218 = vmatpush1.bf16.msra.mxu0 %v1141
        %1219 = vmatprep.subr.bf16.mxu0 0
        %1220 = vmatpush1.bf16.msra.mxu0 %v1142
        %1221 = vmatprep.subr.bf16.mxu0 0
        %1222 = vmatpush1.bf16.msra.mxu0 %v1143
        %1223 = vmatprep.subr.bf16.mxu0 0
        %1224 = vmatpush1.bf16.msra.mxu0 %v1144
        %1225 = vmatprep.mubr.bf16.mxu0 %v970
        %1226 = vmatmul.mubr.bf16.gmra.mrb[0].mxu0 %v969
        %v1227 = vpop.f32.mrb[0].mxu0
        %v1228 = vadd.f32 0.0, %v1227
        %v1229 = vpop.f32.mrb[0].mxu0
        %v1230 = vpop.f32.mrb[0].mxu0
        %v1231 = vadd.f32 0.0, %v1230
        %v1232 = vpop.f32.mrb[0].mxu0
        %1233 = vmatprep.mubr.bf16.mxu0 %v974
        %1234 = vmatmul.mubr.bf16.gmra.mrb[0].mxu0 %v973
        %v1235 = vpop.f32.mrb[0].mxu0
        %v1236 = vadd.f32 0.0, %v1235
        %v1237 = vpop.f32.mrb[0].mxu0
        %v1238 = vpop.f32.mrb[0].mxu0
        %v1239 = vadd.f32 0.0, %v1238
        %v1240 = vpop.f32.mrb[0].mxu0
        %1241 = vmatprep.mubr.bf16.mxu0 %v978
        %1242 = vmatmul.mubr.bf16.gmra.mrb[0].mxu0 %v977
        %v1243 = vpop.f32.mrb[0].mxu0
        %v1244 = vadd.f32 0.0, %v1243
        %v1245 = vpop.f32.mrb[0].mxu0
        %v1246 = vpop.f32.mrb[0].mxu0
        %v1247 = vadd.f32 0.0, %v1246
        %v1248 = vpop.f32.mrb[0].mxu0
        %1249 = vmatprep.mubr.bf16.mxu0 %v982
        %1250 = vmatmul.mubr.bf16.gmra.mrb[0].mxu0 %v981
        %v1251 = vpop.f32.mrb[0].mxu0
        %v1252 = vadd.f32 0.0, %v1251
        %v1253 = vpop.f32.mrb[0].mxu0
        %v1254 = vpop.f32.mrb[0].mxu0
        %v1255 = vadd.f32 0.0, %v1254
        %v1256 = vpop.f32.mrb[0].mxu0
        %1257 = vdwg.mxu0
        %1258 = vmatprep.subr.bf16.mxu0 0
        %1259 = vmatpush1.bf16.msra.mxu0 %v1145
        %1260 = vmatprep.subr.bf16.mxu0 0
        %1261 = vmatpush1.bf16.msra.mxu0 %v1146
        %1262 = vmatprep.subr.bf16.mxu0 0
        %1263 = vmatpush1.bf16.msra.mxu0 %v1147
        %1264 = vmatprep.subr.bf16.mxu0 0
        %1265 = vmatpush1.bf16.msra.mxu0 %v1148
        %1266 = vmatprep.subr.bf16.mxu0 0
        %1267 = vmatpush1.bf16.msra.mxu0 %v1149
        %1268 = vmatprep.subr.bf16.mxu0 0
        %1269 = vmatpush1.bf16.msra.mxu0 %v1150
        %1270 = vmatprep.subr.bf16.mxu0 0
        %1271 = vmatpush1.bf16.msra.mxu0 %v1151
        %1272 = vmatprep.subr.bf16.mxu0 0
        %1273 = vmatpush1.bf16.msra.mxu0 %v1152
        %1274 = vmatprep.subr.bf16.mxu0 0
        %1275 = vmatpush1.bf16.msra.mxu0 %v1153
        %1276 = vmatprep.subr.bf16.mxu0 0
        %1277 = vmatpush1.bf16.msra.mxu0 %v1154
        %1278 = vmatprep.subr.bf16.mxu0 0
        %1279 = vmatpush1.bf16.msra.mxu0 %v1155
        %1280 = vmatprep.subr.bf16.mxu0 0
        %1281 = vmatpush1.bf16.msra.mxu0 %v1156
        %1282 = vmatprep.subr.bf16.mxu0 0
        %1283 = vmatpush1.bf16.msra.mxu0 %v1157
        %1284 = vmatprep.subr.bf16.mxu0 0
        %1285 = vmatpush1.bf16.msra.mxu0 %v1158
        %1286 = vmatprep.subr.bf16.mxu0 0
        %1287 = vmatpush1.bf16.msra.mxu0 %v1159
        %1288 = vmatprep.subr.bf16.mxu0 0
        %1289 = vmatpush1.bf16.msra.mxu0 %v1160
        %1290 = vmatprep.mubr.bf16.mxu0 %v972
        %1291 = vmatmul.mubr.bf16.gmra.mrb[0].mxu0 %v971
        %v1292 = vpop.f32.mrb[0].mxu0
        %v1293 = vadd.f32 %v1228, %v1292
        %v1294 = vpop.f32.mrb[0].mxu0
        %v1295 = vpop.f32.mrb[0].mxu0
        %v1296 = vadd.f32 %v1231, %v1295
        %v1297 = vpop.f32.mrb[0].mxu0
        %1298 = vmatprep.mubr.bf16.mxu0 %v976
        %1299 = vmatmul.mubr.bf16.gmra.mrb[0].mxu0 %v975
        %v1300 = vpop.f32.mrb[0].mxu0
        %v1301 = vadd.f32 %v1236, %v1300
        %v1302 = vpop.f32.mrb[0].mxu0
        %v1303 = vpop.f32.mrb[0].mxu0
        %v1304 = vadd.f32 %v1239, %v1303
        %v1305 = vpop.f32.mrb[0].mxu0
        %1306 = vmatprep.mubr.bf16.mxu0 %v980
        %1307 = vmatmul.mubr.bf16.gmra.mrb[0].mxu0 %v979
        %v1308 = vpop.f32.mrb[0].mxu0
        %v1309 = vadd.f32 %v1244, %v1308
        %v1310 = vpop.f32.mrb[0].mxu0
        %v1311 = vpop.f32.mrb[0].mxu0
        %v1312 = vadd.f32 %v1247, %v1311
        %v1313 = vpop.f32.mrb[0].mxu0
        %1314 = vmatprep.mubr.bf16.mxu0 %v984
        %1315 = vmatmul.mubr.bf16.gmra.mrb[0].mxu0 %v983
        %v1316 = vpop.f32.mrb[0].mxu0
        %v1317 = vadd.f32 %v1252, %v1316
        %v1318 = vpop.f32.mrb[0].mxu0
        %v1319 = vpop.f32.mrb[0].mxu0
        %v1320 = vadd.f32 %v1255, %v1319
        %v1321 = vpop.f32.mrb[0].mxu0
        %1322 = vdwg.mxu0
        %v1323 = vld [vmem:[%s584] sm:$0x1]
        %v1325 = vlaneseq
        %v1326 = vshrl.u32 %v1325, 7
        %v1327 = vsub.s32 0, %v1326
        %v1328 = vrot.slane %v1323, %v1327
        %v1330 = vmul.f32 %v1293, %v1328
        %v1331 = vmul.f32 %v1296, %v1328
        %v1332 = vmul.f32 %v1301, %v1328
        %v1333 = vmul.f32 %v1304, %v1328
        %v1334 = vmul.f32 %v1309, %v1328
        %v1335 = vmul.f32 %v1312, %v1328
        %v1336 = vmul.f32 %v1317, %v1328
        %v1337 = vmul.f32 %v1320, %v1328
        %v1338 = vld [vmem:[%s592] sm:$0x1]
        %v1340 = vlaneseq
        %v1341 = vshrl.u32 %v1340, 7
        %v1342 = vsub.s32 0, %v1341
        %v1343 = vrot.slane %v1338, %v1342
        %v1345 = vadd.f32 %v1330, %v1343
        %v1346 = vadd.f32 %v1331, %v1343
        %v1347 = vadd.f32 %v1332, %v1343
        %v1348 = vadd.f32 %v1333, %v1343
        %v1349 = vadd.f32 %v1334, %v1343
        %v1350 = vadd.f32 %v1335, %v1343
        %v1351 = vadd.f32 %v1336, %v1343
        %v1352 = vadd.f32 %v1337, %v1343
        %v1353 = vmax.f32 %v1345, 0.0
        %v1354 = vmax.f32 %v1346, 0.0
        %v1355 = vmax.f32 %v1347, 0.0
        %v1356 = vmax.f32 %v1348, 0.0
        %v1357 = vmax.f32 %v1349, 0.0
        %v1358 = vmax.f32 %v1350, 0.0
        %v1359 = vmax.f32 %v1351, 0.0
        %v1360 = vmax.f32 %v1352, 0.0
        %v1361 = vpack.c.bf16 %v1354, %v1353
        %v1362 = vpack.c.bf16 %v1356, %v1355
        %v1363 = vpack.c.bf16 %v1358, %v1357
        %v1364 = vpack.c.bf16 %v1360, %v1359
        %v1369 = vunpack.c.l.b16 %v1361
        %v1370 = vunpack.c.h.b16 %v1361
        %v1371 = vunpack.c.l.b16 %v1362
        %v1372 = vunpack.c.h.b16 %v1362
        %v1373 = vunpack.c.l.b16 %v1363
        %v1374 = vunpack.c.h.b16 %v1363
        %v1375 = vunpack.c.l.b16 %v1364
        %v1376 = vunpack.c.h.b16 %v1364
        %v1377 = vpack.c.b16 %v1369, %v1369
        %v1378 = vpack.c.b16 %v1370, %v1370
        %v1379 = vpack.c.b16 %v1371, %v1371
        %v1380 = vpack.c.b16 %v1372, %v1372
        %v1381 = vpack.c.b16 %v1373, %v1373
        %v1382 = vpack.c.b16 %v1374, %v1374
        %v1383 = vpack.c.b16 %v1375, %v1375
        %v1384 = vpack.c.b16 %v1376, %v1376
        %v1386 = vshrl.u32 %v1377, 16
        %v1388 = vrot.slane %v1386, 7
        %v1389 = vshll.u32 %v1377, 16
        %v1391 = vor.u32 %v1388, %v1389
        %v1393 = vshrl.u32 %v1378, 16
        %v1395 = vrot.slane %v1393, 7
        %v1396 = vshll.u32 %v1378, 16
        %v1398 = vor.u32 %v1395, %v1396
        %v1400 = vshrl.u32 %v1379, 16
        %v1402 = vrot.slane %v1400, 7
        %v1403 = vshll.u32 %v1379, 16
        %v1405 = vor.u32 %v1402, %v1403
        %v1407 = vshrl.u32 %v1380, 16
        %v1409 = vrot.slane %v1407, 7
        %v1410 = vshll.u32 %v1380, 16
        %v1412 = vor.u32 %v1409, %v1410
        %v1414 = vshrl.u32 %v1381, 16
        %v1416 = vrot.slane %v1414, 7
        %v1417 = vshll.u32 %v1381, 16
        %v1419 = vor.u32 %v1416, %v1417
        %v1421 = vshrl.u32 %v1382, 16
        %v1423 = vrot.slane %v1421, 7
        %v1424 = vshll.u32 %v1382, 16
        %v1426 = vor.u32 %v1423, %v1424
        %v1428 = vshrl.u32 %v1383, 16
        %v1430 = vrot.slane %v1428, 7
        %v1431 = vshll.u32 %v1383, 16
        %v1433 = vor.u32 %v1430, %v1431
        %v1435 = vshrl.u32 %v1384, 16
        %v1437 = vrot.slane %v1435, 7
        %v1438 = vshll.u32 %v1384, 16
        %v1440 = vor.u32 %v1437, %v1438
        %vm1449 = vcmask 1040384
        %vm1450 = vsmask.f32 256
        %vm1451 = vmand %vm1449, %vm1450
        %v1452 = vsel %vm1451, 0, %v1391
        %v1453 = vsel %vm1451, 0, %v1398
        %v1454 = vsel %vm1451, 0, %v1405
        %v1455 = vsel %vm1451, 0, %v1412
        %v1456 = vsel %vm1451, 0, %v1419
        %v1457 = vsel %vm1451, 0, %v1426
        %v1458 = vsel %vm1451, 0, %v1433
        %v1459 = vsel %vm1451, 0, %v1440
        %v1460 = vld [vmem:[%s601] sm:$0xf]
        %v1461 = vld [vmem:[%s601 + $0x4] sm:$0xf]
        %v1462 = vld [vmem:[%s601 + $0x8] sm:$0xf]
        %v1463 = vld [vmem:[%s601 + $0xc] sm:$0xf]
        %v1464 = vld [vmem:[%s601 + $0x10] sm:$0xf]
        %v1465 = vld [vmem:[%s601 + $0x14] sm:$0xf]
        %v1466 = vld [vmem:[%s601 + $0x18] sm:$0xf]
        %v1467 = vld [vmem:[%s601 + $0x1c] sm:$0xf]
        %v1468 = vld [vmem:[%s601 + $0x20] sm:$0xf]
        %v1469 = vld [vmem:[%s601 + $0x24] sm:$0xf]
        %v1470 = vld [vmem:[%s601 + $0x28] sm:$0xf]
        %v1471 = vld [vmem:[%s601 + $0x2c] sm:$0xf]
        %v1472 = vld [vmem:[%s601 + $0x30] sm:$0xf]
        %v1473 = vld [vmem:[%s601 + $0x34] sm:$0xf]
        %v1474 = vld [vmem:[%s601 + $0x38] sm:$0xf]
        %v1475 = vld [vmem:[%s601 + $0x3c] sm:$0xf]
        %v1476 = vld [vmem:[%s601 + $0xc0] sm:$0xf]
        %v1477 = vld [vmem:[%s601 + $0xc4] sm:$0xf]
        %v1478 = vld [vmem:[%s601 + $0xc8] sm:$0xf]
        %v1479 = vld [vmem:[%s601 + $0xcc] sm:$0xf]
        %v1480 = vld [vmem:[%s601 + $0xd0] sm:$0xf]
        %v1481 = vld [vmem:[%s601 + $0xd4] sm:$0xf]
        %v1482 = vld [vmem:[%s601 + $0xd8] sm:$0xf]
        %v1483 = vld [vmem:[%s601 + $0xdc] sm:$0xf]
        %v1484 = vld [vmem:[%s601 + $0xe0] sm:$0xf]
        %v1485 = vld [vmem:[%s601 + $0xe4] sm:$0xf]
        %v1486 = vld [vmem:[%s601 + $0xe8] sm:$0xf]
        %v1487 = vld [vmem:[%s601 + $0xec] sm:$0xf]
        %v1488 = vld [vmem:[%s601 + $0xf0] sm:$0xf]
        %v1489 = vld [vmem:[%s601 + $0xf4] sm:$0xf]
        %v1490 = vld [vmem:[%s601 + $0xf8] sm:$0xf]
        %v1491 = vld [vmem:[%s601 + $0xfc] sm:$0xf]
        %v1500 = vunpack.c.l.b16 %v1452
        %v1501 = vunpack.c.l.b16 %v1453
        %v1502 = vunpack.c.l.b16 %v1454
        %v1503 = vunpack.c.l.b16 %v1455
        %v1504 = vunpack.c.l.b16 %v1456
        %v1505 = vunpack.c.l.b16 %v1457
        %v1506 = vunpack.c.l.b16 %v1458
        %v1507 = vunpack.c.l.b16 %v1459
        %v1508 = vpack.c.b16 %v1501, %v1500
        %v1509 = vpack.c.b16 %v1503, %v1502
        %v1510 = vpack.c.b16 %v1505, %v1504
        %v1511 = vpack.c.b16 %v1507, %v1506
        %v1532 = vunpack.c.l.b16 %v1476
        %v1533 = vunpack.c.l.b16 %v1477
        %v1534 = vunpack.c.l.b16 %v1478
        %v1535 = vunpack.c.l.b16 %v1479
        %v1536 = vunpack.c.l.b16 %v1480
        %v1537 = vunpack.c.l.b16 %v1481
        %v1538 = vunpack.c.l.b16 %v1482
        %v1539 = vunpack.c.l.b16 %v1483
        %v1540 = vunpack.c.l.b16 %v1484
        %v1541 = vunpack.c.l.b16 %v1485
        %v1542 = vunpack.c.l.b16 %v1486
        %v1543 = vunpack.c.l.b16 %v1487
        %v1544 = vunpack.c.l.b16 %v1488
        %v1545 = vunpack.c.l.b16 %v1489
        %v1546 = vunpack.c.l.b16 %v1490
        %v1547 = vunpack.c.l.b16 %v1491
        %v1548 = vpack.c.b16 %v1533, %v1532
        %v1549 = vpack.c.b16 %v1535, %v1534
        %v1550 = vpack.c.b16 %v1537, %v1536
        %v1551 = vpack.c.b16 %v1539, %v1538
        %v1552 = vpack.c.b16 %v1541, %v1540
        %v1553 = vpack.c.b16 %v1543, %v1542
        %v1554 = vpack.c.b16 %v1545, %v1544
        %v1555 = vpack.c.b16 %v1547, %v1546
        %1564 = vmatprep.subr.bf16.mxu0 0
        %1565 = vmatpush1.bf16.msra.mxu0 %v1548
        %1566 = vmatprep.subr.bf16.mxu0 0
        %1567 = vmatpush1.bf16.msra.mxu0 %v1549
        %1568 = vmatprep.subr.bf16.mxu0 0
        %1569 = vmatpush1.bf16.msra.mxu0 %v1550
        %1570 = vmatprep.subr.bf16.mxu0 0
        %1571 = vmatpush1.bf16.msra.mxu0 %v1551
        %1572 = vmatprep.subr.bf16.mxu0 0
        %1573 = vmatpush1.bf16.msra.mxu0 %v1552
        %1574 = vmatprep.subr.bf16.mxu0 0
        %1575 = vmatpush1.bf16.msra.mxu0 %v1553
        %1576 = vmatprep.subr.bf16.mxu0 0
        %1577 = vmatpush1.bf16.msra.mxu0 %v1554
        %1578 = vmatprep.subr.bf16.mxu0 0
        %1579 = vmatpush1.bf16.msra.mxu0 %v1555
        %1580 = vmatprep.subr.bf16.mxu0 0
        %1581 = vmatpush1.bf16.msra.mxu0 0
        %1582 = vmatprep.subr.bf16.mxu0 0
        %1583 = vmatpush1.bf16.msra.mxu0 0
        %1584 = vmatprep.subr.bf16.mxu0 0
        %1585 = vmatpush1.bf16.msra.mxu0 0
        %1586 = vmatprep.subr.bf16.mxu0 0
        %1587 = vmatpush1.bf16.msra.mxu0 0
        %1588 = vmatprep.subr.bf16.mxu0 0
        %1589 = vmatpush1.bf16.msra.mxu0 0
        %1590 = vmatprep.subr.bf16.mxu0 0
        %1591 = vmatpush1.bf16.msra.mxu0 0
        %1592 = vmatprep.subr.bf16.mxu0 0
        %1593 = vmatpush1.bf16.msra.mxu0 0
        %1594 = vmatprep.subr.bf16.mxu0 0
        %1595 = vmatpush1.bf16.msra.mxu0 0
        %1596 = vmatprep.mubr.bf16.mxu0 0
        %1597 = vmatmul.mubr.bf16.gmra.mrb[0].mxu0 %v1508
        %v1598 = vpop.f32.mrb[0].mxu0
        %v1599 = vadd.f32 0.0, %v1598
        %v1600 = vpop.f32.mrb[0].mxu0
        %v1601 = vpop.f32.mrb[0].mxu0
        %v1602 = vadd.f32 0.0, %v1601
        %v1603 = vpop.f32.mrb[0].mxu0
        %1604 = vmatprep.mubr.bf16.mxu0 0
        %1605 = vmatmul.mubr.bf16.gmra.mrb[0].mxu0 %v1509
        %v1606 = vpop.f32.mrb[0].mxu0
        %v1607 = vadd.f32 0.0, %v1606
        %v1608 = vpop.f32.mrb[0].mxu0
        %v1609 = vpop.f32.mrb[0].mxu0
        %v1610 = vadd.f32 0.0, %v1609
        %v1611 = vpop.f32.mrb[0].mxu0
        %1612 = vmatprep.mubr.bf16.mxu0 0
        %1613 = vmatmul.mubr.bf16.gmra.mrb[0].mxu0 %v1510
        %v1614 = vpop.f32.mrb[0].mxu0
        %v1615 = vadd.f32 0.0, %v1614
        %v1616 = vpop.f32.mrb[0].mxu0
        %v1617 = vpop.f32.mrb[0].mxu0
        %v1618 = vadd.f32 0.0, %v1617
        %v1619 = vpop.f32.mrb[0].mxu0
        %1620 = vmatprep.mubr.bf16.mxu0 0
        %1621 = vmatmul.mubr.bf16.gmra.mrb[0].mxu0 %v1511
        %v1622 = vpop.f32.mrb[0].mxu0
        %v1623 = vadd.f32 0.0, %v1622
        %v1624 = vpop.f32.mrb[0].mxu0
        %v1625 = vpop.f32.mrb[0].mxu0
        %v1626 = vadd.f32 0.0, %v1625
        %v1627 = vpop.f32.mrb[0].mxu0
        %1628 = vdwg.mxu0
        %v1630 = vunpack.c.l.b16 0
        %v1631 = vpack.c.b16 %v1500, %v1630
        %v1632 = vpack.c.b16 %v1502, %v1501
        %v1633 = vpack.c.b16 %v1504, %v1503
        %v1634 = vpack.c.b16 %v1506, %v1505
        %v1655 = vunpack.c.l.b16 %v1460
        %v1656 = vunpack.c.l.b16 %v1461
        %v1657 = vunpack.c.l.b16 %v1462
        %v1658 = vunpack.c.l.b16 %v1463
        %v1659 = vunpack.c.l.b16 %v1464
        %v1660 = vunpack.c.l.b16 %v1465
        %v1661 = vunpack.c.l.b16 %v1466
        %v1662 = vunpack.c.l.b16 %v1467
        %v1663 = vunpack.c.l.b16 %v1468
        %v1664 = vunpack.c.l.b16 %v1469
        %v1665 = vunpack.c.l.b16 %v1470
        %v1666 = vunpack.c.l.b16 %v1471
        %v1667 = vunpack.c.l.b16 %v1472
        %v1668 = vunpack.c.l.b16 %v1473
        %v1669 = vunpack.c.l.b16 %v1474
        %v1670 = vunpack.c.l.b16 %v1475
        %v1671 = vpack.c.b16 %v1656, %v1655
        %v1672 = vpack.c.b16 %v1658, %v1657
        %v1673 = vpack.c.b16 %v1660, %v1659
        %v1674 = vpack.c.b16 %v1662, %v1661
        %v1675 = vpack.c.b16 %v1664, %v1663
        %v1676 = vpack.c.b16 %v1666, %v1665
        %v1677 = vpack.c.b16 %v1668, %v1667
        %v1678 = vpack.c.b16 %v1670, %v1669
        %1687 = vmatprep.subr.bf16.mxu0 0
        %1688 = vmatpush1.bf16.msra.mxu0 %v1671
        %1689 = vmatprep.subr.bf16.mxu0 0
        %1690 = vmatpush1.bf16.msra.mxu0 %v1672
        %1691 = vmatprep.subr.bf16.mxu0 0
        %1692 = vmatpush1.bf16.msra.mxu0 %v1673
        %1693 = vmatprep.subr.bf16.mxu0 0
        %1694 = vmatpush1.bf16.msra.mxu0 %v1674
        %1695 = vmatprep.subr.bf16.mxu0 0
        %1696 = vmatpush1.bf16.msra.mxu0 %v1675
        %1697 = vmatprep.subr.bf16.mxu0 0
        %1698 = vmatpush1.bf16.msra.mxu0 %v1676
        %1699 = vmatprep.subr.bf16.mxu0 0
        %1700 = vmatpush1.bf16.msra.mxu0 %v1677
        %1701 = vmatprep.subr.bf16.mxu0 0
        %1702 = vmatpush1.bf16.msra.mxu0 %v1678
        %1703 = vmatprep.subr.bf16.mxu0 0
        %1704 = vmatpush1.bf16.msra.mxu0 0
        %1705 = vmatprep.subr.bf16.mxu0 0
        %1706 = vmatpush1.bf16.msra.mxu0 0
        %1707 = vmatprep.subr.bf16.mxu0 0
        %1708 = vmatpush1.bf16.msra.mxu0 0
        %1709 = vmatprep.subr.bf16.mxu0 0
        %1710 = vmatpush1.bf16.msra.mxu0 0
        %1711 = vmatprep.subr.bf16.mxu0 0
        %1712 = vmatpush1.bf16.msra.mxu0 0
        %1713 = vmatprep.subr.bf16.mxu0 0
        %1714 = vmatpush1.bf16.msra.mxu0 0
        %1715 = vmatprep.subr.bf16.mxu0 0
        %1716 = vmatpush1.bf16.msra.mxu0 0
        %1717 = vmatprep.subr.bf16.mxu0 0
        %1718 = vmatpush1.bf16.msra.mxu0 0
        %1719 = vmatprep.mubr.bf16.mxu0 0
        %1720 = vmatmul.mubr.bf16.gmra.mrb[0].mxu0 %v1631
        %v1721 = vpop.f32.mrb[0].mxu0
        %v1722 = vadd.f32 %v1599, %v1721
        %v1723 = vpop.f32.mrb[0].mxu0
        %v1724 = vpop.f32.mrb[0].mxu0
        %v1725 = vadd.f32 %v1602, %v1724
        %v1726 = vpop.f32.mrb[0].mxu0
        %1727 = vmatprep.mubr.bf16.mxu0 0
        %1728 = vmatmul.mubr.bf16.gmra.mrb[0].mxu0 %v1632
        %v1729 = vpop.f32.mrb[0].mxu0
        %v1730 = vadd.f32 %v1607, %v1729
        %v1731 = vpop.f32.mrb[0].mxu0
        %v1732 = vpop.f32.mrb[0].mxu0
        %v1733 = vadd.f32 %v1610, %v1732
        %v1734 = vpop.f32.mrb[0].mxu0
        %1735 = vmatprep.mubr.bf16.mxu0 0
        %1736 = vmatmul.mubr.bf16.gmra.mrb[0].mxu0 %v1633
        %v1737 = vpop.f32.mrb[0].mxu0
        %v1738 = vadd.f32 %v1615, %v1737
        %v1739 = vpop.f32.mrb[0].mxu0
        %v1740 = vpop.f32.mrb[0].mxu0
        %v1741 = vadd.f32 %v1618, %v1740
        %v1742 = vpop.f32.mrb[0].mxu0
        %1743 = vmatprep.mubr.bf16.mxu0 0
        %1744 = vmatmul.mubr.bf16.gmra.mrb[0].mxu0 %v1634
        %v1745 = vpop.f32.mrb[0].mxu0
        %v1746 = vadd.f32 %v1623, %v1745
        %v1747 = vpop.f32.mrb[0].mxu0
        %v1748 = vpop.f32.mrb[0].mxu0
        %v1749 = vadd.f32 %v1626, %v1748
        %v1750 = vpop.f32.mrb[0].mxu0
        %1751 = vdwg.mxu0
        %v1752 = vld [vmem:[%s601 + $0x180] sm:$0xf]
        %v1753 = vld [vmem:[%s601 + $0x184] sm:$0xf]
        %v1754 = vld [vmem:[%s601 + $0x188] sm:$0xf]
        %v1755 = vld [vmem:[%s601 + $0x18c] sm:$0xf]
        %v1756 = vld [vmem:[%s601 + $0x190] sm:$0xf]
        %v1757 = vld [vmem:[%s601 + $0x194] sm:$0xf]
        %v1758 = vld [vmem:[%s601 + $0x198] sm:$0xf]
        %v1759 = vld [vmem:[%s601 + $0x19c] sm:$0xf]
        %v1760 = vld [vmem:[%s601 + $0x1a0] sm:$0xf]
        %v1761 = vld [vmem:[%s601 + $0x1a4] sm:$0xf]
        %v1762 = vld [vmem:[%s601 + $0x1a8] sm:$0xf]
        %v1763 = vld [vmem:[%s601 + $0x1ac] sm:$0xf]
        %v1764 = vld [vmem:[%s601 + $0x1b0] sm:$0xf]
        %v1765 = vld [vmem:[%s601 + $0x1b4] sm:$0xf]
        %v1766 = vld [vmem:[%s601 + $0x1b8] sm:$0xf]
        %v1767 = vld [vmem:[%s601 + $0x1bc] sm:$0xf]
        %v1768 = vpack.c.b16 %v1630, %v1507
        %v1786 = vunpack.c.l.b16 %v1752
        %v1787 = vunpack.c.l.b16 %v1753
        %v1788 = vunpack.c.l.b16 %v1754
        %v1789 = vunpack.c.l.b16 %v1755
        %v1790 = vunpack.c.l.b16 %v1756
        %v1791 = vunpack.c.l.b16 %v1757
        %v1792 = vunpack.c.l.b16 %v1758
        %v1793 = vunpack.c.l.b16 %v1759
        %v1794 = vunpack.c.l.b16 %v1760
        %v1795 = vunpack.c.l.b16 %v1761
        %v1796 = vunpack.c.l.b16 %v1762
        %v1797 = vunpack.c.l.b16 %v1763
        %v1798 = vunpack.c.l.b16 %v1764
        %v1799 = vunpack.c.l.b16 %v1765
        %v1800 = vunpack.c.l.b16 %v1766
        %v1801 = vunpack.c.l.b16 %v1767
        %v1802 = vpack.c.b16 %v1787, %v1786
        %v1803 = vpack.c.b16 %v1789, %v1788
        %v1804 = vpack.c.b16 %v1791, %v1790
        %v1805 = vpack.c.b16 %v1793, %v1792
        %v1806 = vpack.c.b16 %v1795, %v1794
        %v1807 = vpack.c.b16 %v1797, %v1796
        %v1808 = vpack.c.b16 %v1799, %v1798
        %v1809 = vpack.c.b16 %v1801, %v1800
        %1818 = vmatprep.subr.bf16.mxu0 0
        %1819 = vmatpush1.bf16.msra.mxu0 %v1802
        %1820 = vmatprep.subr.bf16.mxu0 0
        %1821 = vmatpush1.bf16.msra.mxu0 %v1803
        %1822 = vmatprep.subr.bf16.mxu0 0
        %1823 = vmatpush1.bf16.msra.mxu0 %v1804
        %1824 = vmatprep.subr.bf16.mxu0 0
        %1825 = vmatpush1.bf16.msra.mxu0 %v1805
        %1826 = vmatprep.subr.bf16.mxu0 0
        %1827 = vmatpush1.bf16.msra.mxu0 %v1806
        %1828 = vmatprep.subr.bf16.mxu0 0
        %1829 = vmatpush1.bf16.msra.mxu0 %v1807
        %1830 = vmatprep.subr.bf16.mxu0 0
        %1831 = vmatpush1.bf16.msra.mxu0 %v1808
        %1832 = vmatprep.subr.bf16.mxu0 0
        %1833 = vmatpush1.bf16.msra.mxu0 %v1809
        %1834 = vmatprep.subr.bf16.mxu0 0
        %1835 = vmatpush1.bf16.msra.mxu0 0
        %1836 = vmatprep.subr.bf16.mxu0 0
        %1837 = vmatpush1.bf16.msra.mxu0 0
        %1838 = vmatprep.subr.bf16.mxu0 0
        %1839 = vmatpush1.bf16.msra.mxu0 0
        %1840 = vmatprep.subr.bf16.mxu0 0
        %1841 = vmatpush1.bf16.msra.mxu0 0
        %1842 = vmatprep.subr.bf16.mxu0 0
        %1843 = vmatpush1.bf16.msra.mxu0 0
        %1844 = vmatprep.subr.bf16.mxu0 0
        %1845 = vmatpush1.bf16.msra.mxu0 0
        %1846 = vmatprep.subr.bf16.mxu0 0
        %1847 = vmatpush1.bf16.msra.mxu0 0
        %1848 = vmatprep.subr.bf16.mxu0 0
        %1849 = vmatpush1.bf16.msra.mxu0 0
        %1850 = vmatprep.mubr.bf16.mxu0 0
        %1851 = vmatmul.mubr.bf16.gmra.mrb[0].mxu0 %v1632
        %v1852 = vpop.f32.mrb[0].mxu0
        %v1853 = vadd.f32 0.0, %v1852
        %v1854 = vpop.f32.mrb[0].mxu0
        %v1855 = vpop.f32.mrb[0].mxu0
        %v1856 = vadd.f32 0.0, %v1855
        %v1857 = vpop.f32.mrb[0].mxu0
        %1858 = vmatprep.mubr.bf16.mxu0 0
        %1859 = vmatmul.mubr.bf16.gmra.mrb[0].mxu0 %v1633
        %v1860 = vpop.f32.mrb[0].mxu0
        %v1861 = vadd.f32 0.0, %v1860
        %v1862 = vpop.f32.mrb[0].mxu0
        %v1863 = vpop.f32.mrb[0].mxu0
        %v1864 = vadd.f32 0.0, %v1863
        %v1865 = vpop.f32.mrb[0].mxu0
        %1866 = vmatprep.mubr.bf16.mxu0 0
        %1867 = vmatmul.mubr.bf16.gmra.mrb[0].mxu0 %v1634
        %v1868 = vpop.f32.mrb[0].mxu0
        %v1869 = vadd.f32 0.0, %v1868
        %v1870 = vpop.f32.mrb[0].mxu0
        %v1871 = vpop.f32.mrb[0].mxu0
        %v1872 = vadd.f32 0.0, %v1871
        %v1873 = vpop.f32.mrb[0].mxu0
        %1874 = vmatprep.mubr.bf16.mxu0 0
        %1875 = vmatmul.mubr.bf16.gmra.mrb[0].mxu0 %v1768
        %v1876 = vpop.f32.mrb[0].mxu0
        %v1877 = vadd.f32 0.0, %v1876
        %v1878 = vpop.f32.mrb[0].mxu0
        %v1879 = vpop.f32.mrb[0].mxu0
        %v1880 = vadd.f32 0.0, %v1879
        %v1881 = vpop.f32.mrb[0].mxu0
        %1882 = vdwg.mxu0
        %v1883 = vadd.f32 %v1722, %v1853
        %v1884 = vadd.f32 %v1725, %v1856
        %v1885 = vadd.f32 %v1730, %v1861
        %v1886 = vadd.f32 %v1733, %v1864
        %v1887 = vadd.f32 %v1738, %v1869
        %v1888 = vadd.f32 %v1741, %v1872
        %v1889 = vadd.f32 %v1746, %v1877
        %v1890 = vadd.f32 %v1749, %v1880
        %v1891 = vld [vmem:[%s601 + $0x40] sm:$0xf]
        %v1892 = vld [vmem:[%s601 + $0x44] sm:$0xf]
        %v1893 = vld [vmem:[%s601 + $0x48] sm:$0xf]
        %v1894 = vld [vmem:[%s601 + $0x4c] sm:$0xf]
        %v1895 = vld [vmem:[%s601 + $0x50] sm:$0xf]
        %v1896 = vld [vmem:[%s601 + $0x54] sm:$0xf]
        %v1897 = vld [vmem:[%s601 + $0x58] sm:$0xf]
        %v1898 = vld [vmem:[%s601 + $0x5c] sm:$0xf]
        %v1899 = vld [vmem:[%s601 + $0x60] sm:$0xf]
        %v1900 = vld [vmem:[%s601 + $0x64] sm:$0xf]
        %v1901 = vld [vmem:[%s601 + $0x68] sm:$0xf]
        %v1902 = vld [vmem:[%s601 + $0x6c] sm:$0xf]
        %v1903 = vld [vmem:[%s601 + $0x70] sm:$0xf]
        %v1904 = vld [vmem:[%s601 + $0x74] sm:$0xf]
        %v1905 = vld [vmem:[%s601 + $0x78] sm:$0xf]
        %v1906 = vld [vmem:[%s601 + $0x7c] sm:$0xf]
        %v1907 = vpack.c.b16 %v1369, %v1630
        %v1908 = vpack.c.b16 %v1371, %v1370
        %v1909 = vpack.c.b16 %v1373, %v1372
        %v1910 = vpack.c.b16 %v1375, %v1374
        %v1931 = vunpack.c.l.b16 %v1891
        %v1932 = vunpack.c.l.b16 %v1892
        %v1933 = vunpack.c.l.b16 %v1893
        %v1934 = vunpack.c.l.b16 %v1894
        %v1935 = vunpack.c.l.b16 %v1895
        %v1936 = vunpack.c.l.b16 %v1896
        %v1937 = vunpack.c.l.b16 %v1897
        %v1938 = vunpack.c.l.b16 %v1898
        %v1939 = vunpack.c.l.b16 %v1899
        %v1940 = vunpack.c.l.b16 %v1900
        %v1941 = vunpack.c.l.b16 %v1901
        %v1942 = vunpack.c.l.b16 %v1902
        %v1943 = vunpack.c.l.b16 %v1903
        %v1944 = vunpack.c.l.b16 %v1904
        %v1945 = vunpack.c.l.b16 %v1905
        %v1946 = vunpack.c.l.b16 %v1906
        %v1947 = vpack.c.b16 %v1932, %v1931
        %v1948 = vpack.c.b16 %v1934, %v1933
        %v1949 = vpack.c.b16 %v1936, %v1935
        %v1950 = vpack.c.b16 %v1938, %v1937
        %v1951 = vpack.c.b16 %v1940, %v1939
        %v1952 = vpack.c.b16 %v1942, %v1941
        %v1953 = vpack.c.b16 %v1944, %v1943
        %v1954 = vpack.c.b16 %v1946, %v1945
        %1963 = vmatprep.subr.bf16.mxu0 0
        %1964 = vmatpush1.bf16.msra.mxu0 %v1947
        %1965 = vmatprep.subr.bf16.mxu0 0
        %1966 = vmatpush1.bf16.msra.mxu0 %v1948
        %1967 = vmatprep.subr.bf16.mxu0 0
        %1968 = vmatpush1.bf16.msra.mxu0 %v1949
        %1969 = vmatprep.subr.bf16.mxu0 0
        %1970 = vmatpush1.bf16.msra.mxu0 %v1950
        %1971 = vmatprep.subr.bf16.mxu0 0
        %1972 = vmatpush1.bf16.msra.mxu0 %v1951
        %1973 = vmatprep.subr.bf16.mxu0 0
        %1974 = vmatpush1.bf16.msra.mxu0 %v1952
        %1975 = vmatprep.subr.bf16.mxu0 0
        %1976 = vmatpush1.bf16.msra.mxu0 %v1953
        %1977 = vmatprep.subr.bf16.mxu0 0
        %1978 = vmatpush1.bf16.msra.mxu0 %v1954
        %1979 = vmatprep.subr.bf16.mxu0 0
        %1980 = vmatpush1.bf16.msra.mxu0 0
        %1981 = vmatprep.subr.bf16.mxu0 0
        %1982 = vmatpush1.bf16.msra.mxu0 0
        %1983 = vmatprep.subr.bf16.mxu0 0
        %1984 = vmatpush1.bf16.msra.mxu0 0
        %1985 = vmatprep.subr.bf16.mxu0 0
        %1986 = vmatpush1.bf16.msra.mxu0 0
        %1987 = vmatprep.subr.bf16.mxu0 0
        %1988 = vmatpush1.bf16.msra.mxu0 0
        %1989 = vmatprep.subr.bf16.mxu0 0
        %1990 = vmatpush1.bf16.msra.mxu0 0
        %1991 = vmatprep.subr.bf16.mxu0 0
        %1992 = vmatpush1.bf16.msra.mxu0 0
        %1993 = vmatprep.subr.bf16.mxu0 0
        %1994 = vmatpush1.bf16.msra.mxu0 0
        %1995 = vmatprep.mubr.bf16.mxu0 0
        %1996 = vmatmul.mubr.bf16.gmra.mrb[0].mxu0 %v1907
        %v1997 = vpop.f32.mrb[0].mxu0
        %v1998 = vadd.f32 0.0, %v1997
        %v1999 = vpop.f32.mrb[0].mxu0
        %v2000 = vpop.f32.mrb[0].mxu0
        %v2001 = vadd.f32 0.0, %v2000
        %v2002 = vpop.f32.mrb[0].mxu0
        %2003 = vmatprep.mubr.bf16.mxu0 0
        %2004 = vmatmul.mubr.bf16.gmra.mrb[0].mxu0 %v1908
        %v2005 = vpop.f32.mrb[0].mxu0
        %v2006 = vadd.f32 0.0, %v2005
        %v2007 = vpop.f32.mrb[0].mxu0
        %v2008 = vpop.f32.mrb[0].mxu0
        %v2009 = vadd.f32 0.0, %v2008
        %v2010 = vpop.f32.mrb[0].mxu0
        %2011 = vmatprep.mubr.bf16.mxu0 0
        %2012 = vmatmul.mubr.bf16.gmra.mrb[0].mxu0 %v1909
        %v2013 = vpop.f32.mrb[0].mxu0
        %v2014 = vadd.f32 0.0, %v2013
        %v2015 = vpop.f32.mrb[0].mxu0
        %v2016 = vpop.f32.mrb[0].mxu0
        %v2017 = vadd.f32 0.0, %v2016
        %v2018 = vpop.f32.mrb[0].mxu0
        %2019 = vmatprep.mubr.bf16.mxu0 0
        %2020 = vmatmul.mubr.bf16.gmra.mrb[0].mxu0 %v1910
        %v2021 = vpop.f32.mrb[0].mxu0
        %v2022 = vadd.f32 0.0, %v2021
        %v2023 = vpop.f32.mrb[0].mxu0
        %v2024 = vpop.f32.mrb[0].mxu0
        %v2025 = vadd.f32 0.0, %v2024
        %v2026 = vpop.f32.mrb[0].mxu0
        %2027 = vdwg.mxu0
        %v2028 = vadd.f32 %v1883, %v1998
        %v2029 = vadd.f32 %v1884, %v2001
        %v2030 = vadd.f32 %v1885, %v2006
        %v2031 = vadd.f32 %v1886, %v2009
        %v2032 = vadd.f32 %v1887, %v2014
        %v2033 = vadd.f32 %v1888, %v2017
        %v2034 = vadd.f32 %v1889, %v2022
        %v2035 = vadd.f32 %v1890, %v2025
        %v2036 = vld [vmem:[%s601 + $0x100] sm:$0xf]
        %v2037 = vld [vmem:[%s601 + $0x104] sm:$0xf]
        %v2038 = vld [vmem:[%s601 + $0x108] sm:$0xf]
        %v2039 = vld [vmem:[%s601 + $0x10c] sm:$0xf]
        %v2040 = vld [vmem:[%s601 + $0x110] sm:$0xf]
        %v2041 = vld [vmem:[%s601 + $0x114] sm:$0xf]
        %v2042 = vld [vmem:[%s601 + $0x118] sm:$0xf]
        %v2043 = vld [vmem:[%s601 + $0x11c] sm:$0xf]
        %v2044 = vld [vmem:[%s601 + $0x120] sm:$0xf]
        %v2045 = vld [vmem:[%s601 + $0x124] sm:$0xf]
        %v2046 = vld [vmem:[%s601 + $0x128] sm:$0xf]
        %v2047 = vld [vmem:[%s601 + $0x12c] sm:$0xf]
        %v2048 = vld [vmem:[%s601 + $0x130] sm:$0xf]
        %v2049 = vld [vmem:[%s601 + $0x134] sm:$0xf]
        %v2050 = vld [vmem:[%s601 + $0x138] sm:$0xf]
        %v2051 = vld [vmem:[%s601 + $0x13c] sm:$0xf]
        %v2068 = vunpack.c.l.b16 %v2036
        %v2069 = vunpack.c.l.b16 %v2037
        %v2070 = vunpack.c.l.b16 %v2038
        %v2071 = vunpack.c.l.b16 %v2039
        %v2072 = vunpack.c.l.b16 %v2040
        %v2073 = vunpack.c.l.b16 %v2041
        %v2074 = vunpack.c.l.b16 %v2042
        %v2075 = vunpack.c.l.b16 %v2043
        %v2076 = vunpack.c.l.b16 %v2044
        %v2077 = vunpack.c.l.b16 %v2045
        %v2078 = vunpack.c.l.b16 %v2046
        %v2079 = vunpack.c.l.b16 %v2047
        %v2080 = vunpack.c.l.b16 %v2048
        %v2081 = vunpack.c.l.b16 %v2049
        %v2082 = vunpack.c.l.b16 %v2050
        %v2083 = vunpack.c.l.b16 %v2051
        %v2084 = vpack.c.b16 %v2069, %v2068
        %v2085 = vpack.c.b16 %v2071, %v2070
        %v2086 = vpack.c.b16 %v2073, %v2072
        %v2087 = vpack.c.b16 %v2075, %v2074
        %v2088 = vpack.c.b16 %v2077, %v2076
        %v2089 = vpack.c.b16 %v2079, %v2078
        %v2090 = vpack.c.b16 %v2081, %v2080
        %v2091 = vpack.c.b16 %v2083, %v2082
        %2100 = vmatprep.subr.bf16.mxu0 0
        %2101 = vmatpush1.bf16.msra.mxu0 %v2084
        %2102 = vmatprep.subr.bf16.mxu0 0
        %2103 = vmatpush1.bf16.msra.mxu0 %v2085
        %2104 = vmatprep.subr.bf16.mxu0 0
        %2105 = vmatpush1.bf16.msra.mxu0 %v2086
        %2106 = vmatprep.subr.bf16.mxu0 0
        %2107 = vmatpush1.bf16.msra.mxu0 %v2087
        %2108 = vmatprep.subr.bf16.mxu0 0
        %2109 = vmatpush1.bf16.msra.mxu0 %v2088
        %2110 = vmatprep.subr.bf16.mxu0 0
        %2111 = vmatpush1.bf16.msra.mxu0 %v2089
        %2112 = vmatprep.subr.bf16.mxu0 0
        %2113 = vmatpush1.bf16.msra.mxu0 %v2090
        %2114 = vmatprep.subr.bf16.mxu0 0
        %2115 = vmatpush1.bf16.msra.mxu0 %v2091
        %2116 = vmatprep.subr.bf16.mxu0 0
        %2117 = vmatpush1.bf16.msra.mxu0 0
        %2118 = vmatprep.subr.bf16.mxu0 0
        %2119 = vmatpush1.bf16.msra.mxu0 0
        %2120 = vmatprep.subr.bf16.mxu0 0
        %2121 = vmatpush1.bf16.msra.mxu0 0
        %2122 = vmatprep.subr.bf16.mxu0 0
        %2123 = vmatpush1.bf16.msra.mxu0 0
        %2124 = vmatprep.subr.bf16.mxu0 0
        %2125 = vmatpush1.bf16.msra.mxu0 0
        %2126 = vmatprep.subr.bf16.mxu0 0
        %2127 = vmatpush1.bf16.msra.mxu0 0
        %2128 = vmatprep.subr.bf16.mxu0 0
        %2129 = vmatpush1.bf16.msra.mxu0 0
        %2130 = vmatprep.subr.bf16.mxu0 0
        %2131 = vmatpush1.bf16.msra.mxu0 0
        %2132 = vmatprep.mubr.bf16.mxu0 0
        %2133 = vmatmul.mubr.bf16.gmra.mrb[0].mxu0 %v1361
        %v2134 = vpop.f32.mrb[0].mxu0
        %v2135 = vadd.f32 0.0, %v2134
        %v2136 = vpop.f32.mrb[0].mxu0
        %v2137 = vpop.f32.mrb[0].mxu0
        %v2138 = vadd.f32 0.0, %v2137
        %v2139 = vpop.f32.mrb[0].mxu0
        %2140 = vmatprep.mubr.bf16.mxu0 0
        %2141 = vmatmul.mubr.bf16.gmra.mrb[0].mxu0 %v1362
        %v2142 = vpop.f32.mrb[0].mxu0
        %v2143 = vadd.f32 0.0, %v2142
        %v2144 = vpop.f32.mrb[0].mxu0
        %v2145 = vpop.f32.mrb[0].mxu0
        %v2146 = vadd.f32 0.0, %v2145
        %v2147 = vpop.f32.mrb[0].mxu0
        %2148 = vmatprep.mubr.bf16.mxu0 0
        %2149 = vmatmul.mubr.bf16.gmra.mrb[0].mxu0 %v1363
        %v2150 = vpop.f32.mrb[0].mxu0
        %v2151 = vadd.f32 0.0, %v2150
        %v2152 = vpop.f32.mrb[0].mxu0
        %v2153 = vpop.f32.mrb[0].mxu0
        %v2154 = vadd.f32 0.0, %v2153
        %v2155 = vpop.f32.mrb[0].mxu0
        %2156 = vmatprep.mubr.bf16.mxu0 0
        %2157 = vmatmul.mubr.bf16.gmra.mrb[0].mxu0 %v1364
        %v2158 = vpop.f32.mrb[0].mxu0
        %v2159 = vadd.f32 0.0, %v2158
        %v2160 = vpop.f32.mrb[0].mxu0
        %v2161 = vpop.f32.mrb[0].mxu0
        %v2162 = vadd.f32 0.0, %v2161
        %v2163 = vpop.f32.mrb[0].mxu0
        %2164 = vdwg.mxu0
        %v2165 = vadd.f32 %v2028, %v2135
        %v2166 = vadd.f32 %v2029, %v2138
        %v2167 = vadd.f32 %v2030, %v2143
        %v2168 = vadd.f32 %v2031, %v2146
        %v2169 = vadd.f32 %v2032, %v2151
        %v2170 = vadd.f32 %v2033, %v2154
        %v2171 = vadd.f32 %v2034, %v2159
        %v2172 = vadd.f32 %v2035, %v2162
        %v2173 = vld [vmem:[%s601 + $0x1c0] sm:$0xf]
        %v2174 = vld [vmem:[%s601 + $0x1c4] sm:$0xf]
        %v2175 = vld [vmem:[%s601 + $0x1c8] sm:$0xf]
        %v2176 = vld [vmem:[%s601 + $0x1cc] sm:$0xf]
        %v2177 = vld [vmem:[%s601 + $0x1d0] sm:$0xf]
        %v2178 = vld [vmem:[%s601 + $0x1d4] sm:$0xf]
        %v2179 = vld [vmem:[%s601 + $0x1d8] sm:$0xf]
        %v2180 = vld [vmem:[%s601 + $0x1dc] sm:$0xf]
        %v2181 = vld [vmem:[%s601 + $0x1e0] sm:$0xf]
        %v2182 = vld [vmem:[%s601 + $0x1e4] sm:$0xf]
        %v2183 = vld [vmem:[%s601 + $0x1e8] sm:$0xf]
        %v2184 = vld [vmem:[%s601 + $0x1ec] sm:$0xf]
        %v2185 = vld [vmem:[%s601 + $0x1f0] sm:$0xf]
        %v2186 = vld [vmem:[%s601 + $0x1f4] sm:$0xf]
        %v2187 = vld [vmem:[%s601 + $0x1f8] sm:$0xf]
        %v2188 = vld [vmem:[%s601 + $0x1fc] sm:$0xf]
        %v2189 = vpack.c.b16 %v1630, %v1376
        %v2207 = vunpack.c.l.b16 %v2173
        %v2208 = vunpack.c.l.b16 %v2174
        %v2209 = vunpack.c.l.b16 %v2175
        %v2210 = vunpack.c.l.b16 %v2176
        %v2211 = vunpack.c.l.b16 %v2177
        %v2212 = vunpack.c.l.b16 %v2178
        %v2213 = vunpack.c.l.b16 %v2179
        %v2214 = vunpack.c.l.b16 %v2180
        %v2215 = vunpack.c.l.b16 %v2181
        %v2216 = vunpack.c.l.b16 %v2182
        %v2217 = vunpack.c.l.b16 %v2183
        %v2218 = vunpack.c.l.b16 %v2184
        %v2219 = vunpack.c.l.b16 %v2185
        %v2220 = vunpack.c.l.b16 %v2186
        %v2221 = vunpack.c.l.b16 %v2187
        %v2222 = vunpack.c.l.b16 %v2188
        %v2223 = vpack.c.b16 %v2208, %v2207
        %v2224 = vpack.c.b16 %v2210, %v2209
        %v2225 = vpack.c.b16 %v2212, %v2211
        %v2226 = vpack.c.b16 %v2214, %v2213
        %v2227 = vpack.c.b16 %v2216, %v2215
        %v2228 = vpack.c.b16 %v2218, %v2217
        %v2229 = vpack.c.b16 %v2220, %v2219
        %v2230 = vpack.c.b16 %v2222, %v2221
        %2239 = vmatprep.subr.bf16.mxu0 0
        %2240 = vmatpush1.bf16.msra.mxu0 %v2223
        %2241 = vmatprep.subr.bf16.mxu0 0
        %2242 = vmatpush1.bf16.msra.mxu0 %v2224
        %2243 = vmatprep.subr.bf16.mxu0 0
        %2244 = vmatpush1.bf16.msra.mxu0 %v2225
        %2245 = vmatprep.subr.bf16.mxu0 0
        %2246 = vmatpush1.bf16.msra.mxu0 %v2226
        %2247 = vmatprep.subr.bf16.mxu0 0
        %2248 = vmatpush1.bf16.msra.mxu0 %v2227
        %2249 = vmatprep.subr.bf16.mxu0 0
        %2250 = vmatpush1.bf16.msra.mxu0 %v2228
        %2251 = vmatprep.subr.bf16.mxu0 0
        %2252 = vmatpush1.bf16.msra.mxu0 %v2229
        %2253 = vmatprep.subr.bf16.mxu0 0
        %2254 = vmatpush1.bf16.msra.mxu0 %v2230
        %2255 = vmatprep.subr.bf16.mxu0 0
        %2256 = vmatpush1.bf16.msra.mxu0 0
        %2257 = vmatprep.subr.bf16.mxu0 0
        %2258 = vmatpush1.bf16.msra.mxu0 0
        %2259 = vmatprep.subr.bf16.mxu0 0
        %2260 = vmatpush1.bf16.msra.mxu0 0
        %2261 = vmatprep.subr.bf16.mxu0 0
        %2262 = vmatpush1.bf16.msra.mxu0 0
        %2263 = vmatprep.subr.bf16.mxu0 0
        %2264 = vmatpush1.bf16.msra.mxu0 0
        %2265 = vmatprep.subr.bf16.mxu0 0
        %2266 = vmatpush1.bf16.msra.mxu0 0
        %2267 = vmatprep.subr.bf16.mxu0 0
        %2268 = vmatpush1.bf16.msra.mxu0 0
        %2269 = vmatprep.subr.bf16.mxu0 0
        %2270 = vmatpush1.bf16.msra.mxu0 0
        %2271 = vmatprep.mubr.bf16.mxu0 0
        %2272 = vmatmul.mubr.bf16.gmra.mrb[0].mxu0 %v1908
        %v2273 = vpop.f32.mrb[0].mxu0
        %v2274 = vadd.f32 0.0, %v2273
        %v2275 = vpop.f32.mrb[0].mxu0
        %v2276 = vpop.f32.mrb[0].mxu0
        %v2277 = vadd.f32 0.0, %v2276
        %v2278 = vpop.f32.mrb[0].mxu0
        %2279 = vmatprep.mubr.bf16.mxu0 0
        %2280 = vmatmul.mubr.bf16.gmra.mrb[0].mxu0 %v1909
        %v2281 = vpop.f32.mrb[0].mxu0
        %v2282 = vadd.f32 0.0, %v2281
        %v2283 = vpop.f32.mrb[0].mxu0
        %v2284 = vpop.f32.mrb[0].mxu0
        %v2285 = vadd.f32 0.0, %v2284
        %v2286 = vpop.f32.mrb[0].mxu0
        %2287 = vmatprep.mubr.bf16.mxu0 0
        %2288 = vmatmul.mubr.bf16.gmra.mrb[0].mxu0 %v1910
        %v2289 = vpop.f32.mrb[0].mxu0
        %v2290 = vadd.f32 0.0, %v2289
        %v2291 = vpop.f32.mrb[0].mxu0
        %v2292 = vpop.f32.mrb[0].mxu0
        %v2293 = vadd.f32 0.0, %v2292
        %v2294 = vpop.f32.mrb[0].mxu0
        %2295 = vmatprep.mubr.bf16.mxu0 0
        %2296 = vmatmul.mubr.bf16.gmra.mrb[0].mxu0 %v2189
        %v2297 = vpop.f32.mrb[0].mxu0
        %v2298 = vadd.f32 0.0, %v2297
        %v2299 = vpop.f32.mrb[0].mxu0
        %v2300 = vpop.f32.mrb[0].mxu0
        %v2301 = vadd.f32 0.0, %v2300
        %v2302 = vpop.f32.mrb[0].mxu0
        %2303 = vdwg.mxu0
        %v2304 = vadd.f32 %v2165, %v2274
        %v2305 = vadd.f32 %v2166, %v2277
        %v2306 = vadd.f32 %v2167, %v2282
        %v2307 = vadd.f32 %v2168, %v2285
        %v2308 = vadd.f32 %v2169, %v2290
        %v2309 = vadd.f32 %v2170, %v2293
        %v2310 = vadd.f32 %v2171, %v2298
        %v2311 = vadd.f32 %v2172, %v2301
        %v2312 = vrot.slane %v1389, 1
        %v2313 = vor.u32 %v1386, %v2312
        %v2314 = vrot.slane %v1396, 1
        %v2315 = vor.u32 %v1393, %v2314
        %v2316 = vrot.slane %v1403, 1
        %v2317 = vor.u32 %v1400, %v2316
        %v2318 = vrot.slane %v1410, 1
        %v2319 = vor.u32 %v1407, %v2318
        %v2320 = vrot.slane %v1417, 1
        %v2321 = vor.u32 %v1414, %v2320
        %v2322 = vrot.slane %v1424, 1
        %v2323 = vor.u32 %v1421, %v2322
        %v2324 = vrot.slane %v1431, 1
        %v2325 = vor.u32 %v1428, %v2324
        %v2326 = vrot.slane %v1438, 1
        %v2327 = vor.u32 %v1435, %v2326
        %vm2336 = vcmask 1043456
        %vm2337 = vsmask.f32 3328
        %vm2338 = vmand %vm2336, %vm2337
        %v2339 = vsel %vm2338, %v2313, 0
        %v2340 = vsel %vm2338, %v2315, 0
        %v2341 = vsel %vm2338, %v2317, 0
        %v2342 = vsel %vm2338, %v2319, 0
        %v2343 = vsel %vm2338, %v2321, 0
        %v2344 = vsel %vm2338, %v2323, 0
        %v2345 = vsel %vm2338, %v2325, 0
        %v2346 = vsel %vm2338, %v2327, 0
        %v2347 = vld [vmem:[%s601 + $0x80] sm:$0xf]
        %v2348 = vld [vmem:[%s601 + $0x84] sm:$0xf]
        %v2349 = vld [vmem:[%s601 + $0x88] sm:$0xf]
        %v2350 = vld [vmem:[%s601 + $0x8c] sm:$0xf]
        %v2351 = vld [vmem:[%s601 + $0x90] sm:$0xf]
        %v2352 = vld [vmem:[%s601 + $0x94] sm:$0xf]
        %v2353 = vld [vmem:[%s601 + $0x98] sm:$0xf]
        %v2354 = vld [vmem:[%s601 + $0x9c] sm:$0xf]
        %v2355 = vld [vmem:[%s601 + $0xa0] sm:$0xf]
        %v2356 = vld [vmem:[%s601 + $0xa4] sm:$0xf]
        %v2357 = vld [vmem:[%s601 + $0xa8] sm:$0xf]
        %v2358 = vld [vmem:[%s601 + $0xac] sm:$0xf]
        %v2359 = vld [vmem:[%s601 + $0xb0] sm:$0xf]
        %v2360 = vld [vmem:[%s601 + $0xb4] sm:$0xf]
        %v2361 = vld [vmem:[%s601 + $0xb8] sm:$0xf]
        %v2362 = vld [vmem:[%s601 + $0xbc] sm:$0xf]
        %v2370 = vunpack.c.l.b16 %v2339
        %v2371 = vunpack.c.l.b16 %v2340
        %v2372 = vunpack.c.l.b16 %v2341
        %v2373 = vunpack.c.l.b16 %v2342
        %v2374 = vunpack.c.l.b16 %v2343
        %v2375 = vunpack.c.l.b16 %v2344
        %v2376 = vunpack.c.l.b16 %v2345
        %v2377 = vpack.c.b16 %v2370, %v1630
        %v2378 = vpack.c.b16 %v2372, %v2371
        %v2379 = vpack.c.b16 %v2374, %v2373
        %v2380 = vpack.c.b16 %v2376, %v2375
        %v2401 = vunpack.c.l.b16 %v2347
        %v2402 = vunpack.c.l.b16 %v2348
        %v2403 = vunpack.c.l.b16 %v2349
        %v2404 = vunpack.c.l.b16 %v2350
        %v2405 = vunpack.c.l.b16 %v2351
        %v2406 = vunpack.c.l.b16 %v2352
        %v2407 = vunpack.c.l.b16 %v2353
        %v2408 = vunpack.c.l.b16 %v2354
        %v2409 = vunpack.c.l.b16 %v2355
        %v2410 = vunpack.c.l.b16 %v2356
        %v2411 = vunpack.c.l.b16 %v2357
        %v2412 = vunpack.c.l.b16 %v2358
        %v2413 = vunpack.c.l.b16 %v2359
        %v2414 = vunpack.c.l.b16 %v2360
        %v2415 = vunpack.c.l.b16 %v2361
        %v2416 = vunpack.c.l.b16 %v2362
        %v2417 = vpack.c.b16 %v2402, %v2401
        %v2418 = vpack.c.b16 %v2404, %v2403
        %v2419 = vpack.c.b16 %v2406, %v2405
        %v2420 = vpack.c.b16 %v2408, %v2407
        %v2421 = vpack.c.b16 %v2410, %v2409
        %v2422 = vpack.c.b16 %v2412, %v2411
        %v2423 = vpack.c.b16 %v2414, %v2413
        %v2424 = vpack.c.b16 %v2416, %v2415
        %2433 = vmatprep.subr.bf16.mxu0 0
        %2434 = vmatpush1.bf16.msra.mxu0 %v2417
        %2435 = vmatprep.subr.bf16.mxu0 0
        %2436 = vmatpush1.bf16.msra.mxu0 %v2418
        %2437 = vmatprep.subr.bf16.mxu0 0
        %2438 = vmatpush1.bf16.msra.mxu0 %v2419
        %2439 = vmatprep.subr.bf16.mxu0 0
        %2440 = vmatpush1.bf16.msra.mxu0 %v2420
        %2441 = vmatprep.subr.bf16.mxu0 0
        %2442 = vmatpush1.bf16.msra.mxu0 %v2421
        %2443 = vmatprep.subr.bf16.mxu0 0
        %2444 = vmatpush1.bf16.msra.mxu0 %v2422
        %2445 = vmatprep.subr.bf16.mxu0 0
        %2446 = vmatpush1.bf16.msra.mxu0 %v2423
        %2447 = vmatprep.subr.bf16.mxu0 0
        %2448 = vmatpush1.bf16.msra.mxu0 %v2424
        %2449 = vmatprep.subr.bf16.mxu0 0
        %2450 = vmatpush1.bf16.msra.mxu0 0
        %2451 = vmatprep.subr.bf16.mxu0 0
        %2452 = vmatpush1.bf16.msra.mxu0 0
        %2453 = vmatprep.subr.bf16.mxu0 0
        %2454 = vmatpush1.bf16.msra.mxu0 0
        %2455 = vmatprep.subr.bf16.mxu0 0
        %2456 = vmatpush1.bf16.msra.mxu0 0
        %2457 = vmatprep.subr.bf16.mxu0 0
        %2458 = vmatpush1.bf16.msra.mxu0 0
        %2459 = vmatprep.subr.bf16.mxu0 0
        %2460 = vmatpush1.bf16.msra.mxu0 0
        %2461 = vmatprep.subr.bf16.mxu0 0
        %2462 = vmatpush1.bf16.msra.mxu0 0
        %2463 = vmatprep.subr.bf16.mxu0 0
        %2464 = vmatpush1.bf16.msra.mxu0 0
        %2465 = vmatprep.mubr.bf16.mxu0 0
        %2466 = vmatmul.mubr.bf16.gmra.mrb[0].mxu0 %v2377
        %v2467 = vpop.f32.mrb[0].mxu0
        %v2468 = vadd.f32 0.0, %v2467
        %v2469 = vpop.f32.mrb[0].mxu0
        %v2470 = vpop.f32.mrb[0].mxu0
        %v2471 = vadd.f32 0.0, %v2470
        %v2472 = vpop.f32.mrb[0].mxu0
        %2473 = vmatprep.mubr.bf16.mxu0 0
        %2474 = vmatmul.mubr.bf16.gmra.mrb[0].mxu0 %v2378
        %v2475 = vpop.f32.mrb[0].mxu0
        %v2476 = vadd.f32 0.0, %v2475
        %v2477 = vpop.f32.mrb[0].mxu0
        %v2478 = vpop.f32.mrb[0].mxu0
        %v2479 = vadd.f32 0.0, %v2478
        %v2480 = vpop.f32.mrb[0].mxu0
        %2481 = vmatprep.mubr.bf16.mxu0 0
        %2482 = vmatmul.mubr.bf16.gmra.mrb[0].mxu0 %v2379
        %v2483 = vpop.f32.mrb[0].mxu0
        %v2484 = vadd.f32 0.0, %v2483
        %v2485 = vpop.f32.mrb[0].mxu0
        %v2486 = vpop.f32.mrb[0].mxu0
        %v2487 = vadd.f32 0.0, %v2486
        %v2488 = vpop.f32.mrb[0].mxu0
        %2489 = vmatprep.mubr.bf16.mxu0 0
        %2490 = vmatmul.mubr.bf16.gmra.mrb[0].mxu0 %v2380
        %v2491 = vpop.f32.mrb[0].mxu0
        %v2492 = vadd.f32 0.0, %v2491
        %v2493 = vpop.f32.mrb[0].mxu0
        %v2494 = vpop.f32.mrb[0].mxu0
        %v2495 = vadd.f32 0.0, %v2494
        %v2496 = vpop.f32.mrb[0].mxu0
        %2497 = vdwg.mxu0
        %v2498 = vadd.f32 %v2304, %v2468
        %v2499 = vadd.f32 %v2305, %v2471
        %v2500 = vadd.f32 %v2306, %v2476
        %v2501 = vadd.f32 %v2307, %v2479
        %v2502 = vadd.f32 %v2308, %v2484
        %v2503 = vadd.f32 %v2309, %v2487
        %v2504 = vadd.f32 %v2310, %v2492
        %v2505 = vadd.f32 %v2311, %v2495
        %v2506 = vld [vmem:[%s601 + $0x140] sm:$0xf]
        %v2507 = vld [vmem:[%s601 + $0x144] sm:$0xf]
        %v2508 = vld [vmem:[%s601 + $0x148] sm:$0xf]
        %v2509 = vld [vmem:[%s601 + $0x14c] sm:$0xf]
        %v2510 = vld [vmem:[%s601 + $0x150] sm:$0xf]
        %v2511 = vld [vmem:[%s601 + $0x154] sm:$0xf]
        %v2512 = vld [vmem:[%s601 + $0x158] sm:$0xf]
        %v2513 = vld [vmem:[%s601 + $0x15c] sm:$0xf]
        %v2514 = vld [vmem:[%s601 + $0x160] sm:$0xf]
        %v2515 = vld [vmem:[%s601 + $0x164] sm:$0xf]
        %v2516 = vld [vmem:[%s601 + $0x168] sm:$0xf]
        %v2517 = vld [vmem:[%s601 + $0x16c] sm:$0xf]
        %v2518 = vld [vmem:[%s601 + $0x170] sm:$0xf]
        %v2519 = vld [vmem:[%s601 + $0x174] sm:$0xf]
        %v2520 = vld [vmem:[%s601 + $0x178] sm:$0xf]
        %v2521 = vld [vmem:[%s601 + $0x17c] sm:$0xf]
        %v2523 = vunpack.c.l.b16 %v2346
        %v2524 = vpack.c.b16 %v2371, %v2370
        %v2525 = vpack.c.b16 %v2373, %v2372
        %v2526 = vpack.c.b16 %v2375, %v2374
        %v2527 = vpack.c.b16 %v2523, %v2376
        %v2548 = vunpack.c.l.b16 %v2506
        %v2549 = vunpack.c.l.b16 %v2507
        %v2550 = vunpack.c.l.b16 %v2508
        %v2551 = vunpack.c.l.b16 %v2509
        %v2552 = vunpack.c.l.b16 %v2510
        %v2553 = vunpack.c.l.b16 %v2511
        %v2554 = vunpack.c.l.b16 %v2512
        %v2555 = vunpack.c.l.b16 %v2513
        %v2556 = vunpack.c.l.b16 %v2514
        %v2557 = vunpack.c.l.b16 %v2515
        %v2558 = vunpack.c.l.b16 %v2516
        %v2559 = vunpack.c.l.b16 %v2517
        %v2560 = vunpack.c.l.b16 %v2518
        %v2561 = vunpack.c.l.b16 %v2519
        %v2562 = vunpack.c.l.b16 %v2520
        %v2563 = vunpack.c.l.b16 %v2521
        %v2564 = vpack.c.b16 %v2549, %v2548
        %v2565 = vpack.c.b16 %v2551, %v2550
        %v2566 = vpack.c.b16 %v2553, %v2552
        %v2567 = vpack.c.b16 %v2555, %v2554
        %v2568 = vpack.c.b16 %v2557, %v2556
        %v2569 = vpack.c.b16 %v2559, %v2558
        %v2570 = vpack.c.b16 %v2561, %v2560
        %v2571 = vpack.c.b16 %v2563, %v2562
        %2580 = vmatprep.subr.bf16.mxu0 0
        %2581 = vmatpush1.bf16.msra.mxu0 %v2564
        %2582 = vmatprep.subr.bf16.mxu0 0
        %2583 = vmatpush1.bf16.msra.mxu0 %v2565
        %2584 = vmatprep.subr.bf16.mxu0 0
        %2585 = vmatpush1.bf16.msra.mxu0 %v2566
        %2586 = vmatprep.subr.bf16.mxu0 0
        %2587 = vmatpush1.bf16.msra.mxu0 %v2567
        %2588 = vmatprep.subr.bf16.mxu0 0
        %2589 = vmatpush1.bf16.msra.mxu0 %v2568
        %2590 = vmatprep.subr.bf16.mxu0 0
        %2591 = vmatpush1.bf16.msra.mxu0 %v2569
        %2592 = vmatprep.subr.bf16.mxu0 0
        %2593 = vmatpush1.bf16.msra.mxu0 %v2570
        %2594 = vmatprep.subr.bf16.mxu0 0
        %2595 = vmatpush1.bf16.msra.mxu0 %v2571
        %2596 = vmatprep.subr.bf16.mxu0 0
        %2597 = vmatpush1.bf16.msra.mxu0 0
        %2598 = vmatprep.subr.bf16.mxu0 0
        %2599 = vmatpush1.bf16.msra.mxu0 0
        %2600 = vmatprep.subr.bf16.mxu0 0
        %2601 = vmatpush1.bf16.msra.mxu0 0
        %2602 = vmatprep.subr.bf16.mxu0 0
        %2603 = vmatpush1.bf16.msra.mxu0 0
        %2604 = vmatprep.subr.bf16.mxu0 0
        %2605 = vmatpush1.bf16.msra.mxu0 0
        %2606 = vmatprep.subr.bf16.mxu0 0
        %2607 = vmatpush1.bf16.msra.mxu0 0
        %2608 = vmatprep.subr.bf16.mxu0 0
        %2609 = vmatpush1.bf16.msra.mxu0 0
        %2610 = vmatprep.subr.bf16.mxu0 0
        %2611 = vmatpush1.bf16.msra.mxu0 0
        %2612 = vmatprep.mubr.bf16.mxu0 0
        %2613 = vmatmul.mubr.bf16.gmra.mrb[0].mxu0 %v2524
        %v2614 = vpop.f32.mrb[0].mxu0
        %v2615 = vadd.f32 0.0, %v2614
        %v2616 = vpop.f32.mrb[0].mxu0
        %v2617 = vpop.f32.mrb[0].mxu0
        %v2618 = vadd.f32 0.0, %v2617
        %v2619 = vpop.f32.mrb[0].mxu0
        %2620 = vmatprep.mubr.bf16.mxu0 0
        %2621 = vmatmul.mubr.bf16.gmra.mrb[0].mxu0 %v2525
        %v2622 = vpop.f32.mrb[0].mxu0
        %v2623 = vadd.f32 0.0, %v2622
        %v2624 = vpop.f32.mrb[0].mxu0
        %v2625 = vpop.f32.mrb[0].mxu0
        %v2626 = vadd.f32 0.0, %v2625
        %v2627 = vpop.f32.mrb[0].mxu0
        %2628 = vmatprep.mubr.bf16.mxu0 0
        %2629 = vmatmul.mubr.bf16.gmra.mrb[0].mxu0 %v2526
        %v2630 = vpop.f32.mrb[0].mxu0
        %v2631 = vadd.f32 0.0, %v2630
        %v2632 = vpop.f32.mrb[0].mxu0
        %v2633 = vpop.f32.mrb[0].mxu0
        %v2634 = vadd.f32 0.0, %v2633
        %v2635 = vpop.f32.mrb[0].mxu0
        %2636 = vmatprep.mubr.bf16.mxu0 0
        %2637 = vmatmul.mubr.bf16.gmra.mrb[0].mxu0 %v2527
        %v2638 = vpop.f32.mrb[0].mxu0
        %v2639 = vadd.f32 0.0, %v2638
        %v2640 = vpop.f32.mrb[0].mxu0
        %v2641 = vpop.f32.mrb[0].mxu0
        %v2642 = vadd.f32 0.0, %v2641
        %v2643 = vpop.f32.mrb[0].mxu0
        %2644 = vdwg.mxu0
        %v2645 = vadd.f32 %v2498, %v2615
        %v2646 = vadd.f32 %v2499, %v2618
        %v2647 = vadd.f32 %v2500, %v2623
        %v2648 = vadd.f32 %v2501, %v2626
        %v2649 = vadd.f32 %v2502, %v2631
        %v2650 = vadd.f32 %v2503, %v2634
        %v2651 = vadd.f32 %v2504, %v2639
        %v2652 = vadd.f32 %v2505, %v2642
        %v2653 = vld [vmem:[%s601 + $0x200] sm:$0xf]
        %v2654 = vld [vmem:[%s601 + $0x204] sm:$0xf]
        %v2655 = vld [vmem:[%s601 + $0x208] sm:$0xf]
        %v2656 = vld [vmem:[%s601 + $0x20c] sm:$0xf]
        %v2657 = vld [vmem:[%s601 + $0x210] sm:$0xf]
        %v2658 = vld [vmem:[%s601 + $0x214] sm:$0xf]
        %v2659 = vld [vmem:[%s601 + $0x218] sm:$0xf]
        %v2660 = vld [vmem:[%s601 + $0x21c] sm:$0xf]
        %v2661 = vld [vmem:[%s601 + $0x220] sm:$0xf]
        %v2662 = vld [vmem:[%s601 + $0x224] sm:$0xf]
        %v2663 = vld [vmem:[%s601 + $0x228] sm:$0xf]
        %v2664 = vld [vmem:[%s601 + $0x22c] sm:$0xf]
        %v2665 = vld [vmem:[%s601 + $0x230] sm:$0xf]
        %v2666 = vld [vmem:[%s601 + $0x234] sm:$0xf]
        %v2667 = vld [vmem:[%s601 + $0x238] sm:$0xf]
        %v2668 = vld [vmem:[%s601 + $0x23c] sm:$0xf]
        %v2669 = vpack.c.b16 %v1630, %v2523
        %v2687 = vunpack.c.l.b16 %v2653
        %v2688 = vunpack.c.l.b16 %v2654
        %v2689 = vunpack.c.l.b16 %v2655
        %v2690 = vunpack.c.l.b16 %v2656
        %v2691 = vunpack.c.l.b16 %v2657
        %v2692 = vunpack.c.l.b16 %v2658
        %v2693 = vunpack.c.l.b16 %v2659
        %v2694 = vunpack.c.l.b16 %v2660
        %v2695 = vunpack.c.l.b16 %v2661
        %v2696 = vunpack.c.l.b16 %v2662
        %v2697 = vunpack.c.l.b16 %v2663
        %v2698 = vunpack.c.l.b16 %v2664
        %v2699 = vunpack.c.l.b16 %v2665
        %v2700 = vunpack.c.l.b16 %v2666
        %v2701 = vunpack.c.l.b16 %v2667
        %v2702 = vunpack.c.l.b16 %v2668
        %v2703 = vpack.c.b16 %v2688, %v2687
        %v2704 = vpack.c.b16 %v2690, %v2689
        %v2705 = vpack.c.b16 %v2692, %v2691
        %v2706 = vpack.c.b16 %v2694, %v2693
        %v2707 = vpack.c.b16 %v2696, %v2695
        %v2708 = vpack.c.b16 %v2698, %v2697
        %v2709 = vpack.c.b16 %v2700, %v2699
        %v2710 = vpack.c.b16 %v2702, %v2701
        %2719 = vmatprep.subr.bf16.mxu0 0
        %2720 = vmatpush1.bf16.msra.mxu0 %v2703
        %2721 = vmatprep.subr.bf16.mxu0 0
        %2722 = vmatpush1.bf16.msra.mxu0 %v2704
        %2723 = vmatprep.subr.bf16.mxu0 0
        %2724 = vmatpush1.bf16.msra.mxu0 %v2705
        %2725 = vmatprep.subr.bf16.mxu0 0
        %2726 = vmatpush1.bf16.msra.mxu0 %v2706
        %2727 = vmatprep.subr.bf16.mxu0 0
        %2728 = vmatpush1.bf16.msra.mxu0 %v2707
        %2729 = vmatprep.subr.bf16.mxu0 0
        %2730 = vmatpush1.bf16.msra.mxu0 %v2708
        %2731 = vmatprep.subr.bf16.mxu0 0
        %2732 = vmatpush1.bf16.msra.mxu0 %v2709
        %2733 = vmatprep.subr.bf16.mxu0 0
        %2734 = vmatpush1.bf16.msra.mxu0 %v2710
        %2735 = vmatprep.subr.bf16.mxu0 0
        %2736 = vmatpush1.bf16.msra.mxu0 0
        %2737 = vmatprep.subr.bf16.mxu0 0
        %2738 = vmatpush1.bf16.msra.mxu0 0
        %2739 = vmatprep.subr.bf16.mxu0 0
        %2740 = vmatpush1.bf16.msra.mxu0 0
        %2741 = vmatprep.subr.bf16.mxu0 0
        %2742 = vmatpush1.bf16.msra.mxu0 0
        %2743 = vmatprep.subr.bf16.mxu0 0
        %2744 = vmatpush1.bf16.msra.mxu0 0
        %2745 = vmatprep.subr.bf16.mxu0 0
        %2746 = vmatpush1.bf16.msra.mxu0 0
        %2747 = vmatprep.subr.bf16.mxu0 0
        %2748 = vmatpush1.bf16.msra.mxu0 0
        %2749 = vmatprep.subr.bf16.mxu0 0
        %2750 = vmatpush1.bf16.msra.mxu0 0
        %2751 = vmatprep.mubr.bf16.mxu0 0
        %2752 = vmatmul.mubr.bf16.gmra.mrb[0].mxu0 %v2378
        %v2753 = vpop.f32.mrb[0].mxu0
        %v2754 = vadd.f32 0.0, %v2753
        %v2755 = vpop.f32.mrb[0].mxu0
        %v2756 = vpop.f32.mrb[0].mxu0
        %v2757 = vadd.f32 0.0, %v2756
        %v2758 = vpop.f32.mrb[0].mxu0
        %2759 = vmatprep.mubr.bf16.mxu0 0
        %2760 = vmatmul.mubr.bf16.gmra.mrb[0].mxu0 %v2379
        %v2761 = vpop.f32.mrb[0].mxu0
        %v2762 = vadd.f32 0.0, %v2761
        %v2763 = vpop.f32.mrb[0].mxu0
        %v2764 = vpop.f32.mrb[0].mxu0
        %v2765 = vadd.f32 0.0, %v2764
        %v2766 = vpop.f32.mrb[0].mxu0
        %2767 = vmatprep.mubr.bf16.mxu0 0
        %2768 = vmatmul.mubr.bf16.gmra.mrb[0].mxu0 %v2380
        %v2769 = vpop.f32.mrb[0].mxu0
        %v2770 = vadd.f32 0.0, %v2769
        %v2771 = vpop.f32.mrb[0].mxu0
        %v2772 = vpop.f32.mrb[0].mxu0
        %v2773 = vadd.f32 0.0, %v2772
        %v2774 = vpop.f32.mrb[0].mxu0
        %2775 = vmatprep.mubr.bf16.mxu0 0
        %2776 = vmatmul.mubr.bf16.gmra.mrb[0].mxu0 %v2669
        %v2777 = vpop.f32.mrb[0].mxu0
        %v2778 = vadd.f32 0.0, %v2777
        %v2779 = vpop.f32.mrb[0].mxu0
        %v2780 = vpop.f32.mrb[0].mxu0
        %v2781 = vadd.f32 0.0, %v2780
        %v2782 = vpop.f32.mrb[0].mxu0
        %2783 = vdwg.mxu0
        %v2784 = vadd.f32 %v2645, %v2754
        %v2785 = vadd.f32 %v2646, %v2757
        %v2786 = vadd.f32 %v2647, %v2762
        %v2787 = vadd.f32 %v2648, %v2765
        %v2788 = vadd.f32 %v2649, %v2770
        %v2789 = vadd.f32 %v2650, %v2773
        %v2790 = vadd.f32 %v2651, %v2778
        %v2791 = vadd.f32 %v2652, %v2781
        %v2792 = vld [vmem:[%s609] sm:$0x1]
        %v2794 = vlaneseq
        %v2795 = vshrl.u32 %v2794, 7
        %v2796 = vsub.s32 0, %v2795
        %v2797 = vrot.slane %v2792, %v2796
        %v2799 = vmul.f32 %v2784, %v2797
        %v2800 = vmul.f32 %v2785, %v2797
        %v2801 = vmul.f32 %v2786, %v2797
        %v2802 = vmul.f32 %v2787, %v2797
        %v2803 = vmul.f32 %v2788, %v2797
        %v2804 = vmul.f32 %v2789, %v2797
        %v2805 = vmul.f32 %v2790, %v2797
        %v2806 = vmul.f32 %v2791, %v2797
        %v2807 = vld [vmem:[%s617] sm:$0x1]
        %v2809 = vlaneseq
        %v2810 = vshrl.u32 %v2809, 7
        %v2811 = vsub.s32 0, %v2810
        %v2812 = vrot.slane %v2807, %v2811
        %v2814 = vadd.f32 %v2799, %v2812
        %v2815 = vadd.f32 %v2800, %v2812
        %v2816 = vadd.f32 %v2801, %v2812
        %v2817 = vadd.f32 %v2802, %v2812
        %v2818 = vadd.f32 %v2803, %v2812
        %v2819 = vadd.f32 %v2804, %v2812
        %v2820 = vadd.f32 %v2805, %v2812
        %v2821 = vadd.f32 %v2806, %v2812
        %v2822 = vmax.f32 %v2814, 0.0
        %v2823 = vmax.f32 %v2815, 0.0
        %v2824 = vmax.f32 %v2816, 0.0
        %v2825 = vmax.f32 %v2817, 0.0
        %v2826 = vmax.f32 %v2818, 0.0
        %v2827 = vmax.f32 %v2819, 0.0
        %v2828 = vmax.f32 %v2820, 0.0
        %v2829 = vmax.f32 %v2821, 0.0
        %v2830 = vpack.c.bf16 %v2823, %v2822
        %v2831 = vpack.c.bf16 %v2825, %v2824
        %v2832 = vpack.c.bf16 %v2827, %v2826
        %v2833 = vpack.c.bf16 %v2829, %v2828
        %v2834 = vld [vmem:[%s626] sm:$0xff]
        %v2835 = vld [vmem:[%s626 + $0x8] sm:$0xff]
        %v2836 = vld [vmem:[%s626 + $0x10] sm:$0xff]
        %v2837 = vld [vmem:[%s626 + $0x18] sm:$0xff]
        %v2838 = vld [vmem:[%s626 + $0x20] sm:$0xff]
        %v2839 = vld [vmem:[%s626 + $0x28] sm:$0xff]
        %v2840 = vld [vmem:[%s626 + $0x30] sm:$0xff]
        %v2841 = vld [vmem:[%s626 + $0x38] sm:$0xff]
        %v2842 = vld [vmem:[%s626 + $0x40] sm:$0xff]
        %v2843 = vld [vmem:[%s626 + $0x48] sm:$0xff]
        %v2844 = vld [vmem:[%s626 + $0x50] sm:$0xff]
        %v2845 = vld [vmem:[%s626 + $0x58] sm:$0xff]
        %v2846 = vld [vmem:[%s626 + $0x60] sm:$0xff]
        %v2847 = vld [vmem:[%s626 + $0x68] sm:$0xff]
        %v2848 = vld [vmem:[%s626 + $0x70] sm:$0xff]
        %v2849 = vld [vmem:[%s626 + $0x78] sm:$0xff]
        %v2850 = vld [vmem:[%s626 + $0x80] sm:$0xff]
        %v2851 = vld [vmem:[%s626 + $0x88] sm:$0xff]
        %v2852 = vld [vmem:[%s626 + $0x90] sm:$0xff]
        %v2853 = vld [vmem:[%s626 + $0x98] sm:$0xff]
        %v2854 = vld [vmem:[%s626 + $0xa0] sm:$0xff]
        %v2855 = vld [vmem:[%s626 + $0xa8] sm:$0xff]
        %v2856 = vld [vmem:[%s626 + $0xb0] sm:$0xff]
        %v2857 = vld [vmem:[%s626 + $0xb8] sm:$0xff]
        %v2858 = vld [vmem:[%s626 + $0xc0] sm:$0xff]
        %v2859 = vld [vmem:[%s626 + $0xc8] sm:$0xff]
        %v2860 = vld [vmem:[%s626 + $0xd0] sm:$0xff]
        %v2861 = vld [vmem:[%s626 + $0xd8] sm:$0xff]
        %v2862 = vld [vmem:[%s626 + $0xe0] sm:$0xff]
        %v2863 = vld [vmem:[%s626 + $0xe8] sm:$0xff]
        %v2864 = vld [vmem:[%s626 + $0xf0] sm:$0xff]
        %v2865 = vld [vmem:[%s626 + $0xf8] sm:$0xff]
        %v2898 = vunpack.c.l.b16 %v2834
        %v2899 = vunpack.c.h.b16 %v2834
        %v2900 = vunpack.c.l.b16 %v2835
        %v2901 = vunpack.c.h.b16 %v2835
        %v2902 = vunpack.c.l.b16 %v2836
        %v2903 = vunpack.c.h.b16 %v2836
        %v2904 = vunpack.c.l.b16 %v2837
        %v2905 = vunpack.c.h.b16 %v2837
        %v2906 = vunpack.c.l.b16 %v2838
        %v2907 = vunpack.c.h.b16 %v2838
        %v2908 = vunpack.c.l.b16 %v2839
        %v2909 = vunpack.c.h.b16 %v2839
        %v2910 = vunpack.c.l.b16 %v2840
        %v2911 = vunpack.c.h.b16 %v2840
        %v2912 = vunpack.c.l.b16 %v2841
        %v2913 = vunpack.c.h.b16 %v2841
        %v2914 = vunpack.c.l.b16 %v2842
        %v2915 = vunpack.c.h.b16 %v2842
        %v2916 = vunpack.c.l.b16 %v2843
        %v2917 = vunpack.c.h.b16 %v2843
        %v2918 = vunpack.c.l.b16 %v2844
        %v2919 = vunpack.c.h.b16 %v2844
        %v2920 = vunpack.c.l.b16 %v2845
        %v2921 = vunpack.c.h.b16 %v2845
        %v2922 = vunpack.c.l.b16 %v2846
        %v2923 = vunpack.c.h.b16 %v2846
        %v2924 = vunpack.c.l.b16 %v2847
        %v2925 = vunpack.c.h.b16 %v2847
        %v2926 = vunpack.c.l.b16 %v2848
        %v2927 = vunpack.c.h.b16 %v2848
        %v2928 = vunpack.c.l.b16 %v2849
        %v2929 = vunpack.c.h.b16 %v2849
        %v2930 = vunpack.c.l.b16 %v2850
        %v2931 = vunpack.c.h.b16 %v2850
        %v2932 = vunpack.c.l.b16 %v2851
        %v2933 = vunpack.c.h.b16 %v2851
        %v2934 = vunpack.c.l.b16 %v2852
        %v2935 = vunpack.c.h.b16 %v2852
        %v2936 = vunpack.c.l.b16 %v2853
        %v2937 = vunpack.c.h.b16 %v2853
        %v2938 = vunpack.c.l.b16 %v2854
        %v2939 = vunpack.c.h.b16 %v2854
        %v2940 = vunpack.c.l.b16 %v2855
        %v2941 = vunpack.c.h.b16 %v2855
        %v2942 = vunpack.c.l.b16 %v2856
        %v2943 = vunpack.c.h.b16 %v2856
        %v2944 = vunpack.c.l.b16 %v2857
        %v2945 = vunpack.c.h.b16 %v2857
        %v2946 = vunpack.c.l.b16 %v2858
        %v2947 = vunpack.c.h.b16 %v2858
        %v2948 = vunpack.c.l.b16 %v2859
        %v2949 = vunpack.c.h.b16 %v2859
        %v2950 = vunpack.c.l.b16 %v2860
        %v2951 = vunpack.c.h.b16 %v2860
        %v2952 = vunpack.c.l.b16 %v2861
        %v2953 = vunpack.c.h.b16 %v2861
        %v2954 = vunpack.c.l.b16 %v2862
        %v2955 = vunpack.c.h.b16 %v2862
        %v2956 = vunpack.c.l.b16 %v2863
        %v2957 = vunpack.c.h.b16 %v2863
        %v2958 = vunpack.c.l.b16 %v2864
        %v2959 = vunpack.c.h.b16 %v2864
        %v2960 = vunpack.c.l.b16 %v2865
        %v2961 = vunpack.c.h.b16 %v2865
        %v2962 = vpack.c.b16 %v2902, %v2898
        %v2963 = vpack.c.b16 %v2903, %v2899
        %v2964 = vpack.c.b16 %v2904, %v2900
        %v2965 = vpack.c.b16 %v2905, %v2901
        %v2966 = vpack.c.b16 %v2910, %v2906
        %v2967 = vpack.c.b16 %v2911, %v2907
        %v2968 = vpack.c.b16 %v2912, %v2908
        %v2969 = vpack.c.b16 %v2913, %v2909
        %v2970 = vpack.c.b16 %v2918, %v2914
        %v2971 = vpack.c.b16 %v2919, %v2915
        %v2972 = vpack.c.b16 %v2920, %v2916
        %v2973 = vpack.c.b16 %v2921, %v2917
        %v2974 = vpack.c.b16 %v2926, %v2922
        %v2975 = vpack.c.b16 %v2927, %v2923
        %v2976 = vpack.c.b16 %v2928, %v2924
        %v2977 = vpack.c.b16 %v2929, %v2925
        %v2978 = vpack.c.b16 %v2934, %v2930
        %v2979 = vpack.c.b16 %v2935, %v2931
        %v2980 = vpack.c.b16 %v2936, %v2932
        %v2981 = vpack.c.b16 %v2937, %v2933
        %v2982 = vpack.c.b16 %v2942, %v2938
        %v2983 = vpack.c.b16 %v2943, %v2939
        %v2984 = vpack.c.b16 %v2944, %v2940
        %v2985 = vpack.c.b16 %v2945, %v2941
        %v2986 = vpack.c.b16 %v2950, %v2946
        %v2987 = vpack.c.b16 %v2951, %v2947
        %v2988 = vpack.c.b16 %v2952, %v2948
        %v2989 = vpack.c.b16 %v2953, %v2949
        %v2990 = vpack.c.b16 %v2958, %v2954
        %v2991 = vpack.c.b16 %v2959, %v2955
        %v2992 = vpack.c.b16 %v2960, %v2956
        %v2993 = vpack.c.b16 %v2961, %v2957
        %3026 = vmatprep.subr.bf16.mxu0 %v2963
        %3027 = vmatpush1.bf16.msra.mxu0 %v2962
        %3028 = vmatprep.subr.bf16.mxu0 %v2967
        %3029 = vmatpush1.bf16.msra.mxu0 %v2966
        %3030 = vmatprep.subr.bf16.mxu0 %v2971
        %3031 = vmatpush1.bf16.msra.mxu0 %v2970
        %3032 = vmatprep.subr.bf16.mxu0 %v2975
        %3033 = vmatpush1.bf16.msra.mxu0 %v2974
        %3034 = vmatprep.subr.bf16.mxu0 %v2979
        %3035 = vmatpush1.bf16.msra.mxu0 %v2978
        %3036 = vmatprep.subr.bf16.mxu0 %v2983
        %3037 = vmatpush1.bf16.msra.mxu0 %v2982
        %3038 = vmatprep.subr.bf16.mxu0 %v2987
        %3039 = vmatpush1.bf16.msra.mxu0 %v2986
        %3040 = vmatprep.subr.bf16.mxu0 %v2991
        %3041 = vmatpush1.bf16.msra.mxu0 %v2990
        %3042 = vmatprep.subr.bf16.mxu0 0
        %3043 = vmatpush1.bf16.msra.mxu0 0
        %3044 = vmatprep.subr.bf16.mxu0 0
        %3045 = vmatpush1.bf16.msra.mxu0 0
        %3046 = vmatprep.subr.bf16.mxu0 0
        %3047 = vmatpush1.bf16.msra.mxu0 0
        %3048 = vmatprep.subr.bf16.mxu0 0
        %3049 = vmatpush1.bf16.msra.mxu0 0
        %3050 = vmatprep.subr.bf16.mxu0 0
        %3051 = vmatpush1.bf16.msra.mxu0 0
        %3052 = vmatprep.subr.bf16.mxu0 0
        %3053 = vmatpush1.bf16.msra.mxu0 0
        %3054 = vmatprep.subr.bf16.mxu0 0
        %3055 = vmatpush1.bf16.msra.mxu0 0
        %3056 = vmatprep.subr.bf16.mxu0 0
        %3057 = vmatpush1.bf16.msra.mxu0 0
        %3058 = vmatprep.mubr.bf16.mxu0 0
        %3059 = vmatmul.mubr.bf16.gmra.mrb[0].mxu0 %v2830
        %v3060 = vpop.f32.mrb[0].mxu0
        %v3061 = vadd.f32 0.0, %v3060
        %v3062 = vpop.f32.mrb[0].mxu0
        %v3063 = vadd.f32 0.0, %v3062
        %v3064 = vpop.f32.mrb[0].mxu0
        %v3065 = vadd.f32 0.0, %v3064
        %v3066 = vpop.f32.mrb[0].mxu0
        %v3067 = vadd.f32 0.0, %v3066
        %3068 = vmatprep.mubr.bf16.mxu0 0
        %3069 = vmatmul.mubr.bf16.gmra.mrb[0].mxu0 %v2831
        %v3070 = vpop.f32.mrb[0].mxu0
        %v3071 = vadd.f32 0.0, %v3070
        %v3072 = vpop.f32.mrb[0].mxu0
        %v3073 = vadd.f32 0.0, %v3072
        %v3074 = vpop.f32.mrb[0].mxu0
        %v3075 = vadd.f32 0.0, %v3074
        %v3076 = vpop.f32.mrb[0].mxu0
        %v3077 = vadd.f32 0.0, %v3076
        %3078 = vmatprep.mubr.bf16.mxu0 0
        %3079 = vmatmul.mubr.bf16.gmra.mrb[0].mxu0 %v2832
        %v3080 = vpop.f32.mrb[0].mxu0
        %v3081 = vadd.f32 0.0, %v3080
        %v3082 = vpop.f32.mrb[0].mxu0
        %v3083 = vadd.f32 0.0, %v3082
        %v3084 = vpop.f32.mrb[0].mxu0
        %v3085 = vadd.f32 0.0, %v3084
        %v3086 = vpop.f32.mrb[0].mxu0
        %v3087 = vadd.f32 0.0, %v3086
        %3088 = vmatprep.mubr.bf16.mxu0 0
        %3089 = vmatmul.mubr.bf16.gmra.mrb[0].mxu0 %v2833
        %v3090 = vpop.f32.mrb[0].mxu0
        %v3091 = vadd.f32 0.0, %v3090
        %v3092 = vpop.f32.mrb[0].mxu0
        %v3093 = vadd.f32 0.0, %v3092
        %v3094 = vpop.f32.mrb[0].mxu0
        %v3095 = vadd.f32 0.0, %v3094
        %v3096 = vpop.f32.mrb[0].mxu0
        %v3097 = vadd.f32 0.0, %v3096
        %3098 = vdwg.mxu0
        %3099 = vmatprep.subr.bf16.mxu0 %v2965
        %3100 = vmatpush1.bf16.msra.mxu0 %v2964
        %3101 = vmatprep.subr.bf16.mxu0 %v2969
        %3102 = vmatpush1.bf16.msra.mxu0 %v2968
        %3103 = vmatprep.subr.bf16.mxu0 %v2973
        %3104 = vmatpush1.bf16.msra.mxu0 %v2972
        %3105 = vmatprep.subr.bf16.mxu0 %v2977
        %3106 = vmatpush1.bf16.msra.mxu0 %v2976
        %3107 = vmatprep.subr.bf16.mxu0 %v2981
        %3108 = vmatpush1.bf16.msra.mxu0 %v2980
        %3109 = vmatprep.subr.bf16.mxu0 %v2985
        %3110 = vmatpush1.bf16.msra.mxu0 %v2984
        %3111 = vmatprep.subr.bf16.mxu0 %v2989
        %3112 = vmatpush1.bf16.msra.mxu0 %v2988
        %3113 = vmatprep.subr.bf16.mxu0 %v2993
        %3114 = vmatpush1.bf16.msra.mxu0 %v2992
        %3115 = vmatprep.subr.bf16.mxu0 0
        %3116 = vmatpush1.bf16.msra.mxu0 0
        %3117 = vmatprep.subr.bf16.mxu0 0
        %3118 = vmatpush1.bf16.msra.mxu0 0
        %3119 = vmatprep.subr.bf16.mxu0 0
        %3120 = vmatpush1.bf16.msra.mxu0 0
        %3121 = vmatprep.subr.bf16.mxu0 0
        %3122 = vmatpush1.bf16.msra.mxu0 0
        %3123 = vmatprep.subr.bf16.mxu0 0
        %3124 = vmatpush1.bf16.msra.mxu0 0
        %3125 = vmatprep.subr.bf16.mxu0 0
        %3126 = vmatpush1.bf16.msra.mxu0 0
        %3127 = vmatprep.subr.bf16.mxu0 0
        %3128 = vmatpush1.bf16.msra.mxu0 0
        %3129 = vmatprep.subr.bf16.mxu0 0
        %3130 = vmatpush1.bf16.msra.mxu0 0
        %3131 = vmatprep.mubr.bf16.mxu0 0
        %3132 = vmatmul.mubr.bf16.gmra.mrb[0].mxu0 %v2830
        %v3133 = vpop.f32.mrb[0].mxu0
        %v3134 = vadd.f32 0.0, %v3133
        %v3135 = vpop.f32.mrb[0].mxu0
        %v3136 = vadd.f32 0.0, %v3135
        %v3137 = vpop.f32.mrb[0].mxu0
        %v3138 = vadd.f32 0.0, %v3137
        %v3139 = vpop.f32.mrb[0].mxu0
        %v3140 = vadd.f32 0.0, %v3139
        %3141 = vmatprep.mubr.bf16.mxu0 0
        %3142 = vmatmul.mubr.bf16.gmra.mrb[0].mxu0 %v2831
        %v3143 = vpop.f32.mrb[0].mxu0
        %v3144 = vadd.f32 0.0, %v3143
        %v3145 = vpop.f32.mrb[0].mxu0
        %v3146 = vadd.f32 0.0, %v3145
        %v3147 = vpop.f32.mrb[0].mxu0
        %v3148 = vadd.f32 0.0, %v3147
        %v3149 = vpop.f32.mrb[0].mxu0
        %v3150 = vadd.f32 0.0, %v3149
        %3151 = vmatprep.mubr.bf16.mxu0 0
        %3152 = vmatmul.mubr.bf16.gmra.mrb[0].mxu0 %v2832
        %v3153 = vpop.f32.mrb[0].mxu0
        %v3154 = vadd.f32 0.0, %v3153
        %v3155 = vpop.f32.mrb[0].mxu0
        %v3156 = vadd.f32 0.0, %v3155
        %v3157 = vpop.f32.mrb[0].mxu0
        %v3158 = vadd.f32 0.0, %v3157
        %v3159 = vpop.f32.mrb[0].mxu0
        %v3160 = vadd.f32 0.0, %v3159
        %3161 = vmatprep.mubr.bf16.mxu0 0
        %3162 = vmatmul.mubr.bf16.gmra.mrb[0].mxu0 %v2833
        %v3163 = vpop.f32.mrb[0].mxu0
        %v3164 = vadd.f32 0.0, %v3163
        %v3165 = vpop.f32.mrb[0].mxu0
        %v3166 = vadd.f32 0.0, %v3165
        %v3167 = vpop.f32.mrb[0].mxu0
        %v3168 = vadd.f32 0.0, %v3167
        %v3169 = vpop.f32.mrb[0].mxu0
        %v3170 = vadd.f32 0.0, %v3169
        %3171 = vdwg.mxu0
        %v3172 = vld [vmem:[%s712] sm:$0xf]
        %v3174 = vlaneseq
        %v3175 = vshrl.u32 %v3174, 7
        %v3176 = vsub.s32 0, %v3175
        %v3177 = vrot.slane %v3172, %v3176
        %v3178 = vlaneseq
        %v3179 = vshrl.u32 %v3178, 7
        %v3180 = vsub.s32 1, %v3179
        %v3181 = vrot.slane %v3172, %v3180
        %v3182 = vlaneseq
        %v3183 = vshrl.u32 %v3182, 7
        %v3184 = vsub.s32 2, %v3183
        %v3185 = vrot.slane %v3172, %v3184
        %v3186 = vlaneseq
        %v3187 = vshrl.u32 %v3186, 7
        %v3188 = vsub.s32 3, %v3187
        %v3189 = vrot.slane %v3172, %v3188
        %v3194 = vmul.f32 %v3061, %v3177
        %v3195 = vmul.f32 %v3063, %v3181
        %v3196 = vmul.f32 %v3134, %v3185
        %v3197 = vmul.f32 %v3136, %v3189
        %v3198 = vmul.f32 %v3065, %v3177
        %v3199 = vmul.f32 %v3067, %v3181
        %v3200 = vmul.f32 %v3138, %v3185
        %v3201 = vmul.f32 %v3140, %v3189
        %v3202 = vmul.f32 %v3071, %v3177
        %v3203 = vmul.f32 %v3073, %v3181
        %v3204 = vmul.f32 %v3144, %v3185
        %v3205 = vmul.f32 %v3146, %v3189
        %v3206 = vmul.f32 %v3075, %v3177
        %v3207 = vmul.f32 %v3077, %v3181
        %v3208 = vmul.f32 %v3148, %v3185
        %v3209 = vmul.f32 %v3150, %v3189
        %v3210 = vmul.f32 %v3081, %v3177
        %v3211 = vmul.f32 %v3083, %v3181
        %v3212 = vmul.f32 %v3154, %v3185
        %v3213 = vmul.f32 %v3156, %v3189
        %v3214 = vmul.f32 %v3085, %v3177
        %v3215 = vmul.f32 %v3087, %v3181
        %v3216 = vmul.f32 %v3158, %v3185
        %v3217 = vmul.f32 %v3160, %v3189
        %v3218 = vmul.f32 %v3091, %v3177
        %v3219 = vmul.f32 %v3093, %v3181
        %v3220 = vmul.f32 %v3164, %v3185
        %v3221 = vmul.f32 %v3166, %v3189
        %v3222 = vmul.f32 %v3095, %v3177
        %v3223 = vmul.f32 %v3097, %v3181
        %v3224 = vmul.f32 %v3168, %v3185
        %v3225 = vmul.f32 %v3170, %v3189
        %v3226 = vld [vmem:[%s716] sm:$0xf]
        %v3228 = vlaneseq
        %v3229 = vshrl.u32 %v3228, 7
        %v3230 = vsub.s32 0, %v3229
        %v3231 = vrot.slane %v3226, %v3230
        %v3232 = vlaneseq
        %v3233 = vshrl.u32 %v3232, 7
        %v3234 = vsub.s32 1, %v3233
        %v3235 = vrot.slane %v3226, %v3234
        %v3236 = vlaneseq
        %v3237 = vshrl.u32 %v3236, 7
        %v3238 = vsub.s32 2, %v3237
        %v3239 = vrot.slane %v3226, %v3238
        %v3240 = vlaneseq
        %v3241 = vshrl.u32 %v3240, 7
        %v3242 = vsub.s32 3, %v3241
        %v3243 = vrot.slane %v3226, %v3242
        %v3248 = vadd.f32 %v3194, %v3231
        %v3249 = vadd.f32 %v3195, %v3235
        %v3250 = vadd.f32 %v3196, %v3239
        %v3251 = vadd.f32 %v3197, %v3243
        %v3252 = vadd.f32 %v3198, %v3231
        %v3253 = vadd.f32 %v3199, %v3235
        %v3254 = vadd.f32 %v3200, %v3239
        %v3255 = vadd.f32 %v3201, %v3243
        %v3256 = vadd.f32 %v3202, %v3231
        %v3257 = vadd.f32 %v3203, %v3235
        %v3258 = vadd.f32 %v3204, %v3239
        %v3259 = vadd.f32 %v3205, %v3243
        %v3260 = vadd.f32 %v3206, %v3231
        %v3261 = vadd.f32 %v3207, %v3235
        %v3262 = vadd.f32 %v3208, %v3239
        %v3263 = vadd.f32 %v3209, %v3243
        %v3264 = vadd.f32 %v3210, %v3231
        %v3265 = vadd.f32 %v3211, %v3235
        %v3266 = vadd.f32 %v3212, %v3239
        %v3267 = vadd.f32 %v3213, %v3243
        %v3268 = vadd.f32 %v3214, %v3231
        %v3269 = vadd.f32 %v3215, %v3235
        %v3270 = vadd.f32 %v3216, %v3239
        %v3271 = vadd.f32 %v3217, %v3243
        %v3272 = vadd.f32 %v3218, %v3231
        %v3273 = vadd.f32 %v3219, %v3235
        %v3274 = vadd.f32 %v3220, %v3239
        %v3275 = vadd.f32 %v3221, %v3243
        %v3276 = vadd.f32 %v3222, %v3231
        %v3277 = vadd.f32 %v3223, %v3235
        %v3278 = vadd.f32 %v3224, %v3239
        %v3279 = vadd.f32 %v3225, %v3243
        %v3280 = vadd.f32 %v3248, %v734
        %v3281 = vadd.f32 %v3249, %v735
        %v3282 = vadd.f32 %v3250, %v736
        %v3283 = vadd.f32 %v3251, %v737
        %v3284 = vadd.f32 %v3252, %v738
        %v3285 = vadd.f32 %v3253, %v739
        %v3286 = vadd.f32 %v3254, %v740
        %v3287 = vadd.f32 %v3255, %v741
        %v3288 = vadd.f32 %v3256, %v742
        %v3289 = vadd.f32 %v3257, %v743
        %v3290 = vadd.f32 %v3258, %v744
        %v3291 = vadd.f32 %v3259, %v745
        %v3292 = vadd.f32 %v3260, %v746
        %v3293 = vadd.f32 %v3261, %v747
        %v3294 = vadd.f32 %v3262, %v748
        %v3295 = vadd.f32 %v3263, %v749
        %v3296 = vadd.f32 %v3264, %v750
        %v3297 = vadd.f32 %v3265, %v751
        %v3298 = vadd.f32 %v3266, %v752
        %v3299 = vadd.f32 %v3267, %v753
        %v3300 = vadd.f32 %v3268, %v754
        %v3301 = vadd.f32 %v3269, %v755
        %v3302 = vadd.f32 %v3270, %v756
        %v3303 = vadd.f32 %v3271, %v757
        %v3304 = vadd.f32 %v3272, %v758
        %v3305 = vadd.f32 %v3273, %v759
        %v3306 = vadd.f32 %v3274, %v760
        %v3307 = vadd.f32 %v3275, %v761
        %v3308 = vadd.f32 %v3276, %v762
        %v3309 = vadd.f32 %v3277, %v763
        %v3310 = vadd.f32 %v3278, %v764
        %v3311 = vadd.f32 %v3279, %v765
        %v3312 = vmax.f32 %v3280, 0.0
        %v3313 = vmax.f32 %v3281, 0.0
        %v3314 = vmax.f32 %v3282, 0.0
        %v3315 = vmax.f32 %v3283, 0.0
        %v3316 = vmax.f32 %v3284, 0.0
        %v3317 = vmax.f32 %v3285, 0.0
        %v3318 = vmax.f32 %v3286, 0.0
        %v3319 = vmax.f32 %v3287, 0.0
        %v3320 = vmax.f32 %v3288, 0.0
        %v3321 = vmax.f32 %v3289, 0.0
        %v3322 = vmax.f32 %v3290, 0.0
        %v3323 = vmax.f32 %v3291, 0.0
        %v3324 = vmax.f32 %v3292, 0.0
        %v3325 = vmax.f32 %v3293, 0.0
        %v3326 = vmax.f32 %v3294, 0.0
        %v3327 = vmax.f32 %v3295, 0.0
        %v3328 = vmax.f32 %v3296, 0.0
        %v3329 = vmax.f32 %v3297, 0.0
        %v3330 = vmax.f32 %v3298, 0.0
        %v3331 = vmax.f32 %v3299, 0.0
        %v3332 = vmax.f32 %v3300, 0.0
        %v3333 = vmax.f32 %v3301, 0.0
        %v3334 = vmax.f32 %v3302, 0.0
        %v3335 = vmax.f32 %v3303, 0.0
        %v3336 = vmax.f32 %v3304, 0.0
        %v3337 = vmax.f32 %v3305, 0.0
        %v3338 = vmax.f32 %v3306, 0.0
        %v3339 = vmax.f32 %v3307, 0.0
        %v3340 = vmax.f32 %v3308, 0.0
        %v3341 = vmax.f32 %v3309, 0.0
        %v3342 = vmax.f32 %v3310, 0.0
        %v3343 = vmax.f32 %v3311, 0.0
        %v3344 = vmax.f32 %v3312, %v3316
        %v3345 = vmax.f32 %v3344, %v3320
        %v3346 = vmax.f32 %v3345, %v3324
        %v3347 = vmax.f32 %v3346, %v3328
        %v3348 = vmax.f32 %v3347, %v3332
        %v3349 = vmax.f32 %v3348, %v3336
        %v3350 = vmax.f32 %v3349, %v3340
        %v3351 = vrot.slane %v3350, 4
        %v3352 = vmax.f32 %v3350, %v3351
        %v3353 = vrot.slane %v3352, 2
        %v3354 = vmax.f32 %v3352, %v3353
        %v3355 = vrot.slane %v3354, 1
        %v3356 = vmax.f32 %v3354, %v3355
        %v3357 = vmax.f32 %v3313, %v3317
        %v3358 = vmax.f32 %v3357, %v3321
        %v3359 = vmax.f32 %v3358, %v3325
        %v3360 = vmax.f32 %v3359, %v3329
        %v3361 = vmax.f32 %v3360, %v3333
        %v3362 = vmax.f32 %v3361, %v3337
        %v3363 = vmax.f32 %v3362, %v3341
        %v3364 = vrot.slane %v3363, 4
        %v3365 = vmax.f32 %v3363, %v3364
        %v3366 = vrot.slane %v3365, 2
        %v3367 = vmax.f32 %v3365, %v3366
        %v3368 = vrot.slane %v3367, 1
        %v3369 = vmax.f32 %v3367, %v3368
        %v3370 = vmax.f32 %v3314, %v3318
        %v3371 = vmax.f32 %v3370, %v3322
        %v3372 = vmax.f32 %v3371, %v3326
        %v3373 = vmax.f32 %v3372, %v3330
        %v3374 = vmax.f32 %v3373, %v3334
        %v3375 = vmax.f32 %v3374, %v3338
        %v3376 = vmax.f32 %v3375, %v3342
        %v3377 = vrot.slane %v3376, 4
        %v3378 = vmax.f32 %v3376, %v3377
        %v3379 = vrot.slane %v3378, 2
        %v3380 = vmax.f32 %v3378, %v3379
        %v3381 = vrot.slane %v3380, 1
        %v3382 = vmax.f32 %v3380, %v3381
        %v3383 = vmax.f32 %v3315, %v3319
        %v3384 = vmax.f32 %v3383, %v3323
        %v3385 = vmax.f32 %v3384, %v3327
        %v3386 = vmax.f32 %v3385, %v3331
        %v3387 = vmax.f32 %v3386, %v3335
        %v3388 = vmax.f32 %v3387, %v3339
        %v3389 = vmax.f32 %v3388, %v3343
        %v3390 = vrot.slane %v3389, 4
        %v3391 = vmax.f32 %v3389, %v3390
        %v3392 = vrot.slane %v3391, 2
        %v3393 = vmax.f32 %v3391, %v3392
        %v3394 = vrot.slane %v3393, 1
        %v3395 = vmax.f32 %v3393, %v3394
        %v3400 = vcombine.low %v3356, %v3369
        %v3401 = vcombine.low %v3382, %v3395
        %v3403 = vunpack.c.l.s4 1966171168
        %v3404 = vunpack.c.0.s8 %v3403
        %v3405 = vlaneseq
        %v3406 = vshrl.u32 %v3405, 7
        %v3407 = vsub.s32 %v3404, %v3406
        %v3408 = vrot.slane %v3400, %v3407
        %v3410 = vunpack.c.l.s4 1966171168
        %v3411 = vunpack.c.0.s8 %v3410
        %v3412 = vlaneseq
        %v3413 = vshrl.u32 %v3412, 7
        %v3414 = vsub.s32 %v3411, %v3413
        %v3415 = vrot.slane %v3401, %v3414
        %v3416 = vcombine.low %v3408, %v3415
        %v3418 = vunpack.c.l.s4 1966171168
        %v3419 = vunpack.c.0.s8 %v3418
        %v3420 = vlaneseq
        %v3421 = vshrl.u32 %v3420, 7
        %v3422 = vsub.s32 %v3419, %v3421
        %v3423 = vrot.slane %v3416, %v3422
        %3425 = vst.msk [vmem:[%s708] sm:$0xf] %vm855, %v3423
        %s3426 = sand.u32 %s328, 1
        %s3427 = scalar_lea.sflag [#allocation4], %s3426
        %s3428 = sand.u32 %s328, 1
        %s3429 = smul.addr %s3428, 4
        %s3430 = scalar_lea.vmem [#allocation16], %s3429
        %s3431 = sand.u32 %s356, 1
        %s3432 = scalar_lea.sflag [#allocation18], %s3431
        %s3433 = sand.u32 %s356, 1
        %s3434 = smul.addr %s3433, 4
        %s3435 = scalar_lea.vmem [#allocation17], %s3434
        // Predicated region
        $region93: #{tpu_custom_call.1} parent=59 // pred_check
          %p3436 = pneg %p338
        $region94: #{tpu_custom_call.1} parent=59 // pred_check_branch
          %3438 = sbr.rel (%p3436) target = $region96
        $region95: #{tpu_custom_call.1} parent=59 // pred_region
          %s3440 = ssub.s32 64, 64
          %3441 = vsyncadd %s3427, %s3440
          %s3442 = smul.addr %s49, 4
          %s3443 = smul.addr %s48, 8
          %s3444 = sadd.s32 %s3442, %s3443
          %s3445 = smul.addr %s3444, 16
          %s3446 = scalar_lea.hbm %s10, %s3445
          %s3448 = sshll.u32 %s3430, 4
          %s3449 = int_to_ptr.vmem [resolvable:$true] %s3448
          %3451 = dma.vmem_to_hbm [thread:$0]  %s3449, 64, %s3446, %s3427
        $region96: #{tpu_custom_call.1} parent=59 // pred_fallthru
          _
        // Predicated region
        $region97: #{tpu_custom_call.1} parent=59 // pred_check
          %p3452 = pneg %p366
        $region98: #{tpu_custom_call.1} parent=59 // pred_check_branch
          %3454 = sbr.rel (%p3452) target = $region100
        $region99: #{tpu_custom_call.1} parent=59 // pred_region
          %s3456 = ssub.s32 64, 64
          %3457 = vsyncadd %s3432, %s3456
          %s3458 = smul.addr %s49, 4
          %s3459 = smul.addr %s48, 8
          %s3460 = sadd.s32 %s3458, %s3459
          %s3461 = smul.addr %s3460, 16
          %s3462 = scalar_lea.hbm %s11, %s3461
          %s3464 = sshll.u32 %s3435, 4
          %s3465 = int_to_ptr.vmem [resolvable:$true] %s3464
          %3467 = dma.vmem_to_hbm [thread:$0]  %s3465, 64, %s3462, %s3432
        $region100: #{tpu_custom_call.1} parent=59 // pred_fallthru
          _
      $region60: #{tpu_custom_call.1} parent=5 // pred_fallthru
        _
      %p3468 = scmp.le.s32.totalorder 2, %s39
      // Predicated region
      $region101: #{tpu_custom_call.1} parent=5 // pred_check
        %p3469 = pneg %p3468
      $region102: #{tpu_custom_call.1} parent=5 // pred_check_branch
        %3471 = sbr.rel (%p3469) target = $region104
      $region103: #{tpu_custom_call.1} parent=5 // pred_region
        %s3472 = ssub.s32 %s39, 2
        // Predicated region
        $region105: #{tpu_custom_call.1} parent=103 // pred_check
          %p3473 = pneg %p344
        $region106: #{tpu_custom_call.1} parent=103 // pred_check_branch
          %3475 = sbr.rel (%p3473) target = $region108
        $region107: #{tpu_custom_call.1} parent=103 // pred_region
          %s3476 = sand.u32 %s329, 1
          %s3477 = scalar_lea.sflag [#allocation4], %s3476
          %s3478 = sand.u32 %s329, 1
          %s3479 = smul.addr %s3478, 4
          %s3480 = scalar_lea.vmem [#allocation16], %s3479
          %3481 = dma.done %s3477, 64
        $region108: #{tpu_custom_call.1} parent=103 // pred_fallthru
          _
        // Predicated region
        $region109: #{tpu_custom_call.1} parent=103 // pred_check
          %p3482 = pneg %p372
        $region110: #{tpu_custom_call.1} parent=103 // pred_check_branch
          %3484 = sbr.rel (%p3482) target = $region112
        $region111: #{tpu_custom_call.1} parent=103 // pred_region
          %s3485 = sand.u32 %s357, 1
          %s3486 = scalar_lea.sflag [#allocation18], %s3485
          %s3487 = sand.u32 %s357, 1
          %s3488 = smul.addr %s3487, 4
          %s3489 = scalar_lea.vmem [#allocation17], %s3488
          %3490 = dma.done %s3486, 64
        $region112: #{tpu_custom_call.1} parent=103 // pred_fallthru
          _
      $region104: #{tpu_custom_call.1} parent=5 // pred_fallthru
        _
    $region6: #{tpu_custom_call.1} parent=1 // loop_footer
      %s43 = sadd.s32 1, %s39
    $region7: #{tpu_custom_call.1} parent=1 // loop_footer_branch
      %38 = sbr.rel target = $region3
    $region8: #{tpu_custom_call.1} parent=1 // loop_exit
      _
    %3491 = vsyncpa [#allocation3], 1
    %s3492 = scalar_lea.sflag [#allocation3], 1
    %3493 = vsyncpa %s3492, 1
    %3494 = vsyncpa [#allocation6], 1
    %s3495 = scalar_lea.sflag [#allocation6], 1
    %3496 = vsyncpa %s3495, 1
    %3497 = vsyncpa [#allocation9], 1
    %s3498 = scalar_lea.sflag [#allocation9], 1
    %3499 = vsyncpa %s3498, 1
    %3500 = vsyncpa [#allocation12], 1
    %s3501 = scalar_lea.sflag [#allocation12], 1
    %3502 = vsyncpa %s3501, 1
    %3503 = vsyncpa [#allocation15], 1
    %s3504 = scalar_lea.sflag [#allocation15], 1
    %3505 = vsyncpa %s3504, 1
    %3506 = vsyncpa [#allocation4], 1
    %s3507 = scalar_lea.sflag [#allocation4], 1
    %3508 = vsyncpa %s3507, 1
    %3509 = vsyncpa [#allocation18], 1
    %s3510 = scalar_lea.sflag [#allocation18], 1
    %3511 = vsyncpa %s3510, 1

</llo_original>
